<compile_context>
chip_gen: v7x
topology: tpu7x:2x2x1
jax: 0.10.0
libtpu: 0.0.40
codegen_flags: <defaults>
</compile_context>

<pallas_src>
import functools

import jax
import jax.numpy as jnp
from jax import lax
from jax.experimental import pallas as pl
from jax.experimental.pallas import tpu as pltpu


# ------------------------------- helpers ------------------------------------

def _largest_divisor_leq(n, cap, multiple_of=1):
    cap = min(n, cap)
    for t in range(cap, 0, -1):
        if n % t == 0 and t % multiple_of == 0:
            return t
    return n  # fall back to the full extent (always a legal block)


# --------------------- GroupNorm statistics kernel --------------------------

def _gn_stats_kernel(x_ref, s_ref, ss_ref):
    # x: (1, TR, C).  Accumulate per-channel sum / sum-of-squares over rows.
    @pl.when(pl.program_id(1) == 0)
    def _():
        s_ref[...] = jnp.zeros_like(s_ref)
        ss_ref[...] = jnp.zeros_like(ss_ref)

    x = x_ref[0]                                           # (TR, C)
    s_ref[...] += jnp.sum(x, axis=0, keepdims=True)[None]
    ss_ref[...] += jnp.sum(x * x, axis=0, keepdims=True)[None]


def pallas_group_norm_stats(x_rows, tr):
    """x_rows: (B, HW, C) f32 -> (sum, sumsq), each (B, 1, C) f32."""
    B, HW, C = x_rows.shape
    return pl.pallas_call(
        _gn_stats_kernel,
        out_shape=(jax.ShapeDtypeStruct((B, 1, C), jnp.float32),
                   jax.ShapeDtypeStruct((B, 1, C), jnp.float32)),
        grid=(B, HW // tr),
        in_specs=[pl.BlockSpec((1, tr, C), lambda b, r: (b, r, 0))],
        out_specs=(pl.BlockSpec((1, 1, C), lambda b, r: (b, 0, 0)),
                   pl.BlockSpec((1, 1, C), lambda b, r: (b, 0, 0))),
        compiler_params=pltpu.CompilerParams(
            dimension_semantics=("parallel", "arbitrary")),
    )(x_rows)


# --------------- fused GroupNorm-normalize + QKV projection -----------------

def _gn_qkv_kernel(x_ref, mu_ref, inv_ref, w_ref, b_ref, o_ref):
    # x: (1, TR, C); mu/inv: (1, 1, C) per-batch stats; w: (C, 3C) bf16.
    xn = (x_ref[0] - mu_ref[0]) * inv_ref[0]               # (TR, C) f32
    y = jnp.dot(xn.astype(jnp.bfloat16), w_ref[...],
                preferred_element_type=jnp.float32) + b_ref[...]
    o_ref[...] = y[None].astype(o_ref.dtype)               # bf16 out


def pallas_gn_qkv(x_rows, mean_c, inv_c, w_bf16, bias2d, tr):
    """Normalize (per-batch GN stats) and project to [Q|K|V].  Output bf16."""
    B, HW, C = x_rows.shape
    C3 = w_bf16.shape[1]
    # NOTE: for very large C add a K-reduction grid axis (accumulator scratch)
    # so the (C, 3C) weight block stays within scoped VMEM on v5e/v7x.
    return pl.pallas_call(
        _gn_qkv_kernel,
        out_shape=jax.ShapeDtypeStruct((B, HW, C3), jnp.bfloat16),
        grid=(B, HW // tr),
        in_specs=[
            pl.BlockSpec((1, tr, C), lambda b, r: (b, r, 0)),
            pl.BlockSpec((1, 1, C), lambda b, r: (b, 0, 0)),
            pl.BlockSpec((1, 1, C), lambda b, r: (b, 0, 0)),
            pl.BlockSpec((C, C3), lambda b, r: (0, 0)),
            pl.BlockSpec((1, C3), lambda b, r: (0, 0)),
        ],
        out_specs=pl.BlockSpec((1, tr, C3), lambda b, r: (b, r, 0)),
        compiler_params=pltpu.CompilerParams(
            dimension_semantics=("parallel", "parallel")),
    )(x_rows, mean_c, inv_c, w_bf16, bias2d)


# -------- window attention + fused (cloud+proj) projection + residual -------

def _window_attn_kernel(qkv_ref, bias_ref, res_ref, w_ref, b_ref, o_ref):
    # qkv: (3, nh, 1, N, hd) bf16 (scale already folded into the Q weights)
    # bias: (nh, N, N) f32 (VMEM resident, constant block index)
    # res : (1, ws, ws, C) f32 original-input window (first residual, fused)
    # w, b: fused cloud_conv-fold + proj, head-split (nh, hd, C) bf16 / (1, C)
    _, ws1, ws2, C = o_ref.shape
    _, nh, _, N, hd = qkv_ref.shape

    qkv = qkv_ref[...]
    q = qkv[0, :, 0]                                       # (nh, N, hd)
    k = qkv[1, :, 0]
    v = qkv[2, :, 0]

    s = lax.dot_general(q, k, (((2,), (2,)), ((0,), (0,))),
                        preferred_element_type=jnp.float32)          # (nh,N,N)
    s = s + bias_ref[...]
    s = s - jnp.max(s, axis=-1, keepdims=True)
    p = jnp.exp(s)
    p = p * pl.reciprocal(jnp.sum(p, axis=-1, keepdims=True), approx=True)
    o = lax.dot_general(p.astype(jnp.bfloat16), v,
                        (((2,), (1,)), ((0,), (0,))),
                        preferred_element_type=jnp.float32)          # (nh,N,hd)

    # per-head accumulated projection (avoids a lane-dim concatenate)
    y = jnp.zeros((N, C), jnp.float32)
    for h in range(nh):
        y = y + jnp.dot(o[h].astype(jnp.bfloat16), w_ref[h],
                        preferred_element_type=jnp.float32)

    out = y.reshape(1, ws1, ws2, C) + res_ref[...] + b_ref[...]
    o_ref[...] = out.astype(o_ref.dtype)


def pallas_window_attention(qkv_heads, bias, x_res, w_cp_h, b_cp, *, window_size):
    """qkv_heads: (3, nh, B_, N, hd) bf16;  x_res: (B, H, W, C) f32 residual.
    Returns (B, H, W, C) f32 = x + proj(cloud_fold(window_attention)).
    window_reverse is fused into the output BlockSpec."""
    _, nh, B_, N, hd = qkv_heads.shape
    B, H, W, C = x_res.shape
    ws = window_size
    nwh, nww = H // ws, W // ws
    return pl.pallas_call(
        _window_attn_kernel,
        out_shape=jax.ShapeDtypeStruct((B, H, W, C), jnp.float32),
        grid=(B, nwh, nww),
        in_specs=[
            pl.BlockSpec((3, nh, 1, N, hd),
                         lambda b, i, j: (0, 0, b * nwh * nww + i * nww + j, 0, 0)),
            pl.BlockSpec((nh, N, N), lambda b, i, j: (0, 0, 0)),
            pl.BlockSpec((1, ws, ws, C), lambda b, i, j: (b, i, j, 0)),
            pl.BlockSpec((nh, hd, C), lambda b, i, j: (0, 0, 0)),
            pl.BlockSpec((1, C), lambda b, i, j: (0, 0)),
        ],
        out_specs=pl.BlockSpec((1, ws, ws, C), lambda b, i, j: (b, i, j, 0)),
        compiler_params=pltpu.CompilerParams(
            dimension_semantics=("parallel", "parallel", "parallel")),
    )(qkv_heads, bias, x_res, w_cp_h, b_cp)


# -------------------- fused MLP (Conv1x1-ReLU-Conv1x1) ----------------------

def _mlp_kernel(x_ref, w1_ref, b1_ref, w2_ref, b2_ref, o_ref, acc_ref):
    k = pl.program_id(1)

    @pl.when(k == 0)
    def _():
        acc_ref[...] = jnp.zeros_like(acc_ref)

    h = jnp.dot(x_ref[...].astype(jnp.bfloat16), w1_ref[...],
                preferred_element_type=jnp.float32) + b1_ref[...]
    h = jnp.maximum(h, 0.0)
    acc_ref[...] += jnp.dot(h.astype(jnp.bfloat16), w2_ref[...],
                            preferred_element_type=jnp.float32)

    @pl.when(k == pl.num_programs(1) - 1)
    def _():
        o_ref[...] = (acc_ref[...] + b2_ref[...] + x_ref[...]).astype(o_ref.dtype)


def pallas_mlp_residual(x, w1_bf16, b1, w2_bf16, b2, tm, th):
    """x + relu(x @ w1 + b1) @ w2 + b2; hidden tile stays in VMEM."""
    M, C = x.shape
    Hd = w1_bf16.shape[1]
    return pl.pallas_call(
        _mlp_kernel,
        out_shape=jax.ShapeDtypeStruct((M, C), jnp.float32),
        grid=(M // tm, Hd // th),
        in_specs=[
            pl.BlockSpec((tm, C), lambda i, k: (i, 0)),
            pl.BlockSpec((C, th), lambda i, k: (0, k)),
            pl.BlockSpec((1, th), lambda i, k: (0, k)),
            pl.BlockSpec((th, C), lambda i, k: (k, 0)),
            pl.BlockSpec((1, C), lambda i, k: (0, 0)),
        ],
        out_specs=pl.BlockSpec((tm, C), lambda i, k: (i, 0)),
        scratch_shapes=[pltpu.VMEM((tm, C), jnp.float32)],
        compiler_params=pltpu.CompilerParams(
            dimension_semantics=("parallel", "arbitrary")),
    )(x, w1_bf16, b1.reshape(1, Hd), w2_bf16, b2.reshape(1, C))


# --------------------------------- JAX glue ---------------------------------

def get_relative_positions(window_size):
    coords = jnp.stack(jnp.meshgrid(jnp.arange(window_size),
                                    jnp.arange(window_size), indexing="ij"))
    coords_flat = coords.reshape(2, -1)                        # (2, N)
    rel = coords_flat[:, :, None] - coords_flat[:, None, :]    # (2, N, N)
    rel = jnp.transpose(rel, (1, 2, 0)).astype(jnp.float32)    # (N, N, 2)
    return jnp.sign(rel) * jnp.log(1.0 + jnp.abs(rel))


def init_params(key, dim, num_heads, mlp_ratio=4.0):
    hidden = int(dim * mlp_ratio)
    ks = jax.random.split(key, 10)
    std = 0.02

    def w(k, shape):
        return std * jax.random.normal(k, shape, jnp.float32)

    return {
        "norm1_gamma": jnp.ones((dim,), jnp.float32),
        "norm1_beta": jnp.zeros((dim,), jnp.float32),
        "V_w": w(ks[0], (dim, dim)), "V_b": jnp.zeros((dim,), jnp.float32),
        "QK_w": w(ks[1], (dim, 2 * dim)), "QK_b": jnp.zeros((2 * dim,), jnp.float32),
        "proj_w": w(ks[2], (dim, dim)), "proj_b": jnp.zeros((dim,), jnp.float32),
        "cloud_w": w(ks[3], (2 * dim, dim)), "cloud_b": jnp.zeros((dim,), jnp.float32),
        "meta1_w": w(ks[4], (2, 256)), "meta1_b": w(ks[5], (256,)),
        "meta2_w": w(ks[6], (256, num_heads)), "meta2_b": w(ks[7], (num_heads,)),
        "mlp1_w": w(ks[8], (dim, hidden)), "mlp1_b": jnp.zeros((hidden,), jnp.float32),
        "mlp2_w": w(ks[9], (hidden, dim)), "mlp2_b": jnp.zeros((dim,), jnp.float32),
    }


def transformer_block_forward(x, params, *, num_heads, window_size,
                              num_groups=4, eps=1e-5):
    B, C, H, W = x.shape
    ws = window_size if H > window_size else H     # module clamps to resolution
    nh = num_heads
    hd = C // nh
    scale = hd ** (-0.5)
    assert H % ws == 0 and W % ws == 0, "reflect-pad (check_size) path not implemented"
    nwh, nww = H // ws, W // ws
    N = ws * ws
    HW = H * W

    # Single NCHW -> NHWC transpose (feeds GN/QKV and the fused residual).
    x_nhwc = jnp.transpose(x, (0, 2, 3, 1))                       # (B, H, W, C)
    x_rows = x_nhwc.reshape(B, HW, C)

    # ---- GroupNorm(4, dim) stats; normalize is fused into the QKV kernel -----
    tr = _largest_divisor_leq(HW, 512, multiple_of=8)
    s, ss = pallas_group_norm_stats(x_rows, tr)                   # (B,1,C) each
    cg = C // num_groups
    n = cg * HW
    sg = s.reshape(B, num_groups, cg).sum(-1)
    ssg = ss.reshape(B, num_groups, cg).sum(-1)
    mean_g = sg / n
    var_g = ssg / n - mean_g * mean_g
    inv_g = lax.rsqrt(var_g + eps)
    mean_c = jnp.repeat(mean_g, cg, axis=-1).reshape(B, 1, C)
    inv_c = jnp.repeat(inv_g, cg, axis=-1).reshape(B, 1, C)

    # ---- fold GN affine + attention scale into the fused [Q|K|V] projection --
    w_qkv0 = jnp.concatenate([params["QK_w"], params["V_w"]], axis=1)   # (C, 3C)
    b_qkv0 = jnp.concatenate([params["QK_b"], params["V_b"]], axis=0)   # (3C,)
    w_qkv = params["norm1_gamma"][:, None] * w_qkv0
    b_qkv = params["norm1_beta"] @ w_qkv0 + b_qkv0
    col_scale = jnp.concatenate([jnp.full((C,), scale, jnp.float32),
                                 jnp.ones((2 * C,), jnp.float32)])
    w_qkv = w_qkv * col_scale[None, :]
    b_qkv = b_qkv * col_scale

    qkv = pallas_gn_qkv(x_rows, mean_c, inv_c,
                        w_qkv.astype(jnp.bfloat16),
                        b_qkv.reshape(1, 3 * C), tr)              # (B, HW, 3C) bf16

    # ---- head-major + windowed relayout (one bf16 XLA transpose; this also
    #      serves as window_partition; window_reverse is fused in the kernel) --
    qkv = qkv.reshape(B, nwh, ws, nww, ws, 3, nh, hd)
    qkv = jnp.transpose(qkv, (5, 6, 0, 1, 3, 2, 4, 7))
    qkv_heads = qkv.reshape(3, nh, B * nwh * nww, N, hd)

    # ---- relative-position bias (input-independent; plain XLA, cacheable) ----
    rel = get_relative_positions(ws).reshape(N * N, 2)
    hb = jnp.maximum(rel @ params["meta1_w"] + params["meta1_b"], 0.0)
    bias = hb @ params["meta2_w"] + params["meta2_b"]
    bias = bias.reshape(N, N, nh).transpose(2, 0, 1)              # (nh, N, N)

    # ---- fused (cloud_conv fold + proj) projection weights --------------------
    # attn_mask == cloud_mask == None (shift_size=0) => cat([a, a]) @ Wc is
    # a @ (Wc[:C] + Wc[C:]); proj (1x1) commutes with window_reverse, so fold.
    cloud_fold = params["cloud_w"][:C] + params["cloud_w"][C:]          # (C, C)
    w_cp = (cloud_fold @ params["proj_w"]).reshape(nh, hd, C)
    b_cp = (params["cloud_b"] @ params["proj_w"] + params["proj_b"]).reshape(1, C)

    x1 = pallas_window_attention(qkv_heads, bias, x_nhwc,
                                 w_cp.astype(jnp.bfloat16), b_cp,
                                 window_size=ws)                  # (B, H, W, C)

    # ---- block MLP (norm2 = Identity); second residual fused in-kernel -------
    hidden = params["mlp1_w"].shape[1]
    M = B * HW
    tm = _largest_divisor_leq(M, 1024, multiple_of=8)   # keep ~512 on v7x (64 MiB VMEM)
    th = hidden if hidden <= 512 else _largest_divisor_leq(hidden, 512, multiple_of=128)
    y = pallas_mlp_residual(x1.reshape(M, C),
                            params["mlp1_w"].astype(jnp.bfloat16), params["mlp1_b"],
                            params["mlp2_w"].astype(jnp.bfloat16), params["mlp2_b"],
                            tm, th)                               # (M, C)
    return jnp.transpose(y.reshape(B, H, W, C), (0, 3, 1, 2))     # NCHW


if __name__ == "__main__":
    B, C, H, W = 2, 8, 16, 16          # dim=8 (divisible by 4 groups and 2 heads)
    num_heads, window_size = 2, 8      # input_resolution=16 > window_size=8

    key = jax.random.PRNGKey(0)
    kx, kp = jax.random.split(key)
    x = jax.random.normal(kx, (B, C, H, W), jnp.float32)
    params = init_params(kp, C, num_heads)

    fwd = jax.jit(functools.partial(transformer_block_forward,
                                    num_heads=num_heads, window_size=window_size))
    y = fwd(x, params)
    jax.block_until_ready(y)
    assert y.shape == (B, C, H, W) and y.dtype == jnp.float32
    print("KERNEL_OK")
</pallas_src>

<mosaic_0001>
module attributes {stable_mosaic.version = 11 : i64} {
  func.func @_gn_stats_kernel(%arg0: i32, %arg1: i32, %arg2: memref<1x256x8xf32, #tpu.memory_space<vmem>>, %arg3: memref<1x1x8xf32, #tpu.memory_space<vmem>>, %arg4: memref<1x1x8xf32, #tpu.memory_space<vmem>>) attributes {dimension_semantics = [#tpu.dimension_semantics<parallel>, #tpu.dimension_semantics<arbitrary>], iteration_bounds = array<i64: 2, 1>, scalar_prefetch = 0 : i64, scratch_operands = 0 : i64, tpu.core_type = #tpu.core_type<tc>, window_params = [{transform_indices = @transform_0, window_bounds = array<i64: 1, 256, 8>}, {transform_indices = @transform_1, window_bounds = array<i64: 1, 1, 8>}, {transform_indices = @transform_2, window_bounds = array<i64: 1, 1, 8>}]} {
    %c0_i32 = arith.constant 0 : i32
    %0 = arith.cmpi eq, %arg1, %c0_i32 : i32
    %1 = arith.extui %0 : i1 to i32
    %c0_i32_0 = arith.constant 0 : i32
    %2 = arith.cmpi ne, %1, %c0_i32_0 : i32
    scf.if %2 {
      %cst_16 = arith.constant 0.000000e+00 : f32
      %18 = vector.broadcast %cst_16 : f32 to vector<1x1x8xf32>
      %c0_17 = arith.constant 0 : index
      %c0_18 = arith.constant 0 : index
      %c0_19 = arith.constant 0 : index
      %19 = vector.load %arg3[%c0_17, %c0_18, %c0_19] : memref<1x1x8xf32, #tpu.memory_space<vmem>>, vector<1x1x8xf32>
      tpu.vector_store %arg3[%c0_17, %c0_18, %c0_19], %18 {strides = array<i32>} : memref<1x1x8xf32, #tpu.memory_space<vmem>>, vector<1x1x8xf32>,
      %cst_20 = arith.constant 0.000000e+00 : f32
      %20 = vector.broadcast %cst_20 : f32 to vector<1x1x8xf32>
      %c0_21 = arith.constant 0 : index
      %c0_22 = arith.constant 0 : index
      %c0_23 = arith.constant 0 : index
      %21 = vector.load %arg4[%c0_21, %c0_22, %c0_23] : memref<1x1x8xf32, #tpu.memory_space<vmem>>, vector<1x1x8xf32>
      tpu.vector_store %arg4[%c0_21, %c0_22, %c0_23], %20 {strides = array<i32>} : memref<1x1x8xf32, #tpu.memory_space<vmem>>, vector<1x1x8xf32>,
    } else {
    }
    %c0 = arith.constant 0 : index
    %c0_1 = arith.constant 0 : index
    %c0_2 = arith.constant 0 : index
    %3 = vector.load %arg2[%c0, %c0_1, %c0_2] : memref<1x256x8xf32, #tpu.memory_space<vmem>>, vector<1x256x8xf32>
    %4 = vector.shape_cast %3 : vector<1x256x8xf32> to vector<256x8xf32>
    %c0_3 = arith.constant 0 : index
    %c0_4 = arith.constant 0 : index
    %c0_5 = arith.constant 0 : index
    %5 = vector.load %arg3[%c0_3, %c0_4, %c0_5] : memref<1x1x8xf32, #tpu.memory_space<vmem>>, vector<1x1x8xf32>
    %cst = arith.constant dense<0.000000e+00> : vector<8xf32>
    %6 = vector.multi_reduction <add>, %4, %cst [0] : vector<256x8xf32> to vector<8xf32>
    %7 = vector.shape_cast %6 : vector<8xf32> to vector<1x8xf32>
    %8 = vector.shape_cast %7 : vector<1x8xf32> to vector<1x1x8xf32>
    %9 = arith.addf %5, %8 : vector<1x1x8xf32>
    %c0_6 = arith.constant 0 : index
    %c0_7 = arith.constant 0 : index
    %c0_8 = arith.constant 0 : index
    %10 = vector.load %arg3[%c0_6, %c0_7, %c0_8] : memref<1x1x8xf32, #tpu.memory_space<vmem>>, vector<1x1x8xf32>
    tpu.vector_store %arg3[%c0_6, %c0_7, %c0_8], %9 {strides = array<i32>} : memref<1x1x8xf32, #tpu.memory_space<vmem>>, vector<1x1x8xf32>,
    %c0_9 = arith.constant 0 : index
    %c0_10 = arith.constant 0 : index
    %c0_11 = arith.constant 0 : index
    %11 = vector.load %arg4[%c0_9, %c0_10, %c0_11] : memref<1x1x8xf32, #tpu.memory_space<vmem>>, vector<1x1x8xf32>
    %12 = arith.mulf %4, %4 : vector<256x8xf32>
    %cst_12 = arith.constant dense<0.000000e+00> : vector<8xf32>
    %13 = vector.multi_reduction <add>, %12, %cst_12 [0] : vector<256x8xf32> to vector<8xf32>
    %14 = vector.shape_cast %13 : vector<8xf32> to vector<1x8xf32>
    %15 = vector.shape_cast %14 : vector<1x8xf32> to vector<1x1x8xf32>
    %16 = arith.addf %11, %15 : vector<1x1x8xf32>
    %c0_13 = arith.constant 0 : index
    %c0_14 = arith.constant 0 : index
    %c0_15 = arith.constant 0 : index
    %17 = vector.load %arg4[%c0_13, %c0_14, %c0_15] : memref<1x1x8xf32, #tpu.memory_space<vmem>>, vector<1x1x8xf32>
    tpu.vector_store %arg4[%c0_13, %c0_14, %c0_15], %16 {strides = array<i32>} : memref<1x1x8xf32, #tpu.memory_space<vmem>>, vector<1x1x8xf32>,
    return
  }
  func.func @transform_0(%arg0: i32, %arg1: i32) -> (i32, i32, i32) {
    %c0_i32 = arith.constant 0 : i32
    %c0_i32_0 = arith.constant 0 : i32
    return %arg0, %arg1, %c0_i32 : i32, i32, i32
  }
  func.func @transform_1(%arg0: i32, %arg1: i32) -> (i32, i32, i32) {
    %c0_i32 = arith.constant 0 : i32
    %c0_i32_0 = arith.constant 0 : i32
    %c0_i32_1 = arith.constant 0 : i32
    return %arg0, %c0_i32, %c0_i32_0 : i32, i32, i32
  }
  func.func @transform_2(%arg0: i32, %arg1: i32) -> (i32, i32, i32) {
    %c0_i32 = arith.constant 0 : i32
    %c0_i32_0 = arith.constant 0 : i32
    %c0_i32_1 = arith.constant 0 : i32
    return %arg0, %c0_i32, %c0_i32_0 : i32, i32, i32
  }
}

module attributes {stable_mosaic.version = 11 : i64} {
  func.func @_gn_qkv_kernel(%arg0: i32, %arg1: i32, %arg2: memref<1x256x8xf32, #tpu.memory_space<vmem>>, %arg3: memref<1x1x8xf32, #tpu.memory_space<vmem>>, %arg4: memref<1x1x8xf32, #tpu.memory_space<vmem>>, %arg5: memref<8x24xbf16, #tpu.memory_space<vmem>>, %arg6: memref<1x24xf32, #tpu.memory_space<vmem>>, %arg7: memref<1x256x24xbf16, #tpu.memory_space<vmem>>) attributes {dimension_semantics = [#tpu.dimension_semantics<parallel>, #tpu.dimension_semantics<parallel>], iteration_bounds = array<i64: 2, 1>, scalar_prefetch = 0 : i64, scratch_operands = 0 : i64, tpu.core_type = #tpu.core_type<tc>, window_params = [{transform_indices = @transform_0, window_bounds = array<i64: 1, 256, 8>}, {transform_indices = @transform_1, window_bounds = array<i64: 1, 1, 8>}, {transform_indices = @transform_2, window_bounds = array<i64: 1, 1, 8>}, {pipeline_mode = #tpu.pipeline_mode<synchronous>, transform_indices = @transform_3, window_bounds = array<i64: 8, 24>}, {pipeline_mode = #tpu.pipeline_mode<synchronous>, transform_indices = @transform_4, window_bounds = array<i64: 1, 24>}, {transform_indices = @transform_5, window_bounds = array<i64: 1, 256, 24>}]} {
    %c0 = arith.constant 0 : index
    %c0_0 = arith.constant 0 : index
    %c0_1 = arith.constant 0 : index
    %0 = vector.load %arg2[%c0, %c0_0, %c0_1] : memref<1x256x8xf32, #tpu.memory_space<vmem>>, vector<1x256x8xf32>
    %1 = vector.shape_cast %0 : vector<1x256x8xf32> to vector<256x8xf32>
    %c0_2 = arith.constant 0 : index
    %c0_3 = arith.constant 0 : index
    %c0_4 = arith.constant 0 : index
    %2 = vector.load %arg3[%c0_2, %c0_3, %c0_4] : memref<1x1x8xf32, #tpu.memory_space<vmem>>, vector<1x1x8xf32>
    %3 = vector.shape_cast %2 : vector<1x1x8xf32> to vector<1x8xf32>
    %4 = vector.broadcast %3 : vector<1x8xf32> to vector<256x8xf32>
    %5 = arith.subf %1, %4 : vector<256x8xf32>
    %c0_5 = arith.constant 0 : index
    %c0_6 = arith.constant 0 : index
    %c0_7 = arith.constant 0 : index
    %6 = vector.load %arg4[%c0_5, %c0_6, %c0_7] : memref<1x1x8xf32, #tpu.memory_space<vmem>>, vector<1x1x8xf32>
    %7 = vector.shape_cast %6 : vector<1x1x8xf32> to vector<1x8xf32>
    %8 = vector.broadcast %7 : vector<1x8xf32> to vector<256x8xf32>
    %9 = arith.mulf %5, %8 : vector<256x8xf32>
    %10 = arith.truncf %9 : vector<256x8xf32> to vector<256x8xbf16>
    %c0_8 = arith.constant 0 : index
    %c0_9 = arith.constant 0 : index
    %11 = vector.load %arg5[%c0_8, %c0_9] : memref<8x24xbf16, #tpu.memory_space<vmem>>, vector<8x24xbf16>
    %cst = arith.constant dense<0.000000e+00> : vector<256x24xf32>
    %12 = tpu.matmul %10, %11, %cst {dimension_numbers = #tpu.dot_dimension_numbers<[1], [0], [0], [1], [0, 0, 1, 1], [], []>} : vector<256x8xbf16>, vector<8x24xbf16>, vector<256x24xf32> -> vector<256x24xf32>
    %c0_10 = arith.constant 0 : index
    %c0_11 = arith.constant 0 : index
    %13 = vector.load %arg6[%c0_10, %c0_11] : memref<1x24xf32, #tpu.memory_space<vmem>>, vector<1x24xf32>
    %14 = vector.broadcast %13 : vector<1x24xf32> to vector<256x24xf32>
    %15 = arith.addf %12, %14 : vector<256x24xf32>
    %16 = vector.shape_cast %15 : vector<256x24xf32> to vector<1x256x24xf32>
    %17 = arith.truncf %16 : vector<1x256x24xf32> to vector<1x256x24xbf16>
    %c0_12 = arith.constant 0 : index
    %c0_13 = arith.constant 0 : index
    %c0_14 = arith.constant 0 : index
    %18 = vector.load %arg7[%c0_12, %c0_13, %c0_14] : memref<1x256x24xbf16, #tpu.memory_space<vmem>>, vector<1x256x24xbf16>
    tpu.vector_store %arg7[%c0_12, %c0_13, %c0_14], %17 {strides = array<i32>} : memref<1x256x24xbf16, #tpu.memory_space<vmem>>, vector<1x256x24xbf16>,
    return
  }
  func.func @transform_0(%arg0: i32, %arg1: i32) -> (i32, i32, i32) {
    %c0_i32 = arith.constant 0 : i32
    %c0_i32_0 = arith.constant 0 : i32
    return %arg0, %arg1, %c0_i32 : i32, i32, i32
  }
  func.func @transform_1(%arg0: i32, %arg1: i32) -> (i32, i32, i32) {
    %c0_i32 = arith.constant 0 : i32
    %c0_i32_0 = arith.constant 0 : i32
    %c0_i32_1 = arith.constant 0 : i32
    return %arg0, %c0_i32, %c0_i32_0 : i32, i32, i32
  }
  func.func @transform_2(%arg0: i32, %arg1: i32) -> (i32, i32, i32) {
    %c0_i32 = arith.constant 0 : i32
    %c0_i32_0 = arith.constant 0 : i32
    %c0_i32_1 = arith.constant 0 : i32
    return %arg0, %c0_i32, %c0_i32_0 : i32, i32, i32
  }
  func.func @transform_3(%arg0: i32, %arg1: i32) -> (i32, i32) {
    %c0_i32 = arith.constant 0 : i32
    %c0_i32_0 = arith.constant 0 : i32
    %c0_i32_1 = arith.constant 0 : i32
    return %c0_i32, %c0_i32_0 : i32, i32
  }
  func.func @transform_4(%arg0: i32, %arg1: i32) -> (i32, i32) {
    %c0_i32 = arith.constant 0 : i32
    %c0_i32_0 = arith.constant 0 : i32
    %c0_i32_1 = arith.constant 0 : i32
    return %c0_i32, %c0_i32_0 : i32, i32
  }
  func.func @transform_5(%arg0: i32, %arg1: i32) -> (i32, i32, i32) {
    %c0_i32 = arith.constant 0 : i32
    %c0_i32_0 = arith.constant 0 : i32
    return %arg0, %arg1, %c0_i32 : i32, i32, i32
  }
}

module attributes {stable_mosaic.version = 11 : i64} {
  func.func @_window_attn_kernel(%arg0: i32, %arg1: i32, %arg2: i32, %arg3: memref<3x2x1x64x4xbf16, #tpu.memory_space<vmem>>, %arg4: memref<2x64x64xf32, #tpu.memory_space<vmem>>, %arg5: memref<1x8x8x8xf32, #tpu.memory_space<vmem>>, %arg6: memref<2x4x8xbf16, #tpu.memory_space<vmem>>, %arg7: memref<1x8xf32, #tpu.memory_space<vmem>>, %arg8: memref<1x8x8x8xf32, #tpu.memory_space<vmem>>) attributes {dimension_semantics = [#tpu.dimension_semantics<parallel>, #tpu.dimension_semantics<parallel>, #tpu.dimension_semantics<parallel>], iteration_bounds = array<i64: 2, 2, 2>, scalar_prefetch = 0 : i64, scratch_operands = 0 : i64, tpu.core_type = #tpu.core_type<tc>, window_params = [{transform_indices = @transform_0, window_bounds = array<i64: 3, 2, 1, 64, 4>}, {pipeline_mode = #tpu.pipeline_mode<synchronous>, transform_indices = @transform_1, window_bounds = array<i64: 2, 64, 64>}, {transform_indices = @transform_2, window_bounds = array<i64: 1, 8, 8, 8>}, {pipeline_mode = #tpu.pipeline_mode<synchronous>, transform_indices = @transform_3, window_bounds = array<i64: 2, 4, 8>}, {pipeline_mode = #tpu.pipeline_mode<synchronous>, transform_indices = @transform_4, window_bounds = array<i64: 1, 8>}, {transform_indices = @transform_5, window_bounds = array<i64: 1, 8, 8, 8>}]} {
    %c0 = arith.constant 0 : index
    %c0_0 = arith.constant 0 : index
    %c0_1 = arith.constant 0 : index
    %c0_2 = arith.constant 0 : index
    %c0_3 = arith.constant 0 : index
    %0 = vector.load %arg3[%c0, %c0_0, %c0_1, %c0_2, %c0_3] : memref<3x2x1x64x4xbf16, #tpu.memory_space<vmem>>, vector<3x2x1x64x4xbf16>
    %1 = vector.extract_strided_slice %0 {offsets = [0, 0, 0, 0, 0], sizes = [1, 2, 1, 64, 4], strides = [1, 1, 1, 1, 1]} : vector<3x2x1x64x4xbf16> to vector<1x2x1x64x4xbf16>
    %2 = vector.shape_cast %1 : vector<1x2x1x64x4xbf16> to vector<2x64x4xbf16>
    %3 = vector.extract_strided_slice %0 {offsets = [1, 0, 0, 0, 0], sizes = [1, 2, 1, 64, 4], strides = [1, 1, 1, 1, 1]} : vector<3x2x1x64x4xbf16> to vector<1x2x1x64x4xbf16>
    %4 = vector.shape_cast %3 : vector<1x2x1x64x4xbf16> to vector<2x64x4xbf16>
    %5 = vector.extract_strided_slice %0 {offsets = [2, 0, 0, 0, 0], sizes = [1, 2, 1, 64, 4], strides = [1, 1, 1, 1, 1]} : vector<3x2x1x64x4xbf16> to vector<1x2x1x64x4xbf16>
    %6 = vector.shape_cast %5 : vector<1x2x1x64x4xbf16> to vector<2x64x4xbf16>
    %cst = arith.constant dense<0.000000e+00> : vector<2x64x64xf32>
    %7 = tpu.matmul %2, %4, %cst {dimension_numbers = #tpu.dot_dimension_numbers<[2], [2], [1], [1], [0, 0, 0, 1, 1, 1], [0], [0]>} : vector<2x64x4xbf16>, vector<2x64x4xbf16>, vector<2x64x64xf32> -> vector<2x64x64xf32>
    %c0_4 = arith.constant 0 : index
    %c0_5 = arith.constant 0 : index
    %c0_6 = arith.constant 0 : index
    %8 = vector.load %arg4[%c0_4, %c0_5, %c0_6] : memref<2x64x64xf32, #tpu.memory_space<vmem>>, vector<2x64x64xf32>
    %9 = arith.addf %7, %8 : vector<2x64x64xf32>
    %cst_7 = arith.constant dense<0xFF800000> : vector<2x64xf32>
    %10 = vector.multi_reduction <maximumf>, %9, %cst_7 [2] : vector<2x64x64xf32> to vector<2x64xf32>
    %11 = vector.shape_cast %10 : vector<2x64xf32> to vector<2x64x1xf32>
    %12 = vector.broadcast %11 : vector<2x64x1xf32> to vector<2x64x64xf32>
    %13 = arith.subf %9, %12 : vector<2x64x64xf32>
    %14 = math.exp %13 : vector<2x64x64xf32>
    %cst_8 = arith.constant dense<0.000000e+00> : vector<2x64xf32>
    %15 = vector.multi_reduction <add>, %14, %cst_8 [2] : vector<2x64x64xf32> to vector<2x64xf32>
    %16 = vector.shape_cast %15 : vector<2x64xf32> to vector<2x64x1xf32>
    %17 = tpu.reciprocal %16 {approx = true} : vector<2x64x1xf32> -> vector<2x64x1xf32>
    %18 = vector.broadcast %17 : vector<2x64x1xf32> to vector<2x64x64xf32>
    %19 = arith.mulf %14, %18 : vector<2x64x64xf32>
    %20 = arith.truncf %19 : vector<2x64x64xf32> to vector<2x64x64xbf16>
    %cst_9 = arith.constant dense<0.000000e+00> : vector<2x64x4xf32>
    %21 = tpu.matmul %20, %6, %cst_9 {dimension_numbers = #tpu.dot_dimension_numbers<[2], [1], [1], [2], [0, 0, 0, 1, 1, 2], [0], [0]>} : vector<2x64x64xbf16>, vector<2x64x4xbf16>, vector<2x64x4xf32> -> vector<2x64x4xf32>
    %cst_10 = arith.constant 0.000000e+00 : f32
    %22 = vector.broadcast %cst_10 : f32 to vector<64x8xf32>
    %23 = vector.extract_strided_slice %21 {offsets = [0, 0, 0], sizes = [1, 64, 4], strides = [1, 1, 1]} : vector<2x64x4xf32> to vector<1x64x4xf32>
    %24 = vector.shape_cast %23 : vector<1x64x4xf32> to vector<64x4xf32>
    %25 = arith.truncf %24 : vector<64x4xf32> to vector<64x4xbf16>
    %c0_11 = arith.constant 0 : index
    %c0_12 = arith.constant 0 : index
    %c0_13 = arith.constant 0 : index
    %26 = vector.load %arg6[%c0_11, %c0_12, %c0_13] : memref<2x4x8xbf16, #tpu.memory_space<vmem>>, vector<1x4x8xbf16>
    %27 = vector.shape_cast %26 : vector<1x4x8xbf16> to vector<4x8xbf16>
    %cst_14 = arith.constant dense<0.000000e+00> : vector<64x8xf32>
    %28 = tpu.matmul %25, %27, %cst_14 {dimension_numbers = #tpu.dot_dimension_numbers<[1], [0], [0], [1], [0, 0, 1, 1], [], []>} : vector<64x4xbf16>, vector<4x8xbf16>, vector<64x8xf32> -> vector<64x8xf32>
    %29 = arith.addf %22, %28 : vector<64x8xf32>
    %30 = vector.extract_strided_slice %21 {offsets = [1, 0, 0], sizes = [1, 64, 4], strides = [1, 1, 1]} : vector<2x64x4xf32> to vector<1x64x4xf32>
    %31 = vector.shape_cast %30 : vector<1x64x4xf32> to vector<64x4xf32>
    %32 = arith.truncf %31 : vector<64x4xf32> to vector<64x4xbf16>
    %c1 = arith.constant 1 : index
    %c0_15 = arith.constant 0 : index
    %c0_16 = arith.constant 0 : index
    %33 = vector.load %arg6[%c1, %c0_15, %c0_16] : memref<2x4x8xbf16, #tpu.memory_space<vmem>>, vector<1x4x8xbf16>
    %34 = vector.shape_cast %33 : vector<1x4x8xbf16> to vector<4x8xbf16>
    %cst_17 = arith.constant dense<0.000000e+00> : vector<64x8xf32>
    %35 = tpu.matmul %32, %34, %cst_17 {dimension_numbers = #tpu.dot_dimension_numbers<[1], [0], [0], [1], [0, 0, 1, 1], [], []>} : vector<64x4xbf16>, vector<4x8xbf16>, vector<64x8xf32> -> vector<64x8xf32>
    %36 = arith.addf %29, %35 : vector<64x8xf32>
    %37 = vector.shape_cast %36 : vector<64x8xf32> to vector<1x8x8x8xf32>
    %c0_18 = arith.constant 0 : index
    %c0_19 = arith.constant 0 : index
    %c0_20 = arith.constant 0 : index
    %c0_21 = arith.constant 0 : index
    %38 = vector.load %arg5[%c0_18, %c0_19, %c0_20, %c0_21] : memref<1x8x8x8xf32, #tpu.memory_space<vmem>>, vector<1x8x8x8xf32>
    %39 = arith.addf %37, %38 : vector<1x8x8x8xf32>
    %c0_22 = arith.constant 0 : index
    %c0_23 = arith.constant 0 : index
    %40 = vector.load %arg7[%c0_22, %c0_23] : memref<1x8xf32, #tpu.memory_space<vmem>>, vector<1x8xf32>
    %41 = vector.shape_cast %40 : vector<1x8xf32> to vector<1x1x1x8xf32>
    %42 = vector.broadcast %41 : vector<1x1x1x8xf32> to vector<1x8x8x8xf32>
    %43 = arith.addf %39, %42 : vector<1x8x8x8xf32>
    %c0_24 = arith.constant 0 : index
    %c0_25 = arith.constant 0 : index
    %c0_26 = arith.constant 0 : index
    %c0_27 = arith.constant 0 : index
    %44 = vector.load %arg8[%c0_24, %c0_25, %c0_26, %c0_27] : memref<1x8x8x8xf32, #tpu.memory_space<vmem>>, vector<1x8x8x8xf32>
    tpu.vector_store %arg8[%c0_24, %c0_25, %c0_26, %c0_27], %43 {strides = array<i32>} : memref<1x8x8x8xf32, #tpu.memory_space<vmem>>, vector<1x8x8x8xf32>,
    return
  }
  func.func @transform_0(%arg0: i32, %arg1: i32, %arg2: i32) -> (i32, i32, i32, i32, i32) {
    %c2_i32 = arith.constant 2 : i32
    %0 = arith.muli %arg0, %c2_i32 : i32
    %c2_i32_0 = arith.constant 2 : i32
    %1 = arith.muli %0, %c2_i32_0 : i32
    %c2_i32_1 = arith.constant 2 : i32
    %2 = arith.muli %arg1, %c2_i32_1 : i32
    %3 = arith.addi %1, %2 : i32
    %4 = arith.addi %3, %arg2 : i32
    %c0_i32 = arith.constant 0 : i32
    %c0_i32_2 = arith.constant 0 : i32
    %c0_i32_3 = arith.constant 0 : i32
    %c0_i32_4 = arith.constant 0 : i32
    %c0_i32_5 = arith.constant 0 : i32
    return %c0_i32, %c0_i32_2, %4, %c0_i32_3, %c0_i32_4 : i32, i32, i32, i32, i32
  }
  func.func @transform_1(%arg0: i32, %arg1: i32, %arg2: i32) -> (i32, i32, i32) {
    %c0_i32 = arith.constant 0 : i32
    %c0_i32_0 = arith.constant 0 : i32
    %c0_i32_1 = arith.constant 0 : i32
    %c0_i32_2 = arith.constant 0 : i32
    return %c0_i32, %c0_i32_0, %c0_i32_1 : i32, i32, i32
  }
  func.func @transform_2(%arg0: i32, %arg1: i32, %arg2: i32) -> (i32, i32, i32, i32) {
    %c0_i32 = arith.constant 0 : i32
    %c0_i32_0 = arith.constant 0 : i32
    return %arg0, %arg1, %arg2, %c0_i32 : i32, i32, i32, i32
  }
  func.func @transform_3(%arg0: i32, %arg1: i32, %arg2: i32) -> (i32, i32, i32) {
    %c0_i32 = arith.constant 0 : i32
    %c0_i32_0 = arith.constant 0 : i32
    %c0_i32_1 = arith.constant 0 : i32
    %c0_i32_2 = arith.constant 0 : i32
    return %c0_i32, %c0_i32_0, %c0_i32_1 : i32, i32, i32
  }
  func.func @transform_4(%arg0: i32, %arg1: i32, %arg2: i32) -> (i32, i32) {
    %c0_i32 = arith.constant 0 : i32
    %c0_i32_0 = arith.constant 0 : i32
    %c0_i32_1 = arith.constant 0 : i32
    return %c0_i32, %c0_i32_0 : i32, i32
  }
  func.func @transform_5(%arg0: i32, %arg1: i32, %arg2: i32) -> (i32, i32, i32, i32) {
    %c0_i32 = arith.constant 0 : i32
    %c0_i32_0 = arith.constant 0 : i32
    return %arg0, %arg1, %arg2, %c0_i32 : i32, i32, i32, i32
  }
}

module attributes {stable_mosaic.version = 11 : i64} {
  func.func @_mlp_kernel(%arg0: i32, %arg1: i32, %arg2: memref<512x8xf32, #tpu.memory_space<vmem>>, %arg3: memref<8x32xbf16, #tpu.memory_space<vmem>>, %arg4: memref<1x32xf32, #tpu.memory_space<vmem>>, %arg5: memref<32x8xbf16, #tpu.memory_space<vmem>>, %arg6: memref<1x8xf32, #tpu.memory_space<vmem>>, %arg7: memref<512x8xf32, #tpu.memory_space<vmem>>, %arg8: memref<512x8xf32, #tpu.memory_space<vmem>>) attributes {dimension_semantics = [#tpu.dimension_semantics<parallel>, #tpu.dimension_semantics<arbitrary>], iteration_bounds = array<i64: 1, 1>, scalar_prefetch = 0 : i64, scratch_operands = 1 : i64, tpu.core_type = #tpu.core_type<tc>, window_params = [{transform_indices = @transform_0, window_bounds = array<i64: 512, 8>}, {transform_indices = @transform_1, window_bounds = array<i64: 8, 32>}, {transform_indices = @transform_2, window_bounds = array<i64: 1, 32>}, {transform_indices = @transform_3, window_bounds = array<i64: 32, 8>}, {pipeline_mode = #tpu.pipeline_mode<synchronous>, transform_indices = @transform_4, window_bounds = array<i64: 1, 8>}, {transform_indices = @transform_5, window_bounds = array<i64: 512, 8>}]} {
    %c0_i32 = arith.constant 0 : i32
    %0 = arith.cmpi eq, %arg1, %c0_i32 : i32
    %1 = arith.extui %0 : i1 to i32
    %c0_i32_0 = arith.constant 0 : i32
    %2 = arith.cmpi ne, %1, %c0_i32_0 : i32
    scf.if %2 {
      %cst_16 = arith.constant 0.000000e+00 : f32
      %21 = vector.broadcast %cst_16 : f32 to vector<512x8xf32>
      %c0_17 = arith.constant 0 : index
      %c0_18 = arith.constant 0 : index
      %22 = vector.load %arg8[%c0_17, %c0_18] : memref<512x8xf32, #tpu.memory_space<vmem>>, vector<512x8xf32>
      tpu.vector_store %arg8[%c0_17, %c0_18], %21 {strides = array<i32>} : memref<512x8xf32, #tpu.memory_space<vmem>>, vector<512x8xf32>,
    } else {
    }
    %c0 = arith.constant 0 : index
    %c0_1 = arith.constant 0 : index
    %3 = vector.load %arg2[%c0, %c0_1] : memref<512x8xf32, #tpu.memory_space<vmem>>, vector<512x8xf32>
    %4 = arith.truncf %3 : vector<512x8xf32> to vector<512x8xbf16>
    %c0_2 = arith.constant 0 : index
    %c0_3 = arith.constant 0 : index
    %5 = vector.load %arg3[%c0_2, %c0_3] : memref<8x32xbf16, #tpu.memory_space<vmem>>, vector<8x32xbf16>
    %cst = arith.constant dense<0.000000e+00> : vector<512x32xf32>
    %6 = tpu.matmul %4, %5, %cst {dimension_numbers = #tpu.dot_dimension_numbers<[1], [0], [0], [1], [0, 0, 1, 1], [], []>} : vector<512x8xbf16>, vector<8x32xbf16>, vector<512x32xf32> -> vector<512x32xf32>
    %c0_4 = arith.constant 0 : index
    %c0_5 = arith.constant 0 : index
    %7 = vector.load %arg4[%c0_4, %c0_5] : memref<1x32xf32, #tpu.memory_space<vmem>>, vector<1x32xf32>
    %8 = vector.broadcast %7 : vector<1x32xf32> to vector<512x32xf32>
    %9 = arith.addf %6, %8 : vector<512x32xf32>
    %cst_6 = arith.constant 0.000000e+00 : f32
    %10 = vector.broadcast %cst_6 : f32 to vector<512x32xf32>
    %11 = arith.maximumf %9, %10 : vector<512x32xf32>
    %c0_7 = arith.constant 0 : index
    %c0_8 = arith.constant 0 : index
    %12 = vector.load %arg8[%c0_7, %c0_8] : memref<512x8xf32, #tpu.memory_space<vmem>>, vector<512x8xf32>
    %13 = arith.truncf %11 : vector<512x32xf32> to vector<512x32xbf16>
    %c0_9 = arith.constant 0 : index
    %c0_10 = arith.constant 0 : index
    %14 = vector.load %arg5[%c0_9, %c0_10] : memref<32x8xbf16, #tpu.memory_space<vmem>>, vector<32x8xbf16>
    %cst_11 = arith.constant dense<0.000000e+00> : vector<512x8xf32>
    %15 = tpu.matmul %13, %14, %cst_11 {dimension_numbers = #tpu.dot_dimension_numbers<[1], [0], [0], [1], [0, 0, 1, 1], [], []>} : vector<512x32xbf16>, vector<32x8xbf16>, vector<512x8xf32> -> vector<512x8xf32>
    %16 = arith.addf %12, %15 : vector<512x8xf32>
    %c0_12 = arith.constant 0 : index
    %c0_13 = arith.constant 0 : index
    %17 = vector.load %arg8[%c0_12, %c0_13] : memref<512x8xf32, #tpu.memory_space<vmem>>, vector<512x8xf32>
    tpu.vector_store %arg8[%c0_12, %c0_13], %16 {strides = array<i32>} : memref<512x8xf32, #tpu.memory_space<vmem>>, vector<512x8xf32>,
    %c0_i32_14 = arith.constant 0 : i32
    %18 = arith.cmpi eq, %arg1, %c0_i32_14 : i32
    %19 = arith.extui %18 : i1 to i32
    %c0_i32_15 = arith.constant 0 : i32
    %20 = arith.cmpi ne, %19, %c0_i32_15 : i32
    scf.if %20 {
      %c0_16 = arith.constant 0 : index
      %c0_17 = arith.constant 0 : index
      %21 = vector.load %arg8[%c0_16, %c0_17] : memref<512x8xf32, #tpu.memory_space<vmem>>, vector<512x8xf32>
      %c0_18 = arith.constant 0 : index
      %c0_19 = arith.constant 0 : index
      %22 = vector.load %arg6[%c0_18, %c0_19] : memref<1x8xf32, #tpu.memory_space<vmem>>, vector<1x8xf32>
      %23 = vector.broadcast %22 : vector<1x8xf32> to vector<512x8xf32>
      %24 = arith.addf %21, %23 : vector<512x8xf32>
      %c0_20 = arith.constant 0 : index
      %c0_21 = arith.constant 0 : index
      %25 = vector.load %arg2[%c0_20, %c0_21] : memref<512x8xf32, #tpu.memory_space<vmem>>, vector<512x8xf32>
      %26 = arith.addf %24, %25 : vector<512x8xf32>
      %c0_22 = arith.constant 0 : index
      %c0_23 = arith.constant 0 : index
      %27 = vector.load %arg7[%c0_22, %c0_23] : memref<512x8xf32, #tpu.memory_space<vmem>>, vector<512x8xf32>
      tpu.vector_store %arg7[%c0_22, %c0_23], %26 {strides = array<i32>} : memref<512x8xf32, #tpu.memory_space<vmem>>, vector<512x8xf32>,
    } else {
    }
    return
  }
  func.func @transform_0(%arg0: i32, %arg1: i32) -> (i32, i32) {
    %c0_i32 = arith.constant 0 : i32
    %c0_i32_0 = arith.constant 0 : i32
    return %arg0, %c0_i32 : i32, i32
  }
  func.func @transform_1(%arg0: i32, %arg1: i32) -> (i32, i32) {
    %c0_i32 = arith.constant 0 : i32
    %c0_i32_0 = arith.constant 0 : i32
    return %c0_i32, %arg1 : i32, i32
  }
  func.func @transform_2(%arg0: i32, %arg1: i32) -> (i32, i32) {
    %c0_i32 = arith.constant 0 : i32
    %c0_i32_0 = arith.constant 0 : i32
    return %c0_i32, %arg1 : i32, i32
  }
  func.func @transform_3(%arg0: i32, %arg1: i32) -> (i32, i32) {
    %c0_i32 = arith.constant 0 : i32
    %c0_i32_0 = arith.constant 0 : i32
    return %arg1, %c0_i32 : i32, i32
  }
  func.func @transform_4(%arg0: i32, %arg1: i32) -> (i32, i32) {
    %c0_i32 = arith.constant 0 : i32
    %c0_i32_0 = arith.constant 0 : i32
    %c0_i32_1 = arith.constant 0 : i32
    return %c0_i32, %c0_i32_0 : i32, i32
  }
  func.func @transform_5(%arg0: i32, %arg1: i32) -> (i32, i32) {
    %c0_i32 = arith.constant 0 : i32
    %c0_i32_0 = arith.constant 0 : i32
    return %arg0, %c0_i32 : i32, i32
  }
}

</mosaic_0001>

<llo_original>
// kernel: transformer_block_forward.4
$region0: #{transformer_block_forward.4}
  #allocation0 [shape = 'u32[]', space=smem, size = 0x4, offset = 0x4, fixed_abs, tag = 'smem constant byte address 0x4 - core index']
  #allocation1 [shape = 'u32[144,128]{1,0:T(1,128)}', space=vmem, size = 0x12000, scoped, tag = 'internal scratch']
  %s0 = inlined_call_operand.vmem [shape: f32[2,256,8], index: 0, kind: input, shape index: {}]
  %s1 = inlined_call_operand.vmem [shape: f32[2,1,8], index: 1, kind: output, shape index: {0}]
  %s2 = inlined_call_operand.vmem [shape: f32[2,1,8], index: 2, kind: output, shape index: {1}]
  %3 = xla_tuple %s1, %s2
  %s4 = sld [smem:[#allocation0]]
  $region49: #{transformer_block_forward.4} parent=0
    _
  %s6 = ssub.s32 1, %s4
  %s7 = scalar_select 0, %s6, %s4
  loop: start=0, step=1, limit=4
  $region2: #{transformer_block_forward.4} parent=0 // loop_pre_header
    _
  $region3: #{transformer_block_forward.4} parent=0 // loop_header
    %s9 = sphi 0, %s13
    %p10 = scmp.ge.s32.totalorder %s9, 4
    %s16 = sphi 0, %s28
    %s17 = sphi 0, %s24
    %s18 = sphi 0, %s16
    %s19 = sphi 0, %s17
    %s20 = sphi 0, %s18
    %s21 = sphi 0, %s19
    %s33 = sphi 0, %s35
    %s36 = sphi 0, %s33
    %s37 = sphi 0, %s36
    %s53 = sphi 0, %s37
    %s59 = sphi 0, %s61
    %s62 = sphi 0, %s59
    %s63 = sphi 0, %s62
    %s79 = sphi 0, %s63
    %s85 = sphi 0, %s87
    %s88 = sphi 0, %s85
    %s89 = sphi 0, %s88
    %s105 = sphi 0, %s89
  $region4: #{transformer_block_forward.4} parent=0 // loop_header_branch
    %12 = sbr.rel (%p10) target = $region8
  $region5: #{transformer_block_forward.4} parent=0 // loop_body
    %s14 = ssub.s32 %s9, 1
    %s15 = ssub.s32 %s9, 2
    %s22 = sadd.s32 1, %s17
    %p23 = scmp.ge.s32.totalorder %s22, 1
    %s24 = scalar_select %p23, 0, %s22
    %s25 = sadd.s32 1, %s16
    %s26 = scalar_select %p23, %s25, %s16
    %p27 = scmp.ge.s32.totalorder %s26, 2
    %s28 = scalar_select %p27, 0, %s26
    %s29 = ssub.s32 %s16, %s28
    %s30 = ssub.s32 %s17, %s24
    %s31 = sor.u32 %s29, %s30
    %p32 = scmp.eq.s32.totalorder %s31, 0
    %s34 = sadd.s32 %s33, 1
    %s35 = scalar_select %p32, %s33, %s34
    %p38 = pneg %p32
    %p39 = scmp.eq.s32.totalorder %s9, 1
    %p40 = por %p38, %p39
    %p41 = scmp.ne.s32.totalorder %s33, %s36
    %p42 = scmp.eq.s32.totalorder %s9, 0
    %p43 = por %p41, %p42
    %p44 = scmp.ne.s32.totalorder %s33, %s36
    %p45 = scmp.eq.s32.totalorder %s14, 1
    %p46 = por %p44, %p45
    %p47 = scmp.ne.s32.totalorder %s36, %s37
    %p48 = scmp.eq.s32.totalorder %s14, 0
    %p49 = por %p47, %p48
    %p50 = scmp.ne.s32.totalorder %s36, %s37
    %p51 = scmp.eq.s32.totalorder %s15, 1
    %p52 = por %p50, %p51
    %p54 = scmp.ne.s32.totalorder %s37, %s53
    %p55 = scmp.eq.s32.totalorder %s15, 0
    %p56 = por %p54, %p55
    %s57 = ssub.s32 %s16, %s28
    %p58 = scmp.eq.s32.totalorder %s57, 0
    %s60 = sadd.s32 %s59, 1
    %s61 = scalar_select %p58, %s59, %s60
    %p64 = pneg %p58
    %p65 = scmp.eq.s32.totalorder %s9, 1
    %p66 = por %p64, %p65
    %p67 = scmp.ne.s32.totalorder %s59, %s62
    %p68 = scmp.eq.s32.totalorder %s9, 0
    %p69 = por %p67, %p68
    %p70 = scmp.ne.s32.totalorder %s59, %s62
    %p71 = scmp.eq.s32.totalorder %s14, 1
    %p72 = por %p70, %p71
    %p73 = scmp.ne.s32.totalorder %s62, %s63
    %p74 = scmp.eq.s32.totalorder %s14, 0
    %p75 = por %p73, %p74
    %p76 = scmp.ne.s32.totalorder %s62, %s63
    %p77 = scmp.eq.s32.totalorder %s15, 1
    %p78 = por %p76, %p77
    %p80 = scmp.ne.s32.totalorder %s63, %s79
    %p81 = scmp.eq.s32.totalorder %s15, 0
    %p82 = por %p80, %p81
    %s83 = ssub.s32 %s16, %s28
    %p84 = scmp.eq.s32.totalorder %s83, 0
    %s86 = sadd.s32 %s85, 1
    %s87 = scalar_select %p84, %s85, %s86
    %p90 = pneg %p84
    %p91 = scmp.eq.s32.totalorder %s9, 1
    %p92 = por %p90, %p91
    %p93 = scmp.ne.s32.totalorder %s85, %s88
    %p94 = scmp.eq.s32.totalorder %s9, 0
    %p95 = por %p93, %p94
    %p96 = scmp.ne.s32.totalorder %s85, %s88
    %p97 = scmp.eq.s32.totalorder %s14, 1
    %p98 = por %p96, %p97
    %p99 = scmp.ne.s32.totalorder %s88, %s89
    %p100 = scmp.eq.s32.totalorder %s14, 0
    %p101 = por %p99, %p100
    %p102 = scmp.ne.s32.totalorder %s88, %s89
    %p103 = scmp.eq.s32.totalorder %s15, 1
    %p104 = por %p102, %p103
    %p106 = scmp.ne.s32.totalorder %s89, %s105
    %p107 = scmp.eq.s32.totalorder %s15, 0
    %p108 = por %p106, %p107
    %p109 = scmp.le.s32.totalorder 1, %s9
    %p110 = scmp.lt.s32.totalorder %s9, 3
    %p111 = pnand %p109, %p110
    %p112 = pneg %p111
    // Predicated region
    $region9: #{transformer_block_forward.4} parent=5 // pred_check
      _
    $region10: #{transformer_block_forward.4} parent=5 // pred_check_branch
      %114 = sbr.rel (%p111) target = $region12
    $region11: #{transformer_block_forward.4} parent=5 // pred_region
      %s115 = ssub.s32 %s9, 1
    $region12: #{transformer_block_forward.4} parent=5 // pred_fallthru
      _
    %p116 = scmp.lt.s32.totalorder %s9, 2
    // Predicated region
    $region13: #{transformer_block_forward.4} parent=5 // pred_check
      %p117 = pneg %p116
    $region14: #{transformer_block_forward.4} parent=5 // pred_check_branch
      %119 = sbr.rel (%p117) target = $region16
    $region15: #{transformer_block_forward.4} parent=5 // pred_region
      // Predicated region
      $region17: #{transformer_block_forward.4} parent=15 // pred_check
        %p120 = pneg %p43
      $region18: #{transformer_block_forward.4} parent=15 // pred_check_branch
        %122 = sbr.rel (%p120) target = $region20
      $region19: #{transformer_block_forward.4} parent=15 // pred_region
        %s123 = smul.u32 32, %s17
        %p124 = scmp.lt.s32.totalorder %s16, 1
        %s125 = scalar_select %p124, %s16, 1
        %p126 = scmp.lt.s32.totalorder %s123, 31
        %s127 = scalar_select %p126, %s123, 31
        %s128 = smul.addr %s125, 32
        %s129 = sadd.s32 %s127, %s128
        %s130 = smul.addr %s129, 8
        %s131 = scalar_lea.vmem %s0, %s130
        %s132 = smul.u32 32, %s17
      $region20: #{transformer_block_forward.4} parent=15 // pred_fallthru
        _
    $region16: #{transformer_block_forward.4} parent=5 // pred_fallthru
      _
    %p133 = scmp.le.s32.totalorder 1, %s9
    %p134 = scmp.lt.s32.totalorder %s9, 3
    %p135 = pnand %p133, %p134
    %p136 = pneg %p135
    // Predicated region
    $region21: #{transformer_block_forward.4} parent=5 // pred_check
      _
    $region22: #{transformer_block_forward.4} parent=5 // pred_check_branch
      %138 = sbr.rel (%p135) target = $region24
    $region23: #{transformer_block_forward.4} parent=5 // pred_region
      %s139 = ssub.s32 %s9, 1
      %s140 = smul.u32 32, %s19
      %p141 = scmp.lt.s32.totalorder %s18, 1
      %s142 = scalar_select %p141, %s18, 1
      %p143 = scmp.lt.s32.totalorder %s140, 31
      %s144 = scalar_select %p143, %s140, 31
      %s145 = smul.addr %s142, 32
      %s146 = sadd.s32 %s144, %s145
      %s147 = smul.addr %s146, 8
      %s148 = scalar_lea.vmem %s0, %s147
      %p149 = pneg %p49
      %p150 = pneg %p46
      %p151 = pneg %p75
      %p152 = pneg %p72
      %p153 = scmp.lt.s32.totalorder %s18, 1
      %s154 = scalar_select %p153, %s18, 1
      %s155 = scalar_lea.vmem %s1, %s154
      %p156 = pneg %p101
      %p157 = pneg %p98
      %p158 = scmp.lt.s32.totalorder %s18, 1
      %s159 = scalar_select %p158, %s18, 1
      %s160 = scalar_lea.vmem %s2, %s159
      %s161 = smul.u32 32, %s19
      %p162 = scmp.lt.s32.totalorder %s18, 1
      %s163 = scalar_select %p162, %s18, 1
      %p164 = scmp.lt.s32.totalorder %s161, 31
      %s165 = scalar_select %p164, %s161, 31
      %s166 = smul.addr %s163, 32
      %s167 = sadd.s32 %s165, %s166
      %s168 = smul.addr %s167, 8
      %s169 = scalar_lea.vmem %s0, %s168
      %s170 = smul.u32 32, %s19
      %p171 = scmp.lt.s32.totalorder %s18, 1
      %s172 = scalar_select %p171, %s18, 1
      %s173 = scalar_lea.vmem %s1, %s172
      %p174 = scmp.lt.s32.totalorder %s18, 1
      %s175 = scalar_select %p174, %s18, 1
      %s176 = scalar_lea.vmem %s2, %s175
      %p177 = scmp.eq.s32.totalorder %s19, 0
      // Predicated region
      $region25: #{transformer_block_forward.4} parent=23 // pred_check
        %p178 = pneg %p177
      $region26: #{transformer_block_forward.4} parent=23 // pred_check_branch
        %180 = sbr.rel (%p178) target = $region28
      $region27: #{transformer_block_forward.4} parent=23 // pred_region
        %vm181 = vcmask 57344
        %182 = vst.msk [vmem:[%s173] sm:$0x1] %vm181, 0.0
        %183 = vst.msk [vmem:[%s176] sm:$0x1] %vm181, 0.0
      $region28: #{transformer_block_forward.4} parent=23 // pred_fallthru
        _
      %v184 = vld [vmem:[%s169] sm:$0xff]
      %v185 = vld [vmem:[%s169 + $0x8] sm:$0xff]
      %v186 = vld [vmem:[%s169 + $0x10] sm:$0xff]
      %v187 = vld [vmem:[%s169 + $0x18] sm:$0xff]
      %v188 = vld [vmem:[%s169 + $0x20] sm:$0xff]
      %v189 = vld [vmem:[%s169 + $0x28] sm:$0xff]
      %v190 = vld [vmem:[%s169 + $0x30] sm:$0xff]
      %v191 = vld [vmem:[%s169 + $0x38] sm:$0xff]
      %v192 = vld [vmem:[%s169 + $0x40] sm:$0xff]
      %v193 = vld [vmem:[%s169 + $0x48] sm:$0xff]
      %v194 = vld [vmem:[%s169 + $0x50] sm:$0xff]
      %v195 = vld [vmem:[%s169 + $0x58] sm:$0xff]
      %v196 = vld [vmem:[%s169 + $0x60] sm:$0xff]
      %v197 = vld [vmem:[%s169 + $0x68] sm:$0xff]
      %v198 = vld [vmem:[%s169 + $0x70] sm:$0xff]
      %v199 = vld [vmem:[%s169 + $0x78] sm:$0xff]
      %v200 = vld [vmem:[%s169 + $0x80] sm:$0xff]
      %v201 = vld [vmem:[%s169 + $0x88] sm:$0xff]
      %v202 = vld [vmem:[%s169 + $0x90] sm:$0xff]
      %v203 = vld [vmem:[%s169 + $0x98] sm:$0xff]
      %v204 = vld [vmem:[%s169 + $0xa0] sm:$0xff]
      %v205 = vld [vmem:[%s169 + $0xa8] sm:$0xff]
      %v206 = vld [vmem:[%s169 + $0xb0] sm:$0xff]
      %v207 = vld [vmem:[%s169 + $0xb8] sm:$0xff]
      %v208 = vld [vmem:[%s169 + $0xc0] sm:$0xff]
      %v209 = vld [vmem:[%s169 + $0xc8] sm:$0xff]
      %v210 = vld [vmem:[%s169 + $0xd0] sm:$0xff]
      %v211 = vld [vmem:[%s169 + $0xd8] sm:$0xff]
      %v212 = vld [vmem:[%s169 + $0xe0] sm:$0xff]
      %v213 = vld [vmem:[%s169 + $0xe8] sm:$0xff]
      %v214 = vld [vmem:[%s169 + $0xf0] sm:$0xff]
      %v215 = vld [vmem:[%s169 + $0xf8] sm:$0xff]
      %v216 = vld [vmem:[%s173] sm:$0x1]
      %vm217 = vcmask 64512
      %v218 = vsel %vm217, %v184, 0.0
      %v219 = vsel %vm217, %v185, 0.0
      %v220 = vadd.f32 %v218, %v219
      %v221 = vsel %vm217, %v186, 0.0
      %v222 = vadd.f32 %v220, %v221
      %v223 = vsel %vm217, %v187, 0.0
      %v224 = vadd.f32 %v222, %v223
      %v225 = vsel %vm217, %v188, 0.0
      %v226 = vadd.f32 %v224, %v225
      %v227 = vsel %vm217, %v189, 0.0
      %v228 = vadd.f32 %v226, %v227
      %v229 = vsel %vm217, %v190, 0.0
      %v230 = vadd.f32 %v228, %v229
      %v231 = vsel %vm217, %v191, 0.0
      %v232 = vadd.f32 %v230, %v231
      %v233 = vsel %vm217, %v192, 0.0
      %v234 = vadd.f32 %v232, %v233
      %v235 = vsel %vm217, %v193, 0.0
      %v236 = vadd.f32 %v234, %v235
      %v237 = vsel %vm217, %v194, 0.0
      %v238 = vadd.f32 %v236, %v237
      %v239 = vsel %vm217, %v195, 0.0
      %v240 = vadd.f32 %v238, %v239
      %v241 = vsel %vm217, %v196, 0.0
      %v242 = vadd.f32 %v240, %v241
      %v243 = vsel %vm217, %v197, 0.0
      %v244 = vadd.f32 %v242, %v243
      %v245 = vsel %vm217, %v198, 0.0
      %v246 = vadd.f32 %v244, %v245
      %v247 = vsel %vm217, %v199, 0.0
      %v248 = vadd.f32 %v246, %v247
      %v249 = vsel %vm217, %v200, 0.0
      %v250 = vadd.f32 %v248, %v249
      %v251 = vsel %vm217, %v201, 0.0
      %v252 = vadd.f32 %v250, %v251
      %v253 = vsel %vm217, %v202, 0.0
      %v254 = vadd.f32 %v252, %v253
      %v255 = vsel %vm217, %v203, 0.0
      %v256 = vadd.f32 %v254, %v255
      %v257 = vsel %vm217, %v204, 0.0
      %v258 = vadd.f32 %v256, %v257
      %v259 = vsel %vm217, %v205, 0.0
      %v260 = vadd.f32 %v258, %v259
      %v261 = vsel %vm217, %v206, 0.0
      %v262 = vadd.f32 %v260, %v261
      %v263 = vsel %vm217, %v207, 0.0
      %v264 = vadd.f32 %v262, %v263
      %v265 = vsel %vm217, %v208, 0.0
      %v266 = vadd.f32 %v264, %v265
      %v267 = vsel %vm217, %v209, 0.0
      %v268 = vadd.f32 %v266, %v267
      %v269 = vsel %vm217, %v210, 0.0
      %v270 = vadd.f32 %v268, %v269
      %v271 = vsel %vm217, %v211, 0.0
      %v272 = vadd.f32 %v270, %v271
      %v273 = vsel %vm217, %v212, 0.0
      %v274 = vadd.f32 %v272, %v273
      %v275 = vsel %vm217, %v213, 0.0
      %v276 = vadd.f32 %v274, %v275
      %v277 = vsel %vm217, %v214, 0.0
      %v278 = vadd.f32 %v276, %v277
      %v279 = vsel %vm217, %v215, 0.0
      %v280 = vadd.f32 %v278, %v279
      %v281 = vrot.slane %v280, 4
      %v282 = vadd.f32 %v280, %v281
      %v283 = vrot.slane %v282, 2
      %v284 = vadd.f32 %v282, %v283
      %v285 = vrot.slane %v284, 1
      %v286 = vadd.f32 %v284, %v285
      %v287 = vadd.f32 %v216, %v286
      %vm288 = vcmask 57344
      %289 = vst.msk [vmem:[%s173] sm:$0x1] %vm288, %v287
      %v290 = vld [vmem:[%s176] sm:$0x1]
      %v291 = vmul.f32 %v184, %v184
      %v292 = vmul.f32 %v185, %v185
      %v293 = vmul.f32 %v186, %v186
      %v294 = vmul.f32 %v187, %v187
      %v295 = vmul.f32 %v188, %v188
      %v296 = vmul.f32 %v189, %v189
      %v297 = vmul.f32 %v190, %v190
      %v298 = vmul.f32 %v191, %v191
      %v299 = vmul.f32 %v192, %v192
      %v300 = vmul.f32 %v193, %v193
      %v301 = vmul.f32 %v194, %v194
      %v302 = vmul.f32 %v195, %v195
      %v303 = vmul.f32 %v196, %v196
      %v304 = vmul.f32 %v197, %v197
      %v305 = vmul.f32 %v198, %v198
      %v306 = vmul.f32 %v199, %v199
      %v307 = vmul.f32 %v200, %v200
      %v308 = vmul.f32 %v201, %v201
      %v309 = vmul.f32 %v202, %v202
      %v310 = vmul.f32 %v203, %v203
      %v311 = vmul.f32 %v204, %v204
      %v312 = vmul.f32 %v205, %v205
      %v313 = vmul.f32 %v206, %v206
      %v314 = vmul.f32 %v207, %v207
      %v315 = vmul.f32 %v208, %v208
      %v316 = vmul.f32 %v209, %v209
      %v317 = vmul.f32 %v210, %v210
      %v318 = vmul.f32 %v211, %v211
      %v319 = vmul.f32 %v212, %v212
      %v320 = vmul.f32 %v213, %v213
      %v321 = vmul.f32 %v214, %v214
      %v322 = vmul.f32 %v215, %v215
      %v323 = vsel %vm217, %v291, 0.0
      %v324 = vsel %vm217, %v292, 0.0
      %v325 = vadd.f32 %v323, %v324
      %v326 = vsel %vm217, %v293, 0.0
      %v327 = vadd.f32 %v325, %v326
      %v328 = vsel %vm217, %v294, 0.0
      %v329 = vadd.f32 %v327, %v328
      %v330 = vsel %vm217, %v295, 0.0
      %v331 = vadd.f32 %v329, %v330
      %v332 = vsel %vm217, %v296, 0.0
      %v333 = vadd.f32 %v331, %v332
      %v334 = vsel %vm217, %v297, 0.0
      %v335 = vadd.f32 %v333, %v334
      %v336 = vsel %vm217, %v298, 0.0
      %v337 = vadd.f32 %v335, %v336
      %v338 = vsel %vm217, %v299, 0.0
      %v339 = vadd.f32 %v337, %v338
      %v340 = vsel %vm217, %v300, 0.0
      %v341 = vadd.f32 %v339, %v340
      %v342 = vsel %vm217, %v301, 0.0
      %v343 = vadd.f32 %v341, %v342
      %v344 = vsel %vm217, %v302, 0.0
      %v345 = vadd.f32 %v343, %v344
      %v346 = vsel %vm217, %v303, 0.0
      %v347 = vadd.f32 %v345, %v346
      %v348 = vsel %vm217, %v304, 0.0
      %v349 = vadd.f32 %v347, %v348
      %v350 = vsel %vm217, %v305, 0.0
      %v351 = vadd.f32 %v349, %v350
      %v352 = vsel %vm217, %v306, 0.0
      %v353 = vadd.f32 %v351, %v352
      %v354 = vsel %vm217, %v307, 0.0
      %v355 = vadd.f32 %v353, %v354
      %v356 = vsel %vm217, %v308, 0.0
      %v357 = vadd.f32 %v355, %v356
      %v358 = vsel %vm217, %v309, 0.0
      %v359 = vadd.f32 %v357, %v358
      %v360 = vsel %vm217, %v310, 0.0
      %v361 = vadd.f32 %v359, %v360
      %v362 = vsel %vm217, %v311, 0.0
      %v363 = vadd.f32 %v361, %v362
      %v364 = vsel %vm217, %v312, 0.0
      %v365 = vadd.f32 %v363, %v364
      %v366 = vsel %vm217, %v313, 0.0
      %v367 = vadd.f32 %v365, %v366
      %v368 = vsel %vm217, %v314, 0.0
      %v369 = vadd.f32 %v367, %v368
      %v370 = vsel %vm217, %v315, 0.0
      %v371 = vadd.f32 %v369, %v370
      %v372 = vsel %vm217, %v316, 0.0
      %v373 = vadd.f32 %v371, %v372
      %v374 = vsel %vm217, %v317, 0.0
      %v375 = vadd.f32 %v373, %v374
      %v376 = vsel %vm217, %v318, 0.0
      %v377 = vadd.f32 %v375, %v376
      %v378 = vsel %vm217, %v319, 0.0
      %v379 = vadd.f32 %v377, %v378
      %v380 = vsel %vm217, %v320, 0.0
      %v381 = vadd.f32 %v379, %v380
      %v382 = vsel %vm217, %v321, 0.0
      %v383 = vadd.f32 %v381, %v382
      %v384 = vsel %vm217, %v322, 0.0
      %v385 = vadd.f32 %v383, %v384
      %v386 = vrot.slane %v385, 4
      %v387 = vadd.f32 %v385, %v386
      %v388 = vrot.slane %v387, 2
      %v389 = vadd.f32 %v387, %v388
      %v390 = vrot.slane %v389, 1
      %v391 = vadd.f32 %v389, %v390
      %v392 = vadd.f32 %v290, %v391
      %393 = vst.msk [vmem:[%s176] sm:$0x1] %vm288, %v392
      %p394 = scmp.lt.s32.totalorder %s18, 1
      %s395 = scalar_select %p394, %s18, 1
      %s396 = scalar_lea.vmem %s1, %s395
      %p397 = scmp.lt.s32.totalorder %s18, 1
      %s398 = scalar_select %p397, %s18, 1
      %s399 = scalar_lea.vmem %s2, %s398
      // Predicated region
      $region29: #{transformer_block_forward.4} parent=23 // pred_check
        %p400 = pneg %p72
      $region30: #{transformer_block_forward.4} parent=23 // pred_check_branch
        %402 = sbr.rel (%p400) target = $region32
      $region31: #{transformer_block_forward.4} parent=23 // pred_region
        _
      $region32: #{transformer_block_forward.4} parent=23 // pred_fallthru
        _
      // Predicated region
      $region33: #{transformer_block_forward.4} parent=23 // pred_check
        %p403 = pneg %p98
      $region34: #{transformer_block_forward.4} parent=23 // pred_check_branch
        %405 = sbr.rel (%p403) target = $region36
      $region35: #{transformer_block_forward.4} parent=23 // pred_region
        _
      $region36: #{transformer_block_forward.4} parent=23 // pred_fallthru
        _
    $region24: #{transformer_block_forward.4} parent=5 // pred_fallthru
      _
    %p406 = scmp.le.s32.totalorder 2, %s9
    // Predicated region
    $region37: #{transformer_block_forward.4} parent=5 // pred_check
      %p407 = pneg %p406
    $region38: #{transformer_block_forward.4} parent=5 // pred_check_branch
      %409 = sbr.rel (%p407) target = $region40
    $region39: #{transformer_block_forward.4} parent=5 // pred_region
      %s410 = ssub.s32 %s9, 2
      // Predicated region
      $region41: #{transformer_block_forward.4} parent=39 // pred_check
        %p411 = pneg %p78
      $region42: #{transformer_block_forward.4} parent=39 // pred_check_branch
        %413 = sbr.rel (%p411) target = $region44
      $region43: #{transformer_block_forward.4} parent=39 // pred_region
        %p414 = scmp.lt.s32.totalorder %s20, 1
        %s415 = scalar_select %p414, %s20, 1
        %s416 = scalar_lea.vmem %s1, %s415
      $region44: #{transformer_block_forward.4} parent=39 // pred_fallthru
        _
      // Predicated region
      $region45: #{transformer_block_forward.4} parent=39 // pred_check
        %p417 = pneg %p104
      $region46: #{transformer_block_forward.4} parent=39 // pred_check_branch
        %419 = sbr.rel (%p417) target = $region48
      $region47: #{transformer_block_forward.4} parent=39 // pred_region
        %p420 = scmp.lt.s32.totalorder %s20, 1
        %s421 = scalar_select %p420, %s20, 1
        %s422 = scalar_lea.vmem %s2, %s421
      $region48: #{transformer_block_forward.4} parent=39 // pred_fallthru
        _
    $region40: #{transformer_block_forward.4} parent=5 // pred_fallthru
      _
  $region6: #{transformer_block_forward.4} parent=0 // loop_footer
    %s13 = sadd.s32 1, %s9
  $region7: #{transformer_block_forward.4} parent=0 // loop_footer_branch
    %8 = sbr.rel target = $region3
  $region8: #{transformer_block_forward.4} parent=0 // loop_exit
    _

// kernel: sub.10
$region0: #{sub.10}
  %s0 = inlined_call_operand.vmem [shape: s32[2,8,8], index: 0, kind: input, shape index: {}]
  %s1 = inlined_call_operand.vmem [shape: s32[2,64], index: 1, kind: output, shape index: {}]
  $region1: #{sub.10} parent=0
    #allocation0 [shape = 'u8[4096]{0}', space=vmem, size = 0x1000, scoped, tag = 'scoped mem for output reshape']
    %s2 = smov 3
    %v3 = vld [vmem:[%s0] ss:$8 sm:%s2]
    %vm4 = vcmask 64512
    %5 = vst.msk [vmem:[#allocation0] sm:$0x3] %vm4, %v3
    %s6 = scalar_lea.vmem %s0, 7
    %s7 = smov 3
    %v8 = vld [vmem:[%s6] ss:$8 sm:%s7]
    %9 = vrot.lane.b32.xlu0 %v8, 56
    %v10 = vpop.permute.xlu0 %9
    %vm11 = vcmask 523712
    %12 = vst.msk [vmem:[#allocation0] sm:$0x3] %vm11, %v10
    %s13 = scalar_lea.vmem %s0, 6
    %s14 = smov 3
    %v15 = vld [vmem:[%s13] ss:$8 sm:%s14]
    %16 = vrot.lane.b32.xlu0 %v15, 48
    %v17 = vpop.permute.xlu0 %16
    %vm18 = vcmask 458112
    %19 = vst.msk [vmem:[#allocation0] sm:$0x3] %vm18, %v17
    %s20 = scalar_lea.vmem %s0, 5
    %s21 = smov 3
    %v22 = vld [vmem:[%s20] ss:$8 sm:%s21]
    %23 = vrot.lane.b32.xlu0 %v22, 40
    %v24 = vpop.permute.xlu0 %23
    %vm25 = vcmask 392512
    %26 = vst.msk [vmem:[#allocation0] sm:$0x3] %vm25, %v24
    %s27 = scalar_lea.vmem %s0, 4
    %s28 = smov 3
    %v29 = vld [vmem:[%s27] ss:$8 sm:%s28]
    %30 = vrot.lane.b32.xlu0 %v29, 32
    %v31 = vpop.permute.xlu0 %30
    %vm32 = vcmask 326912
    %33 = vst.msk [vmem:[#allocation0] sm:$0x3] %vm32, %v31
    %s34 = scalar_lea.vmem %s0, 3
    %s35 = smov 3
    %v36 = vld [vmem:[%s34] ss:$8 sm:%s35]
    %37 = vrot.lane.b32.xlu0 %v36, 24
    %v38 = vpop.permute.xlu0 %37
    %vm39 = vcmask 261312
    %40 = vst.msk [vmem:[#allocation0] sm:$0x3] %vm39, %v38
    %s41 = scalar_lea.vmem %s0, 2
    %s42 = smov 3
    %v43 = vld [vmem:[%s41] ss:$8 sm:%s42]
    %44 = vrot.lane.b32.xlu0 %v43, 16
    %v45 = vpop.permute.xlu0 %44
    %vm46 = vcmask 195712
    %47 = vst.msk [vmem:[#allocation0] sm:$0x3] %vm46, %v45
    %s48 = scalar_lea.vmem %s0, 1
    %s49 = smov 3
    %v50 = vld [vmem:[%s48] ss:$8 sm:%s49]
    %51 = vrot.lane.b32.xlu0 %v50, 8
    %v52 = vpop.permute.xlu0 %51
    %vm53 = vcmask 130112
    %54 = vst.msk [vmem:[#allocation0] sm:$0x3] %vm53, %v52
    %s56 = sshllo.u32 0, 2
    %v58 = vld [vmem:[#allocation0] sm:%s56]
    %s59 = sshllo.u32 0, 2
    %60 = vst [vmem:[%s1] sm:%s59] %v58

// kernel: transformer_block_forward.5
$region0: #{transformer_block_forward.5}
  #allocation0 [shape = 'u32[]', space=smem, size = 0x4, offset = 0x4, fixed_abs, tag = 'smem constant byte address 0x4 - core index']
  #allocation1 [shape = 'u32[144,128]{1,0:T(1,128)}', space=vmem, size = 0x12000, scoped, tag = 'internal scratch']
  %s0 = inlined_call_operand.vmem [shape: f32[2,256,8], index: 0, kind: input, shape index: {}]
  %s1 = inlined_call_operand.vmem [shape: f32[2,1,8], index: 1, kind: input, shape index: {}]
  %s2 = inlined_call_operand.vmem [shape: f32[2,1,8], index: 2, kind: input, shape index: {}]
  %s3 = inlined_call_operand.vmem [shape: bf16[8,24], index: 3, kind: input, shape index: {}]
  %s4 = inlined_call_operand.vmem [shape: f32[1,24], index: 4, kind: input, shape index: {}]
  %s5 = inlined_call_operand.vmem [shape: bf16[2,256,24], index: 5, kind: output, shape index: {}]
  %s6 = sld [smem:[#allocation0]]
  $region53: #{transformer_block_forward.5} parent=0
    _
  %s8 = ssub.s32 1, %s6
  %s9 = scalar_select 0, %s8, %s6
  loop: start=0, step=1, limit=4
  $region2: #{transformer_block_forward.5} parent=0 // loop_pre_header
    _
  $region3: #{transformer_block_forward.5} parent=0 // loop_header
    %s11 = sphi 0, %s15
    %p12 = scmp.ge.s32.totalorder %s11, 4
    %s18 = sphi 0, %s30
    %s19 = sphi 0, %s26
    %s20 = sphi 0, %s18
    %s21 = sphi 0, %s19
    %s22 = sphi 0, %s20
    %s23 = sphi 0, %s21
    %s35 = sphi 0, %s37
    %s38 = sphi 0, %s35
    %s39 = sphi 0, %s38
    %s55 = sphi 0, %s39
    %s61 = sphi 0, %s63
    %s64 = sphi 0, %s61
    %s65 = sphi 0, %s64
    %s81 = sphi 0, %s65
    %s87 = sphi 0, %s89
    %s90 = sphi 0, %s87
    %s91 = sphi 0, %s90
    %s107 = sphi 0, %s91
    %s111 = sphi 0, %s111
    %s113 = sphi 0, %s111
    %s114 = sphi 0, %s113
    %s128 = sphi 0, %s114
    %s132 = sphi 0, %s132
    %s134 = sphi 0, %s132
    %s135 = sphi 0, %s134
    %s149 = sphi 0, %s135
    %s157 = sphi 0, %s159
    %s160 = sphi 0, %s157
    %s161 = sphi 0, %s160
    %s177 = sphi 0, %s161
  $region4: #{transformer_block_forward.5} parent=0 // loop_header_branch
    %14 = sbr.rel (%p12) target = $region8
  $region5: #{transformer_block_forward.5} parent=0 // loop_body
    %s16 = ssub.s32 %s11, 1
    %s17 = ssub.s32 %s11, 2
    %s24 = sadd.s32 1, %s19
    %p25 = scmp.ge.s32.totalorder %s24, 1
    %s26 = scalar_select %p25, 0, %s24
    %s27 = sadd.s32 1, %s18
    %s28 = scalar_select %p25, %s27, %s18
    %p29 = scmp.ge.s32.totalorder %s28, 2
    %s30 = scalar_select %p29, 0, %s28
    %s31 = ssub.s32 %s18, %s30
    %s32 = ssub.s32 %s19, %s26
    %s33 = sor.u32 %s31, %s32
    %p34 = scmp.eq.s32.totalorder %s33, 0
    %s36 = sadd.s32 %s35, 1
    %s37 = scalar_select %p34, %s35, %s36
    %p40 = pneg %p34
    %p41 = scmp.eq.s32.totalorder %s11, 1
    %p42 = por %p40, %p41
    %p43 = scmp.ne.s32.totalorder %s35, %s38
    %p44 = scmp.eq.s32.totalorder %s11, 0
    %p45 = por %p43, %p44
    %p46 = scmp.ne.s32.totalorder %s35, %s38
    %p47 = scmp.eq.s32.totalorder %s16, 1
    %p48 = por %p46, %p47
    %p49 = scmp.ne.s32.totalorder %s38, %s39
    %p50 = scmp.eq.s32.totalorder %s16, 0
    %p51 = por %p49, %p50
    %p52 = scmp.ne.s32.totalorder %s38, %s39
    %p53 = scmp.eq.s32.totalorder %s17, 1
    %p54 = por %p52, %p53
    %p56 = scmp.ne.s32.totalorder %s39, %s55
    %p57 = scmp.eq.s32.totalorder %s17, 0
    %p58 = por %p56, %p57
    %s59 = ssub.s32 %s18, %s30
    %p60 = scmp.eq.s32.totalorder %s59, 0
    %s62 = sadd.s32 %s61, 1
    %s63 = scalar_select %p60, %s61, %s62
    %p66 = pneg %p60
    %p67 = scmp.eq.s32.totalorder %s11, 1
    %p68 = por %p66, %p67
    %p69 = scmp.ne.s32.totalorder %s61, %s64
    %p70 = scmp.eq.s32.totalorder %s11, 0
    %p71 = por %p69, %p70
    %p72 = scmp.ne.s32.totalorder %s61, %s64
    %p73 = scmp.eq.s32.totalorder %s16, 1
    %p74 = por %p72, %p73
    %p75 = scmp.ne.s32.totalorder %s64, %s65
    %p76 = scmp.eq.s32.totalorder %s16, 0
    %p77 = por %p75, %p76
    %p78 = scmp.ne.s32.totalorder %s64, %s65
    %p79 = scmp.eq.s32.totalorder %s17, 1
    %p80 = por %p78, %p79
    %p82 = scmp.ne.s32.totalorder %s65, %s81
    %p83 = scmp.eq.s32.totalorder %s17, 0
    %p84 = por %p82, %p83
    %s85 = ssub.s32 %s18, %s30
    %p86 = scmp.eq.s32.totalorder %s85, 0
    %s88 = sadd.s32 %s87, 1
    %s89 = scalar_select %p86, %s87, %s88
    %p92 = pneg %p86
    %p93 = scmp.eq.s32.totalorder %s11, 1
    %p94 = por %p92, %p93
    %p95 = scmp.ne.s32.totalorder %s87, %s90
    %p96 = scmp.eq.s32.totalorder %s11, 0
    %p97 = por %p95, %p96
    %p98 = scmp.ne.s32.totalorder %s87, %s90
    %p99 = scmp.eq.s32.totalorder %s16, 1
    %p100 = por %p98, %p99
    %p101 = scmp.ne.s32.totalorder %s90, %s91
    %p102 = scmp.eq.s32.totalorder %s16, 0
    %p103 = por %p101, %p102
    %p104 = scmp.ne.s32.totalorder %s90, %s91
    %p105 = scmp.eq.s32.totalorder %s17, 1
    %p106 = por %p104, %p105
    %p108 = scmp.ne.s32.totalorder %s91, %s107
    %p109 = scmp.eq.s32.totalorder %s17, 0
    %p110 = por %p108, %p109
    %s112 = sadd.s32 %s111, 1
    %p115 = scmp.eq.s32.totalorder %s11, 1
    %p116 = scmp.ne.s32.totalorder %s111, %s113
    %p117 = scmp.eq.s32.totalorder %s11, 0
    %p118 = por %p116, %p117
    %p119 = scmp.ne.s32.totalorder %s111, %s113
    %p120 = scmp.eq.s32.totalorder %s16, 1
    %p121 = por %p119, %p120
    %p122 = scmp.ne.s32.totalorder %s113, %s114
    %p123 = scmp.eq.s32.totalorder %s16, 0
    %p124 = por %p122, %p123
    %p125 = scmp.ne.s32.totalorder %s113, %s114
    %p126 = scmp.eq.s32.totalorder %s17, 1
    %p127 = por %p125, %p126
    %p129 = scmp.ne.s32.totalorder %s114, %s128
    %p130 = scmp.eq.s32.totalorder %s17, 0
    %p131 = por %p129, %p130
    %s133 = sadd.s32 %s132, 1
    %p136 = scmp.eq.s32.totalorder %s11, 1
    %p137 = scmp.ne.s32.totalorder %s132, %s134
    %p138 = scmp.eq.s32.totalorder %s11, 0
    %p139 = por %p137, %p138
    %p140 = scmp.ne.s32.totalorder %s132, %s134
    %p141 = scmp.eq.s32.totalorder %s16, 1
    %p142 = por %p140, %p141
    %p143 = scmp.ne.s32.totalorder %s134, %s135
    %p144 = scmp.eq.s32.totalorder %s16, 0
    %p145 = por %p143, %p144
    %p146 = scmp.ne.s32.totalorder %s134, %s135
    %p147 = scmp.eq.s32.totalorder %s17, 1
    %p148 = por %p146, %p147
    %p150 = scmp.ne.s32.totalorder %s135, %s149
    %p151 = scmp.eq.s32.totalorder %s17, 0
    %p152 = por %p150, %p151
    %s153 = ssub.s32 %s18, %s30
    %s154 = ssub.s32 %s19, %s26
    %s155 = sor.u32 %s153, %s154
    %p156 = scmp.eq.s32.totalorder %s155, 0
    %s158 = sadd.s32 %s157, 1
    %s159 = scalar_select %p156, %s157, %s158
    %p162 = pneg %p156
    %p163 = scmp.eq.s32.totalorder %s11, 1
    %p164 = por %p162, %p163
    %p165 = scmp.ne.s32.totalorder %s157, %s160
    %p166 = scmp.eq.s32.totalorder %s11, 0
    %p167 = por %p165, %p166
    %p168 = scmp.ne.s32.totalorder %s157, %s160
    %p169 = scmp.eq.s32.totalorder %s16, 1
    %p170 = por %p168, %p169
    %p171 = scmp.ne.s32.totalorder %s160, %s161
    %p172 = scmp.eq.s32.totalorder %s16, 0
    %p173 = por %p171, %p172
    %p174 = scmp.ne.s32.totalorder %s160, %s161
    %p175 = scmp.eq.s32.totalorder %s17, 1
    %p176 = por %p174, %p175
    %p178 = scmp.ne.s32.totalorder %s161, %s177
    %p179 = scmp.eq.s32.totalorder %s17, 0
    %p180 = por %p178, %p179
    %p181 = scmp.le.s32.totalorder 1, %s11
    %p182 = scmp.lt.s32.totalorder %s11, 3
    %p183 = pnand %p181, %p182
    %p184 = pneg %p183
    // Predicated region
    $region9: #{transformer_block_forward.5} parent=5 // pred_check
      _
    $region10: #{transformer_block_forward.5} parent=5 // pred_check_branch
      %186 = sbr.rel (%p183) target = $region12
    $region11: #{transformer_block_forward.5} parent=5 // pred_region
      %s187 = ssub.s32 %s11, 1
      // Predicated region
      $region13: #{transformer_block_forward.5} parent=11 // pred_check
        %p188 = pneg %p124
      $region14: #{transformer_block_forward.5} parent=11 // pred_check_branch
        %190 = sbr.rel (%p188) target = $region16
      $region15: #{transformer_block_forward.5} parent=11 // pred_region
        _
      $region16: #{transformer_block_forward.5} parent=11 // pred_fallthru
        _
      // Predicated region
      $region17: #{transformer_block_forward.5} parent=11 // pred_check
        %p191 = pneg %p145
      $region18: #{transformer_block_forward.5} parent=11 // pred_check_branch
        %193 = sbr.rel (%p191) target = $region20
      $region19: #{transformer_block_forward.5} parent=11 // pred_region
        _
      $region20: #{transformer_block_forward.5} parent=11 // pred_fallthru
        _
    $region12: #{transformer_block_forward.5} parent=5 // pred_fallthru
      _
    %p194 = scmp.lt.s32.totalorder %s11, 2
    // Predicated region
    $region21: #{transformer_block_forward.5} parent=5 // pred_check
      %p195 = pneg %p194
    $region22: #{transformer_block_forward.5} parent=5 // pred_check_branch
      %197 = sbr.rel (%p195) target = $region24
    $region23: #{transformer_block_forward.5} parent=5 // pred_region
      // Predicated region
      $region25: #{transformer_block_forward.5} parent=23 // pred_check
        %p198 = pneg %p45
      $region26: #{transformer_block_forward.5} parent=23 // pred_check_branch
        %200 = sbr.rel (%p198) target = $region28
      $region27: #{transformer_block_forward.5} parent=23 // pred_region
        %s201 = smul.u32 32, %s19
        %p202 = scmp.lt.s32.totalorder %s18, 1
        %s203 = scalar_select %p202, %s18, 1
        %p204 = scmp.lt.s32.totalorder %s201, 31
        %s205 = scalar_select %p204, %s201, 31
        %s206 = smul.addr %s203, 32
        %s207 = sadd.s32 %s205, %s206
        %s208 = smul.addr %s207, 8
        %s209 = scalar_lea.vmem %s0, %s208
        %s210 = smul.u32 32, %s19
      $region28: #{transformer_block_forward.5} parent=23 // pred_fallthru
        _
      // Predicated region
      $region29: #{transformer_block_forward.5} parent=23 // pred_check
        %p211 = pneg %p71
      $region30: #{transformer_block_forward.5} parent=23 // pred_check_branch
        %213 = sbr.rel (%p211) target = $region32
      $region31: #{transformer_block_forward.5} parent=23 // pred_region
        %p214 = scmp.lt.s32.totalorder %s18, 1
        %s215 = scalar_select %p214, %s18, 1
        %s216 = scalar_lea.vmem %s1, %s215
      $region32: #{transformer_block_forward.5} parent=23 // pred_fallthru
        _
      // Predicated region
      $region33: #{transformer_block_forward.5} parent=23 // pred_check
        %p217 = pneg %p97
      $region34: #{transformer_block_forward.5} parent=23 // pred_check_branch
        %219 = sbr.rel (%p217) target = $region36
      $region35: #{transformer_block_forward.5} parent=23 // pred_region
        %p220 = scmp.lt.s32.totalorder %s18, 1
        %s221 = scalar_select %p220, %s18, 1
        %s222 = scalar_lea.vmem %s2, %s221
      $region36: #{transformer_block_forward.5} parent=23 // pred_fallthru
        _
    $region24: #{transformer_block_forward.5} parent=5 // pred_fallthru
      _
    %p223 = scmp.le.s32.totalorder 1, %s11
    %p224 = scmp.lt.s32.totalorder %s11, 3
    %p225 = pnand %p223, %p224
    %p226 = pneg %p225
    // Predicated region
    $region37: #{transformer_block_forward.5} parent=5 // pred_check
      _
    $region38: #{transformer_block_forward.5} parent=5 // pred_check_branch
      %228 = sbr.rel (%p225) target = $region40
    $region39: #{transformer_block_forward.5} parent=5 // pred_region
      %s229 = ssub.s32 %s11, 1
      %s230 = smul.u32 32, %s21
      %p231 = scmp.lt.s32.totalorder %s20, 1
      %s232 = scalar_select %p231, %s20, 1
      %p233 = scmp.lt.s32.totalorder %s230, 31
      %s234 = scalar_select %p233, %s230, 31
      %s235 = smul.addr %s232, 32
      %s236 = sadd.s32 %s234, %s235
      %s237 = smul.addr %s236, 8
      %s238 = scalar_lea.vmem %s0, %s237
      %p239 = pneg %p51
      %p240 = pneg %p48
      %p241 = scmp.lt.s32.totalorder %s20, 1
      %s242 = scalar_select %p241, %s20, 1
      %s243 = scalar_lea.vmem %s1, %s242
      %p244 = pneg %p77
      %p245 = pneg %p74
      %p246 = scmp.lt.s32.totalorder %s20, 1
      %s247 = scalar_select %p246, %s20, 1
      %s248 = scalar_lea.vmem %s2, %s247
      %p249 = pneg %p103
      %p250 = pneg %p100
      %p251 = pneg %p124
      %p252 = pneg %p121
      %p253 = pneg %p145
      %p254 = pneg %p142
      %p255 = pneg %p173
      %p256 = pneg %p170
      %s257 = smul.u32 32, %s21
      %p258 = scmp.lt.s32.totalorder %s20, 1
      %s259 = scalar_select %p258, %s20, 1
      %p260 = scmp.lt.s32.totalorder %s257, 31
      %s261 = scalar_select %p260, %s257, 31
      %s262 = smul.addr %s259, 32
      %s263 = sadd.s32 %s261, %s262
      %s264 = smul.addr %s263, 4
      %s265 = scalar_lea.vmem %s5, %s264
      %s266 = smul.u32 32, %s21
      %p267 = scmp.lt.s32.totalorder %s20, 1
      %s268 = scalar_select %p267, %s20, 1
      %p269 = scmp.lt.s32.totalorder %s266, 31
      %s270 = scalar_select %p269, %s266, 31
      %s271 = smul.addr %s268, 32
      %s272 = sadd.s32 %s270, %s271
      %s273 = smul.addr %s272, 8
      %s274 = scalar_lea.vmem %s0, %s273
      %s275 = smul.u32 32, %s21
      %p276 = scmp.lt.s32.totalorder %s20, 1
      %s277 = scalar_select %p276, %s20, 1
      %s278 = scalar_lea.vmem %s1, %s277
      %p279 = scmp.lt.s32.totalorder %s20, 1
      %s280 = scalar_select %p279, %s20, 1
      %s281 = scalar_lea.vmem %s2, %s280
      %s282 = smul.u32 32, %s21
      %p283 = scmp.lt.s32.totalorder %s20, 1
      %s284 = scalar_select %p283, %s20, 1
      %p285 = scmp.lt.s32.totalorder %s282, 31
      %s286 = scalar_select %p285, %s282, 31
      %s287 = smul.addr %s284, 32
      %s288 = sadd.s32 %s286, %s287
      %s289 = smul.addr %s288, 4
      %s290 = scalar_lea.vmem %s5, %s289
      %s291 = smul.u32 32, %s21
      %v293 = vld [vmem:[%s274] sm:$0xff]
      %v294 = vld [vmem:[%s274 + $0x8] sm:$0xff]
      %v295 = vld [vmem:[%s274 + $0x10] sm:$0xff]
      %v296 = vld [vmem:[%s274 + $0x18] sm:$0xff]
      %v297 = vld [vmem:[%s274 + $0x20] sm:$0xff]
      %v298 = vld [vmem:[%s274 + $0x28] sm:$0xff]
      %v299 = vld [vmem:[%s274 + $0x30] sm:$0xff]
      %v300 = vld [vmem:[%s274 + $0x38] sm:$0xff]
      %v301 = vld [vmem:[%s274 + $0x40] sm:$0xff]
      %v302 = vld [vmem:[%s274 + $0x48] sm:$0xff]
      %v303 = vld [vmem:[%s274 + $0x50] sm:$0xff]
      %v304 = vld [vmem:[%s274 + $0x58] sm:$0xff]
      %v305 = vld [vmem:[%s274 + $0x60] sm:$0xff]
      %v306 = vld [vmem:[%s274 + $0x68] sm:$0xff]
      %v307 = vld [vmem:[%s274 + $0x70] sm:$0xff]
      %v308 = vld [vmem:[%s274 + $0x78] sm:$0xff]
      %v309 = vld [vmem:[%s274 + $0x80] sm:$0xff]
      %v310 = vld [vmem:[%s274 + $0x88] sm:$0xff]
      %v311 = vld [vmem:[%s274 + $0x90] sm:$0xff]
      %v312 = vld [vmem:[%s274 + $0x98] sm:$0xff]
      %v313 = vld [vmem:[%s274 + $0xa0] sm:$0xff]
      %v314 = vld [vmem:[%s274 + $0xa8] sm:$0xff]
      %v315 = vld [vmem:[%s274 + $0xb0] sm:$0xff]
      %v316 = vld [vmem:[%s274 + $0xb8] sm:$0xff]
      %v317 = vld [vmem:[%s274 + $0xc0] sm:$0xff]
      %v318 = vld [vmem:[%s274 + $0xc8] sm:$0xff]
      %v319 = vld [vmem:[%s274 + $0xd0] sm:$0xff]
      %v320 = vld [vmem:[%s274 + $0xd8] sm:$0xff]
      %v321 = vld [vmem:[%s274 + $0xe0] sm:$0xff]
      %v322 = vld [vmem:[%s274 + $0xe8] sm:$0xff]
      %v323 = vld [vmem:[%s274 + $0xf0] sm:$0xff]
      %v324 = vld [vmem:[%s274 + $0xf8] sm:$0xff]
      %v325 = vld [vmem:[%s278] sm:$0x1]
      %v327 = vlaneseq
      %v328 = vshrl.u32 %v327, 7
      %v329 = vsub.s32 0, %v328
      %v330 = vrot.slane %v325, %v329
      %v332 = vsub.f32 %v293, %v330
      %v333 = vsub.f32 %v294, %v330
      %v334 = vsub.f32 %v295, %v330
      %v335 = vsub.f32 %v296, %v330
      %v336 = vsub.f32 %v297, %v330
      %v337 = vsub.f32 %v298, %v330
      %v338 = vsub.f32 %v299, %v330
      %v339 = vsub.f32 %v300, %v330
      %v340 = vsub.f32 %v301, %v330
      %v341 = vsub.f32 %v302, %v330
      %v342 = vsub.f32 %v303, %v330
      %v343 = vsub.f32 %v304, %v330
      %v344 = vsub.f32 %v305, %v330
      %v345 = vsub.f32 %v306, %v330
      %v346 = vsub.f32 %v307, %v330
      %v347 = vsub.f32 %v308, %v330
      %v348 = vsub.f32 %v309, %v330
      %v349 = vsub.f32 %v310, %v330
      %v350 = vsub.f32 %v311, %v330
      %v351 = vsub.f32 %v312, %v330
      %v352 = vsub.f32 %v313, %v330
      %v353 = vsub.f32 %v314, %v330
      %v354 = vsub.f32 %v315, %v330
      %v355 = vsub.f32 %v316, %v330
      %v356 = vsub.f32 %v317, %v330
      %v357 = vsub.f32 %v318, %v330
      %v358 = vsub.f32 %v319, %v330
      %v359 = vsub.f32 %v320, %v330
      %v360 = vsub.f32 %v321, %v330
      %v361 = vsub.f32 %v322, %v330
      %v362 = vsub.f32 %v323, %v330
      %v363 = vsub.f32 %v324, %v330
      %v364 = vld [vmem:[%s281] sm:$0x1]
      %v366 = vlaneseq
      %v367 = vshrl.u32 %v366, 7
      %v368 = vsub.s32 0, %v367
      %v369 = vrot.slane %v364, %v368
      %v371 = vmul.f32 %v332, %v369
      %v372 = vmul.f32 %v333, %v369
      %v373 = vmul.f32 %v334, %v369
      %v374 = vmul.f32 %v335, %v369
      %v375 = vmul.f32 %v336, %v369
      %v376 = vmul.f32 %v337, %v369
      %v377 = vmul.f32 %v338, %v369
      %v378 = vmul.f32 %v339, %v369
      %v379 = vmul.f32 %v340, %v369
      %v380 = vmul.f32 %v341, %v369
      %v381 = vmul.f32 %v342, %v369
      %v382 = vmul.f32 %v343, %v369
      %v383 = vmul.f32 %v344, %v369
      %v384 = vmul.f32 %v345, %v369
      %v385 = vmul.f32 %v346, %v369
      %v386 = vmul.f32 %v347, %v369
      %v387 = vmul.f32 %v348, %v369
      %v388 = vmul.f32 %v349, %v369
      %v389 = vmul.f32 %v350, %v369
      %v390 = vmul.f32 %v351, %v369
      %v391 = vmul.f32 %v352, %v369
      %v392 = vmul.f32 %v353, %v369
      %v393 = vmul.f32 %v354, %v369
      %v394 = vmul.f32 %v355, %v369
      %v395 = vmul.f32 %v356, %v369
      %v396 = vmul.f32 %v357, %v369
      %v397 = vmul.f32 %v358, %v369
      %v398 = vmul.f32 %v359, %v369
      %v399 = vmul.f32 %v360, %v369
      %v400 = vmul.f32 %v361, %v369
      %v401 = vmul.f32 %v362, %v369
      %v402 = vmul.f32 %v363, %v369
      %v403 = vpack.c.bf16 %v372, %v371
      %v404 = vpack.c.bf16 %v374, %v373
      %v405 = vpack.c.bf16 %v376, %v375
      %v406 = vpack.c.bf16 %v378, %v377
      %v407 = vpack.c.bf16 %v380, %v379
      %v408 = vpack.c.bf16 %v382, %v381
      %v409 = vpack.c.bf16 %v384, %v383
      %v410 = vpack.c.bf16 %v386, %v385
      %v411 = vpack.c.bf16 %v388, %v387
      %v412 = vpack.c.bf16 %v390, %v389
      %v413 = vpack.c.bf16 %v392, %v391
      %v414 = vpack.c.bf16 %v394, %v393
      %v415 = vpack.c.bf16 %v396, %v395
      %v416 = vpack.c.bf16 %v398, %v397
      %v417 = vpack.c.bf16 %v400, %v399
      %v418 = vpack.c.bf16 %v402, %v401
      %v419 = vld [vmem:[%s3] sm:$0xf]
      %v420 = vld [vmem:[%s4] sm:$0x1]
      %v422 = vlaneseq
      %v423 = vshrl.u32 %v422, 7
      %v424 = vsub.s32 0, %v423
      %v425 = vrot.slane %v420, %v424
      %vm427 = vcmask 64512
      %v429 = vsel %vm427, %v403, 0
      %v432 = vsel %vm427, %v404, 0
      %v435 = vsel %vm427, %v405, 0
      %v438 = vsel %vm427, %v406, 0
      %v441 = vsel %vm427, %v407, 0
      %v444 = vsel %vm427, %v408, 0
      %v447 = vsel %vm427, %v409, 0
      %v450 = vsel %vm427, %v410, 0
      %v453 = vsel %vm427, %v411, 0
      %v456 = vsel %vm427, %v412, 0
      %v459 = vsel %vm427, %v413, 0
      %v462 = vsel %vm427, %v414, 0
      %v465 = vsel %vm427, %v415, 0
      %v468 = vsel %vm427, %v416, 0
      %v471 = vsel %vm427, %v417, 0
      %v474 = vsel %vm427, %v418, 0
      %vm476 = vcmask 1043456
      %v478 = vsel %vm476, %v419, 0
      %480 = vmatprep.subr.bf16.mxu0 0
      %481 = vmatpush1.bf16.msra.mxu0 %v478
      %482 = vmatprep.subr.bf16.mxu0 0
      %483 = vmatpush1.bf16.msra.mxu0 0
      %484 = vmatprep.subr.bf16.mxu0 0
      %485 = vmatpush1.bf16.msra.mxu0 0
      %486 = vmatprep.subr.bf16.mxu0 0
      %487 = vmatpush1.bf16.msra.mxu0 0
      %488 = vmatprep.subr.bf16.mxu0 0
      %489 = vmatpush1.bf16.msra.mxu0 0
      %490 = vmatprep.subr.bf16.mxu0 0
      %491 = vmatpush1.bf16.msra.mxu0 0
      %492 = vmatprep.subr.bf16.mxu0 0
      %493 = vmatpush1.bf16.msra.mxu0 0
      %494 = vmatprep.subr.bf16.mxu0 0
      %495 = vmatpush1.bf16.msra.mxu0 0
      %496 = vmatprep.subr.bf16.mxu0 0
      %497 = vmatpush1.bf16.msra.mxu0 0
      %498 = vmatprep.subr.bf16.mxu0 0
      %499 = vmatpush1.bf16.msra.mxu0 0
      %500 = vmatprep.subr.bf16.mxu0 0
      %501 = vmatpush1.bf16.msra.mxu0 0
      %502 = vmatprep.subr.bf16.mxu0 0
      %503 = vmatpush1.bf16.msra.mxu0 0
      %504 = vmatprep.subr.bf16.mxu0 0
      %505 = vmatpush1.bf16.msra.mxu0 0
      %506 = vmatprep.subr.bf16.mxu0 0
      %507 = vmatpush1.bf16.msra.mxu0 0
      %508 = vmatprep.subr.bf16.mxu0 0
      %509 = vmatpush1.bf16.msra.mxu0 0
      %510 = vmatprep.subr.bf16.mxu0 0
      %511 = vmatpush1.bf16.msra.mxu0 0
      %512 = vmatprep.mubr.bf16.mxu0 0
      %513 = vmatmul.mubr.bf16.gmra.mrb[0].mxu0 %v429
      %v514 = vpop.f32.mrb[0].mxu0
      %v515 = vadd.f32 %v425, %v514
      %v516 = vpop.f32.mrb[0].mxu0
      %v517 = vpop.f32.mrb[0].mxu0
      %v518 = vadd.f32 %v425, %v517
      %v519 = vpop.f32.mrb[0].mxu0
      %520 = vmatprep.mubr.bf16.mxu0 0
      %521 = vmatmul.mubr.bf16.gmra.mrb[0].mxu0 %v432
      %v522 = vpop.f32.mrb[0].mxu0
      %v523 = vadd.f32 %v425, %v522
      %v524 = vpop.f32.mrb[0].mxu0
      %v525 = vpop.f32.mrb[0].mxu0
      %v526 = vadd.f32 %v425, %v525
      %v527 = vpop.f32.mrb[0].mxu0
      %528 = vmatprep.mubr.bf16.mxu0 0
      %529 = vmatmul.mubr.bf16.gmra.mrb[0].mxu0 %v435
      %v530 = vpop.f32.mrb[0].mxu0
      %v531 = vadd.f32 %v425, %v530
      %v532 = vpop.f32.mrb[0].mxu0
      %v533 = vpop.f32.mrb[0].mxu0
      %v534 = vadd.f32 %v425, %v533
      %v535 = vpop.f32.mrb[0].mxu0
      %536 = vmatprep.mubr.bf16.mxu0 0
      %537 = vmatmul.mubr.bf16.gmra.mrb[0].mxu0 %v438
      %v538 = vpop.f32.mrb[0].mxu0
      %v539 = vadd.f32 %v425, %v538
      %v540 = vpop.f32.mrb[0].mxu0
      %v541 = vpop.f32.mrb[0].mxu0
      %v542 = vadd.f32 %v425, %v541
      %v543 = vpop.f32.mrb[0].mxu0
      %544 = vmatprep.mubr.bf16.mxu0 0
      %545 = vmatmul.mubr.bf16.gmra.mrb[0].mxu0 %v441
      %v546 = vpop.f32.mrb[0].mxu0
      %v547 = vadd.f32 %v425, %v546
      %v548 = vpop.f32.mrb[0].mxu0
      %v549 = vpop.f32.mrb[0].mxu0
      %v550 = vadd.f32 %v425, %v549
      %v551 = vpop.f32.mrb[0].mxu0
      %552 = vmatprep.mubr.bf16.mxu0 0
      %553 = vmatmul.mubr.bf16.gmra.mrb[0].mxu0 %v444
      %v554 = vpop.f32.mrb[0].mxu0
      %v555 = vadd.f32 %v425, %v554
      %v556 = vpop.f32.mrb[0].mxu0
      %v557 = vpop.f32.mrb[0].mxu0
      %v558 = vadd.f32 %v425, %v557
      %v559 = vpop.f32.mrb[0].mxu0
      %560 = vmatprep.mubr.bf16.mxu0 0
      %561 = vmatmul.mubr.bf16.gmra.mrb[0].mxu0 %v447
      %v562 = vpop.f32.mrb[0].mxu0
      %v563 = vadd.f32 %v425, %v562
      %v564 = vpop.f32.mrb[0].mxu0
      %v565 = vpop.f32.mrb[0].mxu0
      %v566 = vadd.f32 %v425, %v565
      %v567 = vpop.f32.mrb[0].mxu0
      %568 = vmatprep.mubr.bf16.mxu0 0
      %569 = vmatmul.mubr.bf16.gmra.mrb[0].mxu0 %v450
      %v570 = vpop.f32.mrb[0].mxu0
      %v571 = vadd.f32 %v425, %v570
      %v572 = vpop.f32.mrb[0].mxu0
      %v573 = vpop.f32.mrb[0].mxu0
      %v574 = vadd.f32 %v425, %v573
      %v575 = vpop.f32.mrb[0].mxu0
      %576 = vmatprep.mubr.bf16.mxu0 0
      %577 = vmatmul.mubr.bf16.gmra.mrb[0].mxu0 %v453
      %v578 = vpop.f32.mrb[0].mxu0
      %v579 = vadd.f32 %v425, %v578
      %v580 = vpop.f32.mrb[0].mxu0
      %v581 = vpop.f32.mrb[0].mxu0
      %v582 = vadd.f32 %v425, %v581
      %v583 = vpop.f32.mrb[0].mxu0
      %584 = vmatprep.mubr.bf16.mxu0 0
      %585 = vmatmul.mubr.bf16.gmra.mrb[0].mxu0 %v456
      %v586 = vpop.f32.mrb[0].mxu0
      %v587 = vadd.f32 %v425, %v586
      %v588 = vpop.f32.mrb[0].mxu0
      %v589 = vpop.f32.mrb[0].mxu0
      %v590 = vadd.f32 %v425, %v589
      %v591 = vpop.f32.mrb[0].mxu0
      %592 = vmatprep.mubr.bf16.mxu0 0
      %593 = vmatmul.mubr.bf16.gmra.mrb[0].mxu0 %v459
      %v594 = vpop.f32.mrb[0].mxu0
      %v595 = vadd.f32 %v425, %v594
      %v596 = vpop.f32.mrb[0].mxu0
      %v597 = vpop.f32.mrb[0].mxu0
      %v598 = vadd.f32 %v425, %v597
      %v599 = vpop.f32.mrb[0].mxu0
      %600 = vmatprep.mubr.bf16.mxu0 0
      %601 = vmatmul.mubr.bf16.gmra.mrb[0].mxu0 %v462
      %v602 = vpop.f32.mrb[0].mxu0
      %v603 = vadd.f32 %v425, %v602
      %v604 = vpop.f32.mrb[0].mxu0
      %v605 = vpop.f32.mrb[0].mxu0
      %v606 = vadd.f32 %v425, %v605
      %v607 = vpop.f32.mrb[0].mxu0
      %608 = vmatprep.mubr.bf16.mxu0 0
      %609 = vmatmul.mubr.bf16.gmra.mrb[0].mxu0 %v465
      %v610 = vpop.f32.mrb[0].mxu0
      %v611 = vadd.f32 %v425, %v610
      %v612 = vpop.f32.mrb[0].mxu0
      %v613 = vpop.f32.mrb[0].mxu0
      %v614 = vadd.f32 %v425, %v613
      %v615 = vpop.f32.mrb[0].mxu0
      %616 = vmatprep.mubr.bf16.mxu0 0
      %617 = vmatmul.mubr.bf16.gmra.mrb[0].mxu0 %v468
      %v618 = vpop.f32.mrb[0].mxu0
      %v619 = vadd.f32 %v425, %v618
      %v620 = vpop.f32.mrb[0].mxu0
      %v621 = vpop.f32.mrb[0].mxu0
      %v622 = vadd.f32 %v425, %v621
      %v623 = vpop.f32.mrb[0].mxu0
      %624 = vmatprep.mubr.bf16.mxu0 0
      %625 = vmatmul.mubr.bf16.gmra.mrb[0].mxu0 %v471
      %v626 = vpop.f32.mrb[0].mxu0
      %v627 = vadd.f32 %v425, %v626
      %v628 = vpop.f32.mrb[0].mxu0
      %v629 = vpop.f32.mrb[0].mxu0
      %v630 = vadd.f32 %v425, %v629
      %v631 = vpop.f32.mrb[0].mxu0
      %632 = vmatprep.mubr.bf16.mxu0 0
      %633 = vmatmul.mubr.bf16.gmra.mrb[0].mxu0 %v474
      %v634 = vpop.f32.mrb[0].mxu0
      %v635 = vadd.f32 %v425, %v634
      %v636 = vpop.f32.mrb[0].mxu0
      %v637 = vpop.f32.mrb[0].mxu0
      %v638 = vadd.f32 %v425, %v637
      %v639 = vpop.f32.mrb[0].mxu0
      %640 = vdwg.mxu0
      %v641 = vpack.c.bf16 %v518, %v515
      %v642 = vpack.c.bf16 %v526, %v523
      %v643 = vpack.c.bf16 %v534, %v531
      %v644 = vpack.c.bf16 %v542, %v539
      %v645 = vpack.c.bf16 %v550, %v547
      %v646 = vpack.c.bf16 %v558, %v555
      %v647 = vpack.c.bf16 %v566, %v563
      %v648 = vpack.c.bf16 %v574, %v571
      %v649 = vpack.c.bf16 %v582, %v579
      %v650 = vpack.c.bf16 %v590, %v587
      %v651 = vpack.c.bf16 %v598, %v595
      %v652 = vpack.c.bf16 %v606, %v603
      %v653 = vpack.c.bf16 %v614, %v611
      %v654 = vpack.c.bf16 %v622, %v619
      %v655 = vpack.c.bf16 %v630, %v627
      %v656 = vpack.c.bf16 %v638, %v635
      %v673 = vunpack.c.l.b16 %v641
      %v674 = vunpack.c.h.b16 %v641
      %v675 = vunpack.c.l.b16 %v642
      %v676 = vunpack.c.h.b16 %v642
      %v677 = vunpack.c.l.b16 %v643
      %v678 = vunpack.c.h.b16 %v643
      %v679 = vunpack.c.l.b16 %v644
      %v680 = vunpack.c.h.b16 %v644
      %v681 = vunpack.c.l.b16 %v645
      %v682 = vunpack.c.h.b16 %v645
      %v683 = vunpack.c.l.b16 %v646
      %v684 = vunpack.c.h.b16 %v646
      %v685 = vunpack.c.l.b16 %v647
      %v686 = vunpack.c.h.b16 %v647
      %v687 = vunpack.c.l.b16 %v648
      %v688 = vunpack.c.h.b16 %v648
      %v689 = vunpack.c.l.b16 %v649
      %v690 = vunpack.c.h.b16 %v649
      %v691 = vunpack.c.l.b16 %v650
      %v692 = vunpack.c.h.b16 %v650
      %v693 = vunpack.c.l.b16 %v651
      %v694 = vunpack.c.h.b16 %v651
      %v695 = vunpack.c.l.b16 %v652
      %v696 = vunpack.c.h.b16 %v652
      %v697 = vunpack.c.l.b16 %v653
      %v698 = vunpack.c.h.b16 %v653
      %v699 = vunpack.c.l.b16 %v654
      %v700 = vunpack.c.h.b16 %v654
      %v701 = vunpack.c.l.b16 %v655
      %v702 = vunpack.c.h.b16 %v655
      %v703 = vunpack.c.l.b16 %v656
      %v704 = vunpack.c.h.b16 %v656
      %v705 = vpack.c.b16 %v673, %v673
      %v706 = vpack.c.b16 %v674, %v674
      %v707 = vpack.c.b16 %v675, %v675
      %v708 = vpack.c.b16 %v676, %v676
      %v709 = vpack.c.b16 %v677, %v677
      %v710 = vpack.c.b16 %v678, %v678
      %v711 = vpack.c.b16 %v679, %v679
      %v712 = vpack.c.b16 %v680, %v680
      %v713 = vpack.c.b16 %v681, %v681
      %v714 = vpack.c.b16 %v682, %v682
      %v715 = vpack.c.b16 %v683, %v683
      %v716 = vpack.c.b16 %v684, %v684
      %v717 = vpack.c.b16 %v685, %v685
      %v718 = vpack.c.b16 %v686, %v686
      %v719 = vpack.c.b16 %v687, %v687
      %v720 = vpack.c.b16 %v688, %v688
      %v721 = vpack.c.b16 %v689, %v689
      %v722 = vpack.c.b16 %v690, %v690
      %v723 = vpack.c.b16 %v691, %v691
      %v724 = vpack.c.b16 %v692, %v692
      %v725 = vpack.c.b16 %v693, %v693
      %v726 = vpack.c.b16 %v694, %v694
      %v727 = vpack.c.b16 %v695, %v695
      %v728 = vpack.c.b16 %v696, %v696
      %v729 = vpack.c.b16 %v697, %v697
      %v730 = vpack.c.b16 %v698, %v698
      %v731 = vpack.c.b16 %v699, %v699
      %v732 = vpack.c.b16 %v700, %v700
      %v733 = vpack.c.b16 %v701, %v701
      %v734 = vpack.c.b16 %v702, %v702
      %v735 = vpack.c.b16 %v703, %v703
      %v736 = vpack.c.b16 %v704, %v704
      %vm769 = vcmask 191488
      %770 = vst.msk [vmem:[%s290] sm:$0xf] %vm769, %v705
      %771 = vst.msk [vmem:[%s290 + $0x4] sm:$0xf] %vm769, %v706
      %772 = vst.msk [vmem:[%s290 + $0x8] sm:$0xf] %vm769, %v707
      %773 = vst.msk [vmem:[%s290 + $0xc] sm:$0xf] %vm769, %v708
      %774 = vst.msk [vmem:[%s290 + $0x10] sm:$0xf] %vm769, %v709
      %775 = vst.msk [vmem:[%s290 + $0x14] sm:$0xf] %vm769, %v710
      %776 = vst.msk [vmem:[%s290 + $0x18] sm:$0xf] %vm769, %v711
      %777 = vst.msk [vmem:[%s290 + $0x1c] sm:$0xf] %vm769, %v712
      %778 = vst.msk [vmem:[%s290 + $0x20] sm:$0xf] %vm769, %v713
      %779 = vst.msk [vmem:[%s290 + $0x24] sm:$0xf] %vm769, %v714
      %780 = vst.msk [vmem:[%s290 + $0x28] sm:$0xf] %vm769, %v715
      %781 = vst.msk [vmem:[%s290 + $0x2c] sm:$0xf] %vm769, %v716
      %782 = vst.msk [vmem:[%s290 + $0x30] sm:$0xf] %vm769, %v717
      %783 = vst.msk [vmem:[%s290 + $0x34] sm:$0xf] %vm769, %v718
      %784 = vst.msk [vmem:[%s290 + $0x38] sm:$0xf] %vm769, %v719
      %785 = vst.msk [vmem:[%s290 + $0x3c] sm:$0xf] %vm769, %v720
      %786 = vst.msk [vmem:[%s290 + $0x40] sm:$0xf] %vm769, %v721
      %787 = vst.msk [vmem:[%s290 + $0x44] sm:$0xf] %vm769, %v722
      %788 = vst.msk [vmem:[%s290 + $0x48] sm:$0xf] %vm769, %v723
      %789 = vst.msk [vmem:[%s290 + $0x4c] sm:$0xf] %vm769, %v724
      %790 = vst.msk [vmem:[%s290 + $0x50] sm:$0xf] %vm769, %v725
      %791 = vst.msk [vmem:[%s290 + $0x54] sm:$0xf] %vm769, %v726
      %792 = vst.msk [vmem:[%s290 + $0x58] sm:$0xf] %vm769, %v727
      %793 = vst.msk [vmem:[%s290 + $0x5c] sm:$0xf] %vm769, %v728
      %794 = vst.msk [vmem:[%s290 + $0x60] sm:$0xf] %vm769, %v729
      %795 = vst.msk [vmem:[%s290 + $0x64] sm:$0xf] %vm769, %v730
      %796 = vst.msk [vmem:[%s290 + $0x68] sm:$0xf] %vm769, %v731
      %797 = vst.msk [vmem:[%s290 + $0x6c] sm:$0xf] %vm769, %v732
      %798 = vst.msk [vmem:[%s290 + $0x70] sm:$0xf] %vm769, %v733
      %799 = vst.msk [vmem:[%s290 + $0x74] sm:$0xf] %vm769, %v734
      %800 = vst.msk [vmem:[%s290 + $0x78] sm:$0xf] %vm769, %v735
      %801 = vst.msk [vmem:[%s290 + $0x7c] sm:$0xf] %vm769, %v736
      %s802 = smul.u32 32, %s21
      %p803 = scmp.lt.s32.totalorder %s20, 1
      %s804 = scalar_select %p803, %s20, 1
      %p805 = scmp.lt.s32.totalorder %s802, 31
      %s806 = scalar_select %p805, %s802, 31
      %s807 = smul.addr %s804, 32
      %s808 = sadd.s32 %s806, %s807
      %s809 = smul.addr %s808, 4
      %s810 = scalar_lea.vmem %s5, %s809
      // Predicated region
      $region41: #{transformer_block_forward.5} parent=39 // pred_check
        %p811 = pneg %p170
      $region42: #{transformer_block_forward.5} parent=39 // pred_check_branch
        %813 = sbr.rel (%p811) target = $region44
      $region43: #{transformer_block_forward.5} parent=39 // pred_region
        %s814 = smul.u32 32, %s21
      $region44: #{transformer_block_forward.5} parent=39 // pred_fallthru
        _
    $region40: #{transformer_block_forward.5} parent=5 // pred_fallthru
      _
    %p815 = scmp.le.s32.totalorder 2, %s11
    // Predicated region
    $region45: #{transformer_block_forward.5} parent=5 // pred_check
      %p816 = pneg %p815
    $region46: #{transformer_block_forward.5} parent=5 // pred_check_branch
      %818 = sbr.rel (%p816) target = $region48
    $region47: #{transformer_block_forward.5} parent=5 // pred_region
      %s819 = ssub.s32 %s11, 2
      // Predicated region
      $region49: #{transformer_block_forward.5} parent=47 // pred_check
        %p820 = pneg %p176
      $region50: #{transformer_block_forward.5} parent=47 // pred_check_branch
        %822 = sbr.rel (%p820) target = $region52
      $region51: #{transformer_block_forward.5} parent=47 // pred_region
        %s823 = smul.u32 32, %s23
        %p824 = scmp.lt.s32.totalorder %s22, 1
        %s825 = scalar_select %p824, %s22, 1
        %p826 = scmp.lt.s32.totalorder %s823, 31
        %s827 = scalar_select %p826, %s823, 31
        %s828 = smul.addr %s825, 32
        %s829 = sadd.s32 %s827, %s828
        %s830 = smul.addr %s829, 4
        %s831 = scalar_lea.vmem %s5, %s830
      $region52: #{transformer_block_forward.5} parent=47 // pred_fallthru
        _
    $region48: #{transformer_block_forward.5} parent=5 // pred_fallthru
      _
  $region6: #{transformer_block_forward.5} parent=0 // loop_footer
    %s15 = sadd.s32 1, %s11
  $region7: #{transformer_block_forward.5} parent=0 // loop_footer_branch
    %10 = sbr.rel target = $region3
  $region8: #{transformer_block_forward.5} parent=0 // loop_exit
    _

// kernel: transformer_block_forward.6
$region0: #{transformer_block_forward.6}
  #allocation0 [shape = 'u32[]', space=smem, size = 0x4, offset = 0x4, fixed_abs, tag = 'smem constant byte address 0x4 - core index']
  #allocation1 [shape = 'u32[144,128]{1,0:T(1,128)}', space=vmem, size = 0x12000, scoped, tag = 'internal scratch']
  %s0 = inlined_call_operand.vmem [shape: bf16[3,2,8,64,4], index: 0, kind: input, shape index: {}]
  %s1 = inlined_call_operand.vmem [shape: f32[2,64,64], index: 1, kind: input, shape index: {}]
  %s2 = inlined_call_operand.vmem [shape: f32[2,16,16,8], index: 2, kind: input, shape index: {}]
  %s3 = inlined_call_operand.vmem [shape: bf16[2,4,8], index: 3, kind: input, shape index: {}]
  %s4 = inlined_call_operand.vmem [shape: f32[1,8], index: 4, kind: input, shape index: {}]
  %s5 = inlined_call_operand.vmem [shape: f32[2,16,16,8], index: 5, kind: output, shape index: {}]
  %s6 = sld [smem:[#allocation0]]
  $region166: #{transformer_block_forward.6} parent=0
    _
  %s8 = ssub.s32 1, %s6
  %s9 = scalar_select 0, %s8, %s6
  $region1: #{transformer_block_forward.6} parent=0
    #allocation2 [shape = 'u8[196608]{0}', space=vmem, size = 0x30000, scoped, tag = 'input window, operand 0']
    #allocation3 [shape = 'u8[65536]{0}', space=vmem, size = 0x10000, scoped, tag = 'input window, operand 2']
    #allocation4 [shape = 'u8[65536]{0}', space=vmem, size = 0x10000, scoped, tag = 'output window, operand 0']
    loop: start=0, step=1, limit=10
    $region2: #{transformer_block_forward.6} parent=1 // loop_pre_header
      _
    $region3: #{transformer_block_forward.6} parent=1 // loop_header
      %s11 = sphi 0, %s15
      %p12 = scmp.ge.s32.totalorder %s11, 10
      %s18 = sphi 0, %s37
      %s19 = sphi 0, %s33
      %s20 = sphi 0, %s29
      %s21 = sphi 0, %s18
      %s22 = sphi 0, %s19
      %s23 = sphi 0, %s20
      %s24 = sphi 0, %s21
      %s25 = sphi 0, %s22
      %s26 = sphi 0, %s23
      %s48 = sphi 0, %s50
      %s51 = sphi 0, %s48
      %s52 = sphi 0, %s51
      %s68 = sphi 0, %s52
      %s72 = sphi 0, %s72
      %s74 = sphi 0, %s72
      %s75 = sphi 0, %s74
      %s89 = sphi 0, %s75
      %s99 = sphi 0, %s101
      %s102 = sphi 0, %s99
      %s103 = sphi 0, %s102
      %s119 = sphi 0, %s103
      %s123 = sphi 0, %s123
      %s125 = sphi 0, %s123
      %s126 = sphi 0, %s125
      %s140 = sphi 0, %s126
      %s144 = sphi 0, %s144
      %s146 = sphi 0, %s144
      %s147 = sphi 0, %s146
      %s161 = sphi 0, %s147
      %s171 = sphi 0, %s173
      %s174 = sphi 0, %s171
      %s175 = sphi 0, %s174
      %s191 = sphi 0, %s175
    $region4: #{transformer_block_forward.6} parent=1 // loop_header_branch
      %14 = sbr.rel (%p12) target = $region8
    $region5: #{transformer_block_forward.6} parent=1 // loop_body
      %s16 = ssub.s32 %s11, 1
      %s17 = ssub.s32 %s11, 2
      %s27 = sadd.s32 1, %s20
      %p28 = scmp.ge.s32.totalorder %s27, 2
      %s29 = scalar_select %p28, 0, %s27
      %s30 = sadd.s32 1, %s19
      %s31 = scalar_select %p28, %s30, %s19
      %p32 = scmp.ge.s32.totalorder %s31, 2
      %s33 = scalar_select %p32, 0, %s31
      %s34 = sadd.s32 1, %s18
      %s35 = scalar_select %p32, %s34, %s18
      %p36 = scmp.ge.s32.totalorder %s35, 2
      %s37 = scalar_select %p36, 0, %s35
      %s38 = smul.u32 %s18, 4
      %s39 = smul.u32 %s19, 2
      %s40 = sadd.s32 %s38, %s39
      %s41 = sadd.s32 %s40, %s20
      %s42 = smul.u32 %s37, 4
      %s43 = smul.u32 %s33, 2
      %s44 = sadd.s32 %s42, %s43
      %s45 = sadd.s32 %s44, %s29
      %s46 = ssub.s32 %s41, %s45
      %p47 = scmp.eq.s32.totalorder %s46, 0
      %s49 = sadd.s32 %s48, 1
      %s50 = scalar_select %p47, %s48, %s49
      %p53 = pneg %p47
      %p54 = scmp.eq.s32.totalorder %s11, 7
      %p55 = por %p53, %p54
      %p56 = scmp.ne.s32.totalorder %s48, %s51
      %p57 = scmp.eq.s32.totalorder %s11, 0
      %p58 = por %p56, %p57
      %p59 = scmp.ne.s32.totalorder %s48, %s51
      %p60 = scmp.eq.s32.totalorder %s16, 7
      %p61 = por %p59, %p60
      %p62 = scmp.ne.s32.totalorder %s51, %s52
      %p63 = scmp.eq.s32.totalorder %s16, 0
      %p64 = por %p62, %p63
      %p65 = scmp.ne.s32.totalorder %s51, %s52
      %p66 = scmp.eq.s32.totalorder %s17, 7
      %p67 = por %p65, %p66
      %p69 = scmp.ne.s32.totalorder %s52, %s68
      %p70 = scmp.eq.s32.totalorder %s17, 0
      %p71 = por %p69, %p70
      %s73 = sadd.s32 %s72, 1
      %p76 = scmp.eq.s32.totalorder %s11, 7
      %p77 = scmp.ne.s32.totalorder %s72, %s74
      %p78 = scmp.eq.s32.totalorder %s11, 0
      %p79 = por %p77, %p78
      %p80 = scmp.ne.s32.totalorder %s72, %s74
      %p81 = scmp.eq.s32.totalorder %s16, 7
      %p82 = por %p80, %p81
      %p83 = scmp.ne.s32.totalorder %s74, %s75
      %p84 = scmp.eq.s32.totalorder %s16, 0
      %p85 = por %p83, %p84
      %p86 = scmp.ne.s32.totalorder %s74, %s75
      %p87 = scmp.eq.s32.totalorder %s17, 7
      %p88 = por %p86, %p87
      %p90 = scmp.ne.s32.totalorder %s75, %s89
      %p91 = scmp.eq.s32.totalorder %s17, 0
      %p92 = por %p90, %p91
      %s93 = ssub.s32 %s18, %s37
      %s94 = ssub.s32 %s19, %s33
      %s95 = sor.u32 %s93, %s94
      %s96 = ssub.s32 %s20, %s29
      %s97 = sor.u32 %s95, %s96
      %p98 = scmp.eq.s32.totalorder %s97, 0
      %s100 = sadd.s32 %s99, 1
      %s101 = scalar_select %p98, %s99, %s100
      %p104 = pneg %p98
      %p105 = scmp.eq.s32.totalorder %s11, 7
      %p106 = por %p104, %p105
      %p107 = scmp.ne.s32.totalorder %s99, %s102
      %p108 = scmp.eq.s32.totalorder %s11, 0
      %p109 = por %p107, %p108
      %p110 = scmp.ne.s32.totalorder %s99, %s102
      %p111 = scmp.eq.s32.totalorder %s16, 7
      %p112 = por %p110, %p111
      %p113 = scmp.ne.s32.totalorder %s102, %s103
      %p114 = scmp.eq.s32.totalorder %s16, 0
      %p115 = por %p113, %p114
      %p116 = scmp.ne.s32.totalorder %s102, %s103
      %p117 = scmp.eq.s32.totalorder %s17, 7
      %p118 = por %p116, %p117
      %p120 = scmp.ne.s32.totalorder %s103, %s119
      %p121 = scmp.eq.s32.totalorder %s17, 0
      %p122 = por %p120, %p121
      %s124 = sadd.s32 %s123, 1
      %p127 = scmp.eq.s32.totalorder %s11, 7
      %p128 = scmp.ne.s32.totalorder %s123, %s125
      %p129 = scmp.eq.s32.totalorder %s11, 0
      %p130 = por %p128, %p129
      %p131 = scmp.ne.s32.totalorder %s123, %s125
      %p132 = scmp.eq.s32.totalorder %s16, 7
      %p133 = por %p131, %p132
      %p134 = scmp.ne.s32.totalorder %s125, %s126
      %p135 = scmp.eq.s32.totalorder %s16, 0
      %p136 = por %p134, %p135
      %p137 = scmp.ne.s32.totalorder %s125, %s126
      %p138 = scmp.eq.s32.totalorder %s17, 7
      %p139 = por %p137, %p138
      %p141 = scmp.ne.s32.totalorder %s126, %s140
      %p142 = scmp.eq.s32.totalorder %s17, 0
      %p143 = por %p141, %p142
      %s145 = sadd.s32 %s144, 1
      %p148 = scmp.eq.s32.totalorder %s11, 7
      %p149 = scmp.ne.s32.totalorder %s144, %s146
      %p150 = scmp.eq.s32.totalorder %s11, 0
      %p151 = por %p149, %p150
      %p152 = scmp.ne.s32.totalorder %s144, %s146
      %p153 = scmp.eq.s32.totalorder %s16, 7
      %p154 = por %p152, %p153
      %p155 = scmp.ne.s32.totalorder %s146, %s147
      %p156 = scmp.eq.s32.totalorder %s16, 0
      %p157 = por %p155, %p156
      %p158 = scmp.ne.s32.totalorder %s146, %s147
      %p159 = scmp.eq.s32.totalorder %s17, 7
      %p160 = por %p158, %p159
      %p162 = scmp.ne.s32.totalorder %s147, %s161
      %p163 = scmp.eq.s32.totalorder %s17, 0
      %p164 = por %p162, %p163
      %s165 = ssub.s32 %s18, %s37
      %s166 = ssub.s32 %s19, %s33
      %s167 = sor.u32 %s165, %s166
      %s168 = ssub.s32 %s20, %s29
      %s169 = sor.u32 %s167, %s168
      %p170 = scmp.eq.s32.totalorder %s169, 0
      %s172 = sadd.s32 %s171, 1
      %s173 = scalar_select %p170, %s171, %s172
      %p176 = pneg %p170
      %p177 = scmp.eq.s32.totalorder %s11, 7
      %p178 = por %p176, %p177
      %p179 = scmp.ne.s32.totalorder %s171, %s174
      %p180 = scmp.eq.s32.totalorder %s11, 0
      %p181 = por %p179, %p180
      %p182 = scmp.ne.s32.totalorder %s171, %s174
      %p183 = scmp.eq.s32.totalorder %s16, 7
      %p184 = por %p182, %p183
      %p185 = scmp.ne.s32.totalorder %s174, %s175
      %p186 = scmp.eq.s32.totalorder %s16, 0
      %p187 = por %p185, %p186
      %p188 = scmp.ne.s32.totalorder %s174, %s175
      %p189 = scmp.eq.s32.totalorder %s17, 7
      %p190 = por %p188, %p189
      %p192 = scmp.ne.s32.totalorder %s175, %s191
      %p193 = scmp.eq.s32.totalorder %s17, 0
      %p194 = por %p192, %p193
      %p195 = scmp.le.s32.totalorder 1, %s11
      %p196 = scmp.lt.s32.totalorder %s11, 9
      %p197 = pnand %p195, %p196
      %p198 = pneg %p197
      // Predicated region
      $region9: #{transformer_block_forward.6} parent=5 // pred_check
        _
      $region10: #{transformer_block_forward.6} parent=5 // pred_check_branch
        %200 = sbr.rel (%p197) target = $region12
      $region11: #{transformer_block_forward.6} parent=5 // pred_region
        %s201 = ssub.s32 %s11, 1
        // Predicated region
        $region13: #{transformer_block_forward.6} parent=11 // pred_check
          %p202 = pneg %p85
        $region14: #{transformer_block_forward.6} parent=11 // pred_check_branch
          %204 = sbr.rel (%p202) target = $region16
        $region15: #{transformer_block_forward.6} parent=11 // pred_region
          _
        $region16: #{transformer_block_forward.6} parent=11 // pred_fallthru
          _
        // Predicated region
        $region17: #{transformer_block_forward.6} parent=11 // pred_check
          %p205 = pneg %p136
        $region18: #{transformer_block_forward.6} parent=11 // pred_check_branch
          %207 = sbr.rel (%p205) target = $region20
        $region19: #{transformer_block_forward.6} parent=11 // pred_region
          _
        $region20: #{transformer_block_forward.6} parent=11 // pred_fallthru
          _
        // Predicated region
        $region21: #{transformer_block_forward.6} parent=11 // pred_check
          %p208 = pneg %p157
        $region22: #{transformer_block_forward.6} parent=11 // pred_check_branch
          %210 = sbr.rel (%p208) target = $region24
        $region23: #{transformer_block_forward.6} parent=11 // pred_region
          _
        $region24: #{transformer_block_forward.6} parent=11 // pred_fallthru
          _
      $region12: #{transformer_block_forward.6} parent=5 // pred_fallthru
        _
      %p211 = scmp.lt.s32.totalorder %s11, 8
      // Predicated region
      $region25: #{transformer_block_forward.6} parent=5 // pred_check
        %p212 = pneg %p211
      $region26: #{transformer_block_forward.6} parent=5 // pred_check_branch
        %214 = sbr.rel (%p212) target = $region28
      $region27: #{transformer_block_forward.6} parent=5 // pred_region
        // Predicated region
        $region29: #{transformer_block_forward.6} parent=27 // pred_check
          %p215 = pneg %p58
        $region30: #{transformer_block_forward.6} parent=27 // pred_check_branch
          %217 = sbr.rel (%p215) target = $region32
        $region31: #{transformer_block_forward.6} parent=27 // pred_region
          %s218 = sand.u32 %s48, 1
          %s219 = sand.u32 %s48, 1
          %s220 = smul.addr %s219, 192
          %s221 = scalar_lea.vmem [#allocation2], %s220
          %s222 = smul.u32 %s18, 4
          %s223 = smul.u32 %s19, 2
          %s224 = sadd.s32 %s222, %s223
          %s225 = sadd.s32 %s224, %s20
          %s226 = smul.addr %s225, 8
          %s227 = smul.addr %s226, 4
          %s228 = scalar_lea.vmem %s0, %s227
          // Predicated region
          $region33: #{transformer_block_forward.6} parent=31 // pred_check
            _
          $region34: #{transformer_block_forward.6} parent=31 // pred_check_branch
            %230 = sbr.rel (0) target = $region36
          $region35: #{transformer_block_forward.6} parent=31 // pred_region
            // Predicated region
            $region37: #{transformer_block_forward.6} parent=35 // pred_check
              _
            $region38: #{transformer_block_forward.6} parent=35 // pred_check_branch
              %232 = sbr.rel target = $region40
            $region39: #{transformer_block_forward.6} parent=35 // pred_region
              // Predicated region
              $region52: #{transformer_block_forward.6} parent=39 // pred_check
                _
              $region53: #{transformer_block_forward.6} parent=39 // pred_check_branch
                %341 = sbr.rel (0) target = $region55
              $region54: #{transformer_block_forward.6} parent=39 // pred_region
                loop: start=0, step=1, limit=1
                $region56: #{transformer_block_forward.6} parent=54 // loop_pre_header
                  _
                $region57: #{transformer_block_forward.6} parent=54 // loop_header
                  %s343 = sphi 0, %s347
                  %p344 = scmp.ge.s32.totalorder %s343, 1
                  %s348 = sphi %s228, %s228
                  %s349 = sphi %s221, %s221
                $region58: #{transformer_block_forward.6} parent=54 // loop_header_branch
                  %346 = sbr.rel (%p344) target = $region62
                $region59: #{transformer_block_forward.6} parent=54 // loop_body
                  _
                $region60: #{transformer_block_forward.6} parent=54 // loop_footer
                  %s347 = sadd.s32 1, %s343
                $region61: #{transformer_block_forward.6} parent=54 // loop_footer_branch
                  %342 = sbr.rel target = $region57
                $region62: #{transformer_block_forward.6} parent=54 // loop_exit
                  _
                loop: start=0, step=1, limit=1
                $region63: #{transformer_block_forward.6} parent=54 // loop_pre_header
                  _
                $region64: #{transformer_block_forward.6} parent=54 // loop_header
                  %s352 = sphi 0, %s356
                  %p353 = scmp.ge.s32.totalorder %s352, 1
                  %s357 = sphi %s228, %s228
                  %s358 = sphi %s221, %s221
                $region65: #{transformer_block_forward.6} parent=54 // loop_header_branch
                  %355 = sbr.rel (%p353) target = $region69
                $region66: #{transformer_block_forward.6} parent=54 // loop_body
                  %v359 = vld [vmem:[%s357] sm:$0xf]
                  %360 = vst [vmem:[%s358] sm:$0xf] %v359
                  %v361 = vld [vmem:[%s357 + $0x4] sm:$0xf]
                  %362 = vst [vmem:[%s358 + $0x4] sm:$0xf] %v361
                  %v363 = vld [vmem:[%s357 + $0x8] sm:$0xf]
                  %364 = vst [vmem:[%s358 + $0x8] sm:$0xf] %v363
                  %v365 = vld [vmem:[%s357 + $0xc] sm:$0xf]
                  %366 = vst [vmem:[%s358 + $0xc] sm:$0xf] %v365
                  %v367 = vld [vmem:[%s357 + $0x10] sm:$0xf]
                  %368 = vst [vmem:[%s358 + $0x10] sm:$0xf] %v367
                  %v369 = vld [vmem:[%s357 + $0x14] sm:$0xf]
                  %370 = vst [vmem:[%s358 + $0x14] sm:$0xf] %v369
                  %v371 = vld [vmem:[%s357 + $0x18] sm:$0xf]
                  %372 = vst [vmem:[%s358 + $0x18] sm:$0xf] %v371
                  %v373 = vld [vmem:[%s357 + $0x1c] sm:$0xf]
                  %374 = vst [vmem:[%s358 + $0x1c] sm:$0xf] %v373
                  %v375 = vld [vmem:[%s357 + $0x100] sm:$0xf]
                  %376 = vst [vmem:[%s358 + $0x20] sm:$0xf] %v375
                  %v377 = vld [vmem:[%s357 + $0x104] sm:$0xf]
                  %378 = vst [vmem:[%s358 + $0x24] sm:$0xf] %v377
                  %v379 = vld [vmem:[%s357 + $0x108] sm:$0xf]
                  %380 = vst [vmem:[%s358 + $0x28] sm:$0xf] %v379
                  %v381 = vld [vmem:[%s357 + $0x10c] sm:$0xf]
                  %382 = vst [vmem:[%s358 + $0x2c] sm:$0xf] %v381
                  %v383 = vld [vmem:[%s357 + $0x110] sm:$0xf]
                  %384 = vst [vmem:[%s358 + $0x30] sm:$0xf] %v383
                  %v385 = vld [vmem:[%s357 + $0x114] sm:$0xf]
                  %386 = vst [vmem:[%s358 + $0x34] sm:$0xf] %v385
                  %v387 = vld [vmem:[%s357 + $0x118] sm:$0xf]
                  %388 = vst [vmem:[%s358 + $0x38] sm:$0xf] %v387
                  %v389 = vld [vmem:[%s357 + $0x11c] sm:$0xf]
                  %390 = vst [vmem:[%s358 + $0x3c] sm:$0xf] %v389
                  %v391 = vld [vmem:[%s357 + $0x200] sm:$0xf]
                  %392 = vst [vmem:[%s358 + $0x40] sm:$0xf] %v391
                  %v393 = vld [vmem:[%s357 + $0x204] sm:$0xf]
                  %394 = vst [vmem:[%s358 + $0x44] sm:$0xf] %v393
                  %v395 = vld [vmem:[%s357 + $0x208] sm:$0xf]
                  %396 = vst [vmem:[%s358 + $0x48] sm:$0xf] %v395
                  %v397 = vld [vmem:[%s357 + $0x20c] sm:$0xf]
                  %398 = vst [vmem:[%s358 + $0x4c] sm:$0xf] %v397
                  %v399 = vld [vmem:[%s357 + $0x210] sm:$0xf]
                  %400 = vst [vmem:[%s358 + $0x50] sm:$0xf] %v399
                  %v401 = vld [vmem:[%s357 + $0x214] sm:$0xf]
                  %402 = vst [vmem:[%s358 + $0x54] sm:$0xf] %v401
                  %v403 = vld [vmem:[%s357 + $0x218] sm:$0xf]
                  %404 = vst [vmem:[%s358 + $0x58] sm:$0xf] %v403
                  %v405 = vld [vmem:[%s357 + $0x21c] sm:$0xf]
                  %406 = vst [vmem:[%s358 + $0x5c] sm:$0xf] %v405
                  %v407 = vld [vmem:[%s357 + $0x300] sm:$0xf]
                  %408 = vst [vmem:[%s358 + $0x60] sm:$0xf] %v407
                  %v409 = vld [vmem:[%s357 + $0x304] sm:$0xf]
                  %410 = vst [vmem:[%s358 + $0x64] sm:$0xf] %v409
                  %v411 = vld [vmem:[%s357 + $0x308] sm:$0xf]
                  %412 = vst [vmem:[%s358 + $0x68] sm:$0xf] %v411
                  %v413 = vld [vmem:[%s357 + $0x30c] sm:$0xf]
                  %414 = vst [vmem:[%s358 + $0x6c] sm:$0xf] %v413
                  %v415 = vld [vmem:[%s357 + $0x310] sm:$0xf]
                  %416 = vst [vmem:[%s358 + $0x70] sm:$0xf] %v415
                  %v417 = vld [vmem:[%s357 + $0x314] sm:$0xf]
                  %418 = vst [vmem:[%s358 + $0x74] sm:$0xf] %v417
                  %v419 = vld [vmem:[%s357 + $0x318] sm:$0xf]
                  %420 = vst [vmem:[%s358 + $0x78] sm:$0xf] %v419
                  %v421 = vld [vmem:[%s357 + $0x31c] sm:$0xf]
                  %422 = vst [vmem:[%s358 + $0x7c] sm:$0xf] %v421
                  %v423 = vld [vmem:[%s357 + $0x400] sm:$0xf]
                  %424 = vst [vmem:[%s358 + $0x80] sm:$0xf] %v423
                  %v425 = vld [vmem:[%s357 + $0x404] sm:$0xf]
                  %426 = vst [vmem:[%s358 + $0x84] sm:$0xf] %v425
                  %v427 = vld [vmem:[%s357 + $0x408] sm:$0xf]
                  %428 = vst [vmem:[%s358 + $0x88] sm:$0xf] %v427
                  %v429 = vld [vmem:[%s357 + $0x40c] sm:$0xf]
                  %430 = vst [vmem:[%s358 + $0x8c] sm:$0xf] %v429
                  %v431 = vld [vmem:[%s357 + $0x410] sm:$0xf]
                  %432 = vst [vmem:[%s358 + $0x90] sm:$0xf] %v431
                  %v433 = vld [vmem:[%s357 + $0x414] sm:$0xf]
                  %434 = vst [vmem:[%s358 + $0x94] sm:$0xf] %v433
                  %v435 = vld [vmem:[%s357 + $0x418] sm:$0xf]
                  %436 = vst [vmem:[%s358 + $0x98] sm:$0xf] %v435
                  %v437 = vld [vmem:[%s357 + $0x41c] sm:$0xf]
                  %438 = vst [vmem:[%s358 + $0x9c] sm:$0xf] %v437
                  %v439 = vld [vmem:[%s357 + $0x500] sm:$0xf]
                  %440 = vst [vmem:[%s358 + $0xa0] sm:$0xf] %v439
                  %v441 = vld [vmem:[%s357 + $0x504] sm:$0xf]
                  %442 = vst [vmem:[%s358 + $0xa4] sm:$0xf] %v441
                  %v443 = vld [vmem:[%s357 + $0x508] sm:$0xf]
                  %444 = vst [vmem:[%s358 + $0xa8] sm:$0xf] %v443
                  %v445 = vld [vmem:[%s357 + $0x50c] sm:$0xf]
                  %446 = vst [vmem:[%s358 + $0xac] sm:$0xf] %v445
                  %v447 = vld [vmem:[%s357 + $0x510] sm:$0xf]
                  %448 = vst [vmem:[%s358 + $0xb0] sm:$0xf] %v447
                  %v449 = vld [vmem:[%s357 + $0x514] sm:$0xf]
                  %450 = vst [vmem:[%s358 + $0xb4] sm:$0xf] %v449
                  %v451 = vld [vmem:[%s357 + $0x518] sm:$0xf]
                  %452 = vst [vmem:[%s358 + $0xb8] sm:$0xf] %v451
                  %v453 = vld [vmem:[%s357 + $0x51c] sm:$0xf]
                  %454 = vst [vmem:[%s358 + $0xbc] sm:$0xf] %v453
                $region67: #{transformer_block_forward.6} parent=54 // loop_footer
                  %s356 = sadd.s32 1, %s352
                $region68: #{transformer_block_forward.6} parent=54 // loop_footer_branch
                  %351 = sbr.rel target = $region64
                $region69: #{transformer_block_forward.6} parent=54 // loop_exit
                  _
              $region55: #{transformer_block_forward.6} parent=39 // pred_fallthru
                _
            $region40: #{transformer_block_forward.6} parent=35 // pred_fallthru
              _
            // Predicated region
            $region41: #{transformer_block_forward.6} parent=35 // pred_check
              _
            $region42: #{transformer_block_forward.6} parent=35 // pred_check_branch
              %234 = sbr.rel (0) target = $region44
            $region43: #{transformer_block_forward.6} parent=35 // pred_region
              loop: start=0, step=1, limit=1
              $region45: #{transformer_block_forward.6} parent=43 // loop_pre_header
                _
              $region46: #{transformer_block_forward.6} parent=43 // loop_header
                %s237 = sphi 0, %s241
                %p238 = scmp.ge.s32.totalorder %s237, 1
                %s242 = sphi %s228, %s228
                %s243 = sphi %s221, %s221
              $region47: #{transformer_block_forward.6} parent=43 // loop_header_branch
                %240 = sbr.rel (%p238) target = $region51
              $region48: #{transformer_block_forward.6} parent=43 // loop_body
                %v244 = vld [vmem:[%s242] sm:$0xf]
                %245 = vst [vmem:[%s243] sm:$0xf] %v244
                %v246 = vld [vmem:[%s242 + $0x4] sm:$0xf]
                %247 = vst [vmem:[%s243 + $0x4] sm:$0xf] %v246
                %v248 = vld [vmem:[%s242 + $0x8] sm:$0xf]
                %249 = vst [vmem:[%s243 + $0x8] sm:$0xf] %v248
                %v250 = vld [vmem:[%s242 + $0xc] sm:$0xf]
                %251 = vst [vmem:[%s243 + $0xc] sm:$0xf] %v250
                %v252 = vld [vmem:[%s242 + $0x10] sm:$0xf]
                %253 = vst [vmem:[%s243 + $0x10] sm:$0xf] %v252
                %v254 = vld [vmem:[%s242 + $0x14] sm:$0xf]
                %255 = vst [vmem:[%s243 + $0x14] sm:$0xf] %v254
                %v256 = vld [vmem:[%s242 + $0x18] sm:$0xf]
                %257 = vst [vmem:[%s243 + $0x18] sm:$0xf] %v256
                %v258 = vld [vmem:[%s242 + $0x1c] sm:$0xf]
                %259 = vst [vmem:[%s243 + $0x1c] sm:$0xf] %v258
                %v260 = vld [vmem:[%s242 + $0x100] sm:$0xf]
                %261 = vst [vmem:[%s243 + $0x20] sm:$0xf] %v260
                %v262 = vld [vmem:[%s242 + $0x104] sm:$0xf]
                %263 = vst [vmem:[%s243 + $0x24] sm:$0xf] %v262
                %v264 = vld [vmem:[%s242 + $0x108] sm:$0xf]
                %265 = vst [vmem:[%s243 + $0x28] sm:$0xf] %v264
                %v266 = vld [vmem:[%s242 + $0x10c] sm:$0xf]
                %267 = vst [vmem:[%s243 + $0x2c] sm:$0xf] %v266
                %v268 = vld [vmem:[%s242 + $0x110] sm:$0xf]
                %269 = vst [vmem:[%s243 + $0x30] sm:$0xf] %v268
                %v270 = vld [vmem:[%s242 + $0x114] sm:$0xf]
                %271 = vst [vmem:[%s243 + $0x34] sm:$0xf] %v270
                %v272 = vld [vmem:[%s242 + $0x118] sm:$0xf]
                %273 = vst [vmem:[%s243 + $0x38] sm:$0xf] %v272
                %v274 = vld [vmem:[%s242 + $0x11c] sm:$0xf]
                %275 = vst [vmem:[%s243 + $0x3c] sm:$0xf] %v274
                %v276 = vld [vmem:[%s242 + $0x200] sm:$0xf]
                %277 = vst [vmem:[%s243 + $0x40] sm:$0xf] %v276
                %v278 = vld [vmem:[%s242 + $0x204] sm:$0xf]
                %279 = vst [vmem:[%s243 + $0x44] sm:$0xf] %v278
                %v280 = vld [vmem:[%s242 + $0x208] sm:$0xf]
                %281 = vst [vmem:[%s243 + $0x48] sm:$0xf] %v280
                %v282 = vld [vmem:[%s242 + $0x20c] sm:$0xf]
                %283 = vst [vmem:[%s243 + $0x4c] sm:$0xf] %v282
                %v284 = vld [vmem:[%s242 + $0x210] sm:$0xf]
                %285 = vst [vmem:[%s243 + $0x50] sm:$0xf] %v284
                %v286 = vld [vmem:[%s242 + $0x214] sm:$0xf]
                %287 = vst [vmem:[%s243 + $0x54] sm:$0xf] %v286
                %v288 = vld [vmem:[%s242 + $0x218] sm:$0xf]
                %289 = vst [vmem:[%s243 + $0x58] sm:$0xf] %v288
                %v290 = vld [vmem:[%s242 + $0x21c] sm:$0xf]
                %291 = vst [vmem:[%s243 + $0x5c] sm:$0xf] %v290
                %v292 = vld [vmem:[%s242 + $0x300] sm:$0xf]
                %293 = vst [vmem:[%s243 + $0x60] sm:$0xf] %v292
                %v294 = vld [vmem:[%s242 + $0x304] sm:$0xf]
                %295 = vst [vmem:[%s243 + $0x64] sm:$0xf] %v294
                %v296 = vld [vmem:[%s242 + $0x308] sm:$0xf]
                %297 = vst [vmem:[%s243 + $0x68] sm:$0xf] %v296
                %v298 = vld [vmem:[%s242 + $0x30c] sm:$0xf]
                %299 = vst [vmem:[%s243 + $0x6c] sm:$0xf] %v298
                %v300 = vld [vmem:[%s242 + $0x310] sm:$0xf]
                %301 = vst [vmem:[%s243 + $0x70] sm:$0xf] %v300
                %v302 = vld [vmem:[%s242 + $0x314] sm:$0xf]
                %303 = vst [vmem:[%s243 + $0x74] sm:$0xf] %v302
                %v304 = vld [vmem:[%s242 + $0x318] sm:$0xf]
                %305 = vst [vmem:[%s243 + $0x78] sm:$0xf] %v304
                %v306 = vld [vmem:[%s242 + $0x31c] sm:$0xf]
                %307 = vst [vmem:[%s243 + $0x7c] sm:$0xf] %v306
                %v308 = vld [vmem:[%s242 + $0x400] sm:$0xf]
                %309 = vst [vmem:[%s243 + $0x80] sm:$0xf] %v308
                %v310 = vld [vmem:[%s242 + $0x404] sm:$0xf]
                %311 = vst [vmem:[%s243 + $0x84] sm:$0xf] %v310
                %v312 = vld [vmem:[%s242 + $0x408] sm:$0xf]
                %313 = vst [vmem:[%s243 + $0x88] sm:$0xf] %v312
                %v314 = vld [vmem:[%s242 + $0x40c] sm:$0xf]
                %315 = vst [vmem:[%s243 + $0x8c] sm:$0xf] %v314
                %v316 = vld [vmem:[%s242 + $0x410] sm:$0xf]
                %317 = vst [vmem:[%s243 + $0x90] sm:$0xf] %v316
                %v318 = vld [vmem:[%s242 + $0x414] sm:$0xf]
                %319 = vst [vmem:[%s243 + $0x94] sm:$0xf] %v318
                %v320 = vld [vmem:[%s242 + $0x418] sm:$0xf]
                %321 = vst [vmem:[%s243 + $0x98] sm:$0xf] %v320
                %v322 = vld [vmem:[%s242 + $0x41c] sm:$0xf]
                %323 = vst [vmem:[%s243 + $0x9c] sm:$0xf] %v322
                %v324 = vld [vmem:[%s242 + $0x500] sm:$0xf]
                %325 = vst [vmem:[%s243 + $0xa0] sm:$0xf] %v324
                %v326 = vld [vmem:[%s242 + $0x504] sm:$0xf]
                %327 = vst [vmem:[%s243 + $0xa4] sm:$0xf] %v326
                %v328 = vld [vmem:[%s242 + $0x508] sm:$0xf]
                %329 = vst [vmem:[%s243 + $0xa8] sm:$0xf] %v328
                %v330 = vld [vmem:[%s242 + $0x50c] sm:$0xf]
                %331 = vst [vmem:[%s243 + $0xac] sm:$0xf] %v330
                %v332 = vld [vmem:[%s242 + $0x510] sm:$0xf]
                %333 = vst [vmem:[%s243 + $0xb0] sm:$0xf] %v332
                %v334 = vld [vmem:[%s242 + $0x514] sm:$0xf]
                %335 = vst [vmem:[%s243 + $0xb4] sm:$0xf] %v334
                %v336 = vld [vmem:[%s242 + $0x518] sm:$0xf]
                %337 = vst [vmem:[%s243 + $0xb8] sm:$0xf] %v336
                %v338 = vld [vmem:[%s242 + $0x51c] sm:$0xf]
                %339 = vst [vmem:[%s243 + $0xbc] sm:$0xf] %v338
              $region49: #{transformer_block_forward.6} parent=43 // loop_footer
                %s241 = sadd.s32 1, %s237
              $region50: #{transformer_block_forward.6} parent=43 // loop_footer_branch
                %236 = sbr.rel target = $region46
              $region51: #{transformer_block_forward.6} parent=43 // loop_exit
                _
            $region44: #{transformer_block_forward.6} parent=35 // pred_fallthru
              _
          $region36: #{transformer_block_forward.6} parent=31 // pred_fallthru
            _
          %455 = vnop
        $region32: #{transformer_block_forward.6} parent=27 // pred_fallthru
          _
        // Predicated region
        $region70: #{transformer_block_forward.6} parent=27 // pred_check
          %p456 = pneg %p109
        $region71: #{transformer_block_forward.6} parent=27 // pred_check_branch
          %458 = sbr.rel (%p456) target = $region73
        $region72: #{transformer_block_forward.6} parent=27 // pred_region
          %s459 = sand.u32 %s99, 1
          %s460 = sand.u32 %s99, 1
          %s461 = smul.addr %s460, 64
          %s462 = scalar_lea.vmem [#allocation3], %s461
          %s463 = smul.u32 8, %s19
          %s464 = smul.addr %s463, 2
          %s465 = sadd.s32 %s20, %s464
          %s466 = smul.addr %s18, 32
          %s467 = sadd.s32 %s465, %s466
          %s468 = smul.addr %s467, 8
          %s469 = scalar_lea.vmem %s2, %s468
          // Predicated region
          $region74: #{transformer_block_forward.6} parent=72 // pred_check
            _
          $region75: #{transformer_block_forward.6} parent=72 // pred_check_branch
            %471 = sbr.rel (0) target = $region77
          $region76: #{transformer_block_forward.6} parent=72 // pred_region
            // Predicated region
            $region78: #{transformer_block_forward.6} parent=76 // pred_check
              _
            $region79: #{transformer_block_forward.6} parent=76 // pred_check_branch
              %473 = sbr.rel (0) target = $region81
            $region80: #{transformer_block_forward.6} parent=76 // pred_region
              // Predicated region
              $region93: #{transformer_block_forward.6} parent=80 // pred_check
                _
              $region94: #{transformer_block_forward.6} parent=80 // pred_check_branch
                %502 = sbr.rel (0) target = $region96
              $region95: #{transformer_block_forward.6} parent=80 // pred_region
                loop: start=0, step=1, limit=1
                $region97: #{transformer_block_forward.6} parent=95 // loop_pre_header
                  _
                $region98: #{transformer_block_forward.6} parent=95 // loop_header
                  %s504 = sphi 0, %s508
                  %p505 = scmp.ge.s32.totalorder %s504, 1
                  %s509 = sphi %s469, %s469
                  %s510 = sphi %s462, %s462
                $region99: #{transformer_block_forward.6} parent=95 // loop_header_branch
                  %507 = sbr.rel (%p505) target = $region103
                $region100: #{transformer_block_forward.6} parent=95 // loop_body
                  %v511 = vld [vmem:[%s509] sm:$0xff]
                  %512 = vst [vmem:[%s510] sm:$0xff] %v511
                  %v513 = vld [vmem:[%s509 + $0x10] sm:$0xff]
                  %514 = vst [vmem:[%s510 + $0x8] sm:$0xff] %v513
                  %v515 = vld [vmem:[%s509 + $0x20] sm:$0xff]
                  %516 = vst [vmem:[%s510 + $0x10] sm:$0xff] %v515
                  %v517 = vld [vmem:[%s509 + $0x30] sm:$0xff]
                  %518 = vst [vmem:[%s510 + $0x18] sm:$0xff] %v517
                  %v519 = vld [vmem:[%s509 + $0x40] sm:$0xff]
                  %520 = vst [vmem:[%s510 + $0x20] sm:$0xff] %v519
                  %v521 = vld [vmem:[%s509 + $0x50] sm:$0xff]
                  %522 = vst [vmem:[%s510 + $0x28] sm:$0xff] %v521
                  %v523 = vld [vmem:[%s509 + $0x60] sm:$0xff]
                  %524 = vst [vmem:[%s510 + $0x30] sm:$0xff] %v523
                  %v525 = vld [vmem:[%s509 + $0x70] sm:$0xff]
                  %526 = vst [vmem:[%s510 + $0x38] sm:$0xff] %v525
                $region101: #{transformer_block_forward.6} parent=95 // loop_footer
                  %s508 = sadd.s32 1, %s504
                $region102: #{transformer_block_forward.6} parent=95 // loop_footer_branch
                  %503 = sbr.rel target = $region98
                $region103: #{transformer_block_forward.6} parent=95 // loop_exit
                  _
              $region96: #{transformer_block_forward.6} parent=80 // pred_fallthru
                _
              // Predicated region
              $region104: #{transformer_block_forward.6} parent=80 // pred_check
                _
              $region105: #{transformer_block_forward.6} parent=80 // pred_check_branch
                %528 = sbr.rel target = $region107
              $region106: #{transformer_block_forward.6} parent=80 // pred_region
                _
              $region107: #{transformer_block_forward.6} parent=80 // pred_fallthru
                _
            $region81: #{transformer_block_forward.6} parent=76 // pred_fallthru
              _
            // Predicated region
            $region82: #{transformer_block_forward.6} parent=76 // pred_check
              _
            $region83: #{transformer_block_forward.6} parent=76 // pred_check_branch
              %475 = sbr.rel target = $region85
            $region84: #{transformer_block_forward.6} parent=76 // pred_region
              loop: start=0, step=1, limit=1
              $region86: #{transformer_block_forward.6} parent=84 // loop_pre_header
                _
              $region87: #{transformer_block_forward.6} parent=84 // loop_header
                %s478 = sphi 0, %s482
                %p479 = scmp.ge.s32.totalorder %s478, 1
                %s483 = sphi %s469, %s469
                %s484 = sphi %s462, %s462
              $region88: #{transformer_block_forward.6} parent=84 // loop_header_branch
                %481 = sbr.rel (%p479) target = $region92
              $region89: #{transformer_block_forward.6} parent=84 // loop_body
                %v485 = vld [vmem:[%s483] sm:$0xff]
                %486 = vst [vmem:[%s484] sm:$0xff] %v485
                %v487 = vld [vmem:[%s483 + $0x10] sm:$0xff]
                %488 = vst [vmem:[%s484 + $0x8] sm:$0xff] %v487
                %v489 = vld [vmem:[%s483 + $0x20] sm:$0xff]
                %490 = vst [vmem:[%s484 + $0x10] sm:$0xff] %v489
                %v491 = vld [vmem:[%s483 + $0x30] sm:$0xff]
                %492 = vst [vmem:[%s484 + $0x18] sm:$0xff] %v491
                %v493 = vld [vmem:[%s483 + $0x40] sm:$0xff]
                %494 = vst [vmem:[%s484 + $0x20] sm:$0xff] %v493
                %v495 = vld [vmem:[%s483 + $0x50] sm:$0xff]
                %496 = vst [vmem:[%s484 + $0x28] sm:$0xff] %v495
                %v497 = vld [vmem:[%s483 + $0x60] sm:$0xff]
                %498 = vst [vmem:[%s484 + $0x30] sm:$0xff] %v497
                %v499 = vld [vmem:[%s483 + $0x70] sm:$0xff]
                %500 = vst [vmem:[%s484 + $0x38] sm:$0xff] %v499
              $region90: #{transformer_block_forward.6} parent=84 // loop_footer
                %s482 = sadd.s32 1, %s478
              $region91: #{transformer_block_forward.6} parent=84 // loop_footer_branch
                %477 = sbr.rel target = $region87
              $region92: #{transformer_block_forward.6} parent=84 // loop_exit
                _
            $region85: #{transformer_block_forward.6} parent=76 // pred_fallthru
              _
          $region77: #{transformer_block_forward.6} parent=72 // pred_fallthru
            _
          %529 = vnop
        $region73: #{transformer_block_forward.6} parent=27 // pred_fallthru
          _
      $region28: #{transformer_block_forward.6} parent=5 // pred_fallthru
        _
      %p530 = scmp.le.s32.totalorder 1, %s11
      %p531 = scmp.lt.s32.totalorder %s11, 9
      %p532 = pnand %p530, %p531
      %p533 = pneg %p532
      // Predicated region
      $region108: #{transformer_block_forward.6} parent=5 // pred_check
        _
      $region109: #{transformer_block_forward.6} parent=5 // pred_check_branch
        %535 = sbr.rel (%p532) target = $region111
      $region110: #{transformer_block_forward.6} parent=5 // pred_region
        %s536 = ssub.s32 %s11, 1
        %s537 = sand.u32 %s51, 1
        %s538 = sand.u32 %s51, 1
        %s539 = smul.addr %s538, 192
        %s540 = scalar_lea.vmem [#allocation2], %s539
        // Predicated region
        $region112: #{transformer_block_forward.6} parent=110 // pred_check
          %p541 = pneg %p64
        $region113: #{transformer_block_forward.6} parent=110 // pred_check_branch
          %543 = sbr.rel (%p541) target = $region115
        $region114: #{transformer_block_forward.6} parent=110 // pred_region
          _
        $region115: #{transformer_block_forward.6} parent=110 // pred_fallthru
          _
        %s544 = sand.u32 %s102, 1
        %s545 = sand.u32 %s102, 1
        %s546 = smul.addr %s545, 64
        %s547 = scalar_lea.vmem [#allocation3], %s546
        // Predicated region
        $region116: #{transformer_block_forward.6} parent=110 // pred_check
          %p548 = pneg %p115
        $region117: #{transformer_block_forward.6} parent=110 // pred_check_branch
          %550 = sbr.rel (%p548) target = $region119
        $region118: #{transformer_block_forward.6} parent=110 // pred_region
          _
        $region119: #{transformer_block_forward.6} parent=110 // pred_fallthru
          _
        %s551 = sand.u32 %s51, 1
        %s552 = sand.u32 %s51, 1
        %s553 = smul.addr %s552, 192
        %s554 = scalar_lea.vmem [#allocation2], %s553
        %p555 = pneg %p64
        %p556 = pneg %p61
        %p557 = pneg %p85
        %p558 = pneg %p82
        %s559 = sand.u32 %s102, 1
        %s560 = sand.u32 %s102, 1
        %s561 = smul.addr %s560, 64
        %s562 = scalar_lea.vmem [#allocation3], %s561
        %p563 = pneg %p115
        %p564 = pneg %p112
        %p565 = pneg %p136
        %p566 = pneg %p133
        %p567 = pneg %p157
        %p568 = pneg %p154
        %p569 = pneg %p187
        %p570 = pneg %p184
        %s571 = sand.u32 %s174, 1
        %s572 = sand.u32 %s174, 1
        %s573 = smul.addr %s572, 64
        %s574 = scalar_lea.vmem [#allocation4], %s573
        %s575 = smul.u32 %s21, 4
        %s576 = smul.u32 %s22, 2
        %s577 = sadd.s32 %s575, %s576
        %s578 = sadd.s32 %s577, %s23
        %s579 = smul.u32 8, %s22
        %s580 = smul.u32 8, %s22
        %v582 = vld [vmem:[%s540] sm:$0xf]
        %v583 = vld [vmem:[%s540 + $0x4] sm:$0xf]
        %v584 = vld [vmem:[%s540 + $0x8] sm:$0xf]
        %v585 = vld [vmem:[%s540 + $0xc] sm:$0xf]
        %v586 = vld [vmem:[%s540 + $0x10] sm:$0xf]
        %v587 = vld [vmem:[%s540 + $0x14] sm:$0xf]
        %v588 = vld [vmem:[%s540 + $0x18] sm:$0xf]
        %v589 = vld [vmem:[%s540 + $0x1c] sm:$0xf]
        %v590 = vld [vmem:[%s540 + $0x20] sm:$0xf]
        %v591 = vld [vmem:[%s540 + $0x24] sm:$0xf]
        %v592 = vld [vmem:[%s540 + $0x28] sm:$0xf]
        %v593 = vld [vmem:[%s540 + $0x2c] sm:$0xf]
        %v594 = vld [vmem:[%s540 + $0x30] sm:$0xf]
        %v595 = vld [vmem:[%s540 + $0x34] sm:$0xf]
        %v596 = vld [vmem:[%s540 + $0x38] sm:$0xf]
        %v597 = vld [vmem:[%s540 + $0x3c] sm:$0xf]
        %v598 = vld [vmem:[%s540 + $0x40] sm:$0xf]
        %v599 = vld [vmem:[%s540 + $0x44] sm:$0xf]
        %v600 = vld [vmem:[%s540 + $0x48] sm:$0xf]
        %v601 = vld [vmem:[%s540 + $0x4c] sm:$0xf]
        %v602 = vld [vmem:[%s540 + $0x50] sm:$0xf]
        %v603 = vld [vmem:[%s540 + $0x54] sm:$0xf]
        %v604 = vld [vmem:[%s540 + $0x58] sm:$0xf]
        %v605 = vld [vmem:[%s540 + $0x5c] sm:$0xf]
        %v606 = vld [vmem:[%s540 + $0x60] sm:$0xf]
        %v607 = vld [vmem:[%s540 + $0x64] sm:$0xf]
        %v608 = vld [vmem:[%s540 + $0x68] sm:$0xf]
        %v609 = vld [vmem:[%s540 + $0x6c] sm:$0xf]
        %v610 = vld [vmem:[%s540 + $0x70] sm:$0xf]
        %v611 = vld [vmem:[%s540 + $0x74] sm:$0xf]
        %v612 = vld [vmem:[%s540 + $0x78] sm:$0xf]
        %v613 = vld [vmem:[%s540 + $0x7c] sm:$0xf]
        %v614 = vld [vmem:[%s540 + $0x80] sm:$0xf]
        %v615 = vld [vmem:[%s540 + $0x84] sm:$0xf]
        %v616 = vld [vmem:[%s540 + $0x88] sm:$0xf]
        %v617 = vld [vmem:[%s540 + $0x8c] sm:$0xf]
        %v618 = vld [vmem:[%s540 + $0x90] sm:$0xf]
        %v619 = vld [vmem:[%s540 + $0x94] sm:$0xf]
        %v620 = vld [vmem:[%s540 + $0x98] sm:$0xf]
        %v621 = vld [vmem:[%s540 + $0x9c] sm:$0xf]
        %v622 = vld [vmem:[%s540 + $0xa0] sm:$0xf]
        %v623 = vld [vmem:[%s540 + $0xa4] sm:$0xf]
        %v624 = vld [vmem:[%s540 + $0xa8] sm:$0xf]
        %v625 = vld [vmem:[%s540 + $0xac] sm:$0xf]
        %v626 = vld [vmem:[%s540 + $0xb0] sm:$0xf]
        %v627 = vld [vmem:[%s540 + $0xb4] sm:$0xf]
        %v628 = vld [vmem:[%s540 + $0xb8] sm:$0xf]
        %v629 = vld [vmem:[%s540 + $0xbc] sm:$0xf]
        %v630 = vld [vmem:[%s1] sm:$0xff]
        %v631 = vld [vmem:[%s1 + $0x8] sm:$0xff]
        %v632 = vld [vmem:[%s1 + $0x10] sm:$0xff]
        %v633 = vld [vmem:[%s1 + $0x18] sm:$0xff]
        %v634 = vld [vmem:[%s1 + $0x20] sm:$0xff]
        %v635 = vld [vmem:[%s1 + $0x28] sm:$0xff]
        %v636 = vld [vmem:[%s1 + $0x30] sm:$0xff]
        %v637 = vld [vmem:[%s1 + $0x38] sm:$0xff]
        %v638 = vld [vmem:[%s1 + $0x40] sm:$0xff]
        %v639 = vld [vmem:[%s1 + $0x48] sm:$0xff]
        %v640 = vld [vmem:[%s1 + $0x50] sm:$0xff]
        %v641 = vld [vmem:[%s1 + $0x58] sm:$0xff]
        %v642 = vld [vmem:[%s1 + $0x60] sm:$0xff]
        %v643 = vld [vmem:[%s1 + $0x68] sm:$0xff]
        %v644 = vld [vmem:[%s1 + $0x70] sm:$0xff]
        %v645 = vld [vmem:[%s1 + $0x78] sm:$0xff]
        %v654 = vunpack.c.l.b16 %v582
        %v655 = vunpack.c.l.b16 %v583
        %v656 = vunpack.c.l.b16 %v584
        %v657 = vunpack.c.l.b16 %v585
        %v658 = vunpack.c.l.b16 %v586
        %v659 = vunpack.c.l.b16 %v587
        %v660 = vunpack.c.l.b16 %v588
        %v661 = vunpack.c.l.b16 %v589
        %v662 = vpack.c.b16 %v655, %v654
        %v663 = vpack.c.b16 %v657, %v656
        %v664 = vpack.c.b16 %v659, %v658
        %v665 = vpack.c.b16 %v661, %v660
        %v674 = vunpack.c.l.b16 %v598
        %v675 = vunpack.c.l.b16 %v599
        %v676 = vunpack.c.l.b16 %v600
        %v677 = vunpack.c.l.b16 %v601
        %v678 = vunpack.c.l.b16 %v602
        %v679 = vunpack.c.l.b16 %v603
        %v680 = vunpack.c.l.b16 %v604
        %v681 = vunpack.c.l.b16 %v605
        %v682 = vpack.c.b16 %v675, %v674
        %v683 = vpack.c.b16 %v677, %v676
        %v684 = vpack.c.b16 %v679, %v678
        %v685 = vpack.c.b16 %v681, %v680
        %vm686 = vcmask 31744
        %v688 = vsel %vm686, %v662, 0
        %v691 = vsel %vm686, %v663, 0
        %v694 = vsel %vm686, %v664, 0
        %v697 = vsel %vm686, %v665, 0
        %v700 = vsel %vm686, %v682, 0
        %v703 = vsel %vm686, %v683, 0
        %v706 = vsel %vm686, %v684, 0
        %v709 = vsel %vm686, %v685, 0
        %711 = vmatprep.subr.bf16.mxu0 0
        %712 = vmatpush1.bf16.xpose.msra.mxu0 %v700
        %713 = vmatprep.subr.bf16.mxu0 0
        %714 = vmatpush1.bf16.xpose.msra.mxu0 %v703
        %715 = vmatprep.subr.bf16.mxu0 0
        %716 = vmatpush1.bf16.xpose.msra.mxu0 %v706
        %717 = vmatprep.subr.bf16.mxu0 0
        %718 = vmatpush1.bf16.xpose.msra.mxu0 %v709
        %719 = vmatprep.subr.bf16.mxu0 0
        %720 = vmatpush1.bf16.xpose.msra.mxu0 0
        %721 = vmatprep.subr.bf16.mxu0 0
        %722 = vmatpush1.bf16.xpose.msra.mxu0 0
        %723 = vmatprep.subr.bf16.mxu0 0
        %724 = vmatpush1.bf16.xpose.msra.mxu0 0
        %725 = vmatprep.subr.bf16.mxu0 0
        %726 = vmatpush1.bf16.xpose.msra.mxu0 0
        %727 = vmatprep.subr.bf16.mxu0 0
        %728 = vmatpush1.bf16.xpose.msra.mxu0 0
        %729 = vmatprep.subr.bf16.mxu0 0
        %730 = vmatpush1.bf16.xpose.msra.mxu0 0
        %731 = vmatprep.subr.bf16.mxu0 0
        %732 = vmatpush1.bf16.xpose.msra.mxu0 0
        %733 = vmatprep.subr.bf16.mxu0 0
        %734 = vmatpush1.bf16.xpose.msra.mxu0 0
        %735 = vmatprep.subr.bf16.mxu0 0
        %736 = vmatpush1.bf16.xpose.msra.mxu0 0
        %737 = vmatprep.subr.bf16.mxu0 0
        %738 = vmatpush1.bf16.xpose.msra.mxu0 0
        %739 = vmatprep.subr.bf16.mxu0 0
        %740 = vmatpush1.bf16.xpose.msra.mxu0 0
        %741 = vmatprep.subr.bf16.mxu0 0
        %742 = vmatpush1.bf16.xpose.msra.mxu0 0
        %743 = vmatprep.mubr.bf16.mxu0 0
        %744 = vmatmul.mubr.bf16.gmra.mrb[0].mxu0 %v688
        %v745 = vpop.f32.mrb[0].mxu0
        %v746 = vadd.f32 %v630, %v745
        %v747 = vpop.f32.mrb[0].mxu0
        %v748 = vpop.f32.mrb[0].mxu0
        %v749 = vadd.f32 %v631, %v748
        %v750 = vpop.f32.mrb[0].mxu0
        %751 = vmatprep.mubr.bf16.mxu0 0
        %752 = vmatmul.mubr.bf16.gmra.mrb[0].mxu0 %v691
        %v753 = vpop.f32.mrb[0].mxu0
        %v754 = vadd.f32 %v632, %v753
        %v755 = vpop.f32.mrb[0].mxu0
        %v756 = vpop.f32.mrb[0].mxu0
        %v757 = vadd.f32 %v633, %v756
        %v758 = vpop.f32.mrb[0].mxu0
        %759 = vmatprep.mubr.bf16.mxu0 0
        %760 = vmatmul.mubr.bf16.gmra.mrb[0].mxu0 %v694
        %v761 = vpop.f32.mrb[0].mxu0
        %v762 = vadd.f32 %v634, %v761
        %v763 = vpop.f32.mrb[0].mxu0
        %v764 = vpop.f32.mrb[0].mxu0
        %v765 = vadd.f32 %v635, %v764
        %v766 = vpop.f32.mrb[0].mxu0
        %767 = vmatprep.mubr.bf16.mxu0 0
        %768 = vmatmul.mubr.bf16.gmra.mrb[0].mxu0 %v697
        %v769 = vpop.f32.mrb[0].mxu0
        %v770 = vadd.f32 %v636, %v769
        %v771 = vpop.f32.mrb[0].mxu0
        %v772 = vpop.f32.mrb[0].mxu0
        %v773 = vadd.f32 %v637, %v772
        %v774 = vpop.f32.mrb[0].mxu0
        %775 = vdwg.mxu0
        %v784 = vunpack.c.l.b16 %v590
        %v785 = vunpack.c.l.b16 %v591
        %v786 = vunpack.c.l.b16 %v592
        %v787 = vunpack.c.l.b16 %v593
        %v788 = vunpack.c.l.b16 %v594
        %v789 = vunpack.c.l.b16 %v595
        %v790 = vunpack.c.l.b16 %v596
        %v791 = vunpack.c.l.b16 %v597
        %v792 = vpack.c.b16 %v785, %v784
        %v793 = vpack.c.b16 %v787, %v786
        %v794 = vpack.c.b16 %v789, %v788
        %v795 = vpack.c.b16 %v791, %v790
        %v804 = vunpack.c.l.b16 %v606
        %v805 = vunpack.c.l.b16 %v607
        %v806 = vunpack.c.l.b16 %v608
        %v807 = vunpack.c.l.b16 %v609
        %v808 = vunpack.c.l.b16 %v610
        %v809 = vunpack.c.l.b16 %v611
        %v810 = vunpack.c.l.b16 %v612
        %v811 = vunpack.c.l.b16 %v613
        %v812 = vpack.c.b16 %v805, %v804
        %v813 = vpack.c.b16 %v807, %v806
        %v814 = vpack.c.b16 %v809, %v808
        %v815 = vpack.c.b16 %v811, %v810
        %v817 = vsel %vm686, %v792, 0
        %v820 = vsel %vm686, %v793, 0
        %v823 = vsel %vm686, %v794, 0
        %v826 = vsel %vm686, %v795, 0
        %v829 = vsel %vm686, %v812, 0
        %v832 = vsel %vm686, %v813, 0
        %v835 = vsel %vm686, %v814, 0
        %v838 = vsel %vm686, %v815, 0
        %840 = vmatprep.subr.bf16.mxu0 0
        %841 = vmatpush1.bf16.xpose.msra.mxu0 %v829
        %842 = vmatprep.subr.bf16.mxu0 0
        %843 = vmatpush1.bf16.xpose.msra.mxu0 %v832
        %844 = vmatprep.subr.bf16.mxu0 0
        %845 = vmatpush1.bf16.xpose.msra.mxu0 %v835
        %846 = vmatprep.subr.bf16.mxu0 0
        %847 = vmatpush1.bf16.xpose.msra.mxu0 %v838
        %848 = vmatprep.subr.bf16.mxu0 0
        %849 = vmatpush1.bf16.xpose.msra.mxu0 0
        %850 = vmatprep.subr.bf16.mxu0 0
        %851 = vmatpush1.bf16.xpose.msra.mxu0 0
        %852 = vmatprep.subr.bf16.mxu0 0
        %853 = vmatpush1.bf16.xpose.msra.mxu0 0
        %854 = vmatprep.subr.bf16.mxu0 0
        %855 = vmatpush1.bf16.xpose.msra.mxu0 0
        %856 = vmatprep.subr.bf16.mxu0 0
        %857 = vmatpush1.bf16.xpose.msra.mxu0 0
        %858 = vmatprep.subr.bf16.mxu0 0
        %859 = vmatpush1.bf16.xpose.msra.mxu0 0
        %860 = vmatprep.subr.bf16.mxu0 0
        %861 = vmatpush1.bf16.xpose.msra.mxu0 0
        %862 = vmatprep.subr.bf16.mxu0 0
        %863 = vmatpush1.bf16.xpose.msra.mxu0 0
        %864 = vmatprep.subr.bf16.mxu0 0
        %865 = vmatpush1.bf16.xpose.msra.mxu0 0
        %866 = vmatprep.subr.bf16.mxu0 0
        %867 = vmatpush1.bf16.xpose.msra.mxu0 0
        %868 = vmatprep.subr.bf16.mxu0 0
        %869 = vmatpush1.bf16.xpose.msra.mxu0 0
        %870 = vmatprep.subr.bf16.mxu0 0
        %871 = vmatpush1.bf16.xpose.msra.mxu0 0
        %872 = vmatprep.mubr.bf16.mxu0 0
        %873 = vmatmul.mubr.bf16.gmra.mrb[0].mxu0 %v817
        %v874 = vpop.f32.mrb[0].mxu0
        %v875 = vadd.f32 %v638, %v874
        %v876 = vpop.f32.mrb[0].mxu0
        %v877 = vpop.f32.mrb[0].mxu0
        %v878 = vadd.f32 %v639, %v877
        %v879 = vpop.f32.mrb[0].mxu0
        %880 = vmatprep.mubr.bf16.mxu0 0
        %881 = vmatmul.mubr.bf16.gmra.mrb[0].mxu0 %v820
        %v882 = vpop.f32.mrb[0].mxu0
        %v883 = vadd.f32 %v640, %v882
        %v884 = vpop.f32.mrb[0].mxu0
        %v885 = vpop.f32.mrb[0].mxu0
        %v886 = vadd.f32 %v641, %v885
        %v887 = vpop.f32.mrb[0].mxu0
        %888 = vmatprep.mubr.bf16.mxu0 0
        %889 = vmatmul.mubr.bf16.gmra.mrb[0].mxu0 %v823
        %v890 = vpop.f32.mrb[0].mxu0
        %v891 = vadd.f32 %v642, %v890
        %v892 = vpop.f32.mrb[0].mxu0
        %v893 = vpop.f32.mrb[0].mxu0
        %v894 = vadd.f32 %v643, %v893
        %v895 = vpop.f32.mrb[0].mxu0
        %896 = vmatprep.mubr.bf16.mxu0 0
        %897 = vmatmul.mubr.bf16.gmra.mrb[0].mxu0 %v826
        %v898 = vpop.f32.mrb[0].mxu0
        %v899 = vadd.f32 %v644, %v898
        %v900 = vpop.f32.mrb[0].mxu0
        %v901 = vpop.f32.mrb[0].mxu0
        %v902 = vadd.f32 %v645, %v901
        %v903 = vpop.f32.mrb[0].mxu0
        %904 = vdwg.mxu0
        %vm905 = vcmask 523264
        %v906 = vsel %vm905, %v746, -inf
        %907 = vmax.xlane.f32.xlu0 %v906
        %v908 = vpop.xlane.xlu0 %907
        %v909 = vsel %vm905, %v749, -inf
        %910 = vmax.xlane.f32.xlu0 %v909
        %v911 = vpop.xlane.xlu0 %910
        %v912 = vsel %vm905, %v754, -inf
        %913 = vmax.xlane.f32.xlu0 %v912
        %v914 = vpop.xlane.xlu0 %913
        %v915 = vsel %vm905, %v757, -inf
        %916 = vmax.xlane.f32.xlu0 %v915
        %v917 = vpop.xlane.xlu0 %916
        %v918 = vsel %vm905, %v762, -inf
        %919 = vmax.xlane.f32.xlu0 %v918
        %v920 = vpop.xlane.xlu0 %919
        %v921 = vsel %vm905, %v765, -inf
        %922 = vmax.xlane.f32.xlu0 %v921
        %v923 = vpop.xlane.xlu0 %922
        %v924 = vsel %vm905, %v770, -inf
        %925 = vmax.xlane.f32.xlu0 %v924
        %v926 = vpop.xlane.xlu0 %925
        %v927 = vsel %vm905, %v773, -inf
        %928 = vmax.xlane.f32.xlu0 %v927
        %v929 = vpop.xlane.xlu0 %928
        %v930 = vsel %vm905, %v875, -inf
        %931 = vmax.xlane.f32.xlu0 %v930
        %v932 = vpop.xlane.xlu0 %931
        %v933 = vsel %vm905, %v878, -inf
        %934 = vmax.xlane.f32.xlu0 %v933
        %v935 = vpop.xlane.xlu0 %934
        %v936 = vsel %vm905, %v883, -inf
        %937 = vmax.xlane.f32.xlu0 %v936
        %v938 = vpop.xlane.xlu0 %937
        %v939 = vsel %vm905, %v886, -inf
        %940 = vmax.xlane.f32.xlu0 %v939
        %v941 = vpop.xlane.xlu0 %940
        %v942 = vsel %vm905, %v891, -inf
        %943 = vmax.xlane.f32.xlu0 %v942
        %v944 = vpop.xlane.xlu0 %943
        %v945 = vsel %vm905, %v894, -inf
        %946 = vmax.xlane.f32.xlu0 %v945
        %v947 = vpop.xlane.xlu0 %946
        %v948 = vsel %vm905, %v899, -inf
        %949 = vmax.xlane.f32.xlu0 %v948
        %v950 = vpop.xlane.xlu0 %949
        %v951 = vsel %vm905, %v902, -inf
        %952 = vmax.xlane.f32.xlu0 %v951
        %v953 = vpop.xlane.xlu0 %952
        %v954 = vsub.f32 %v746, %v908
        %v955 = vsub.f32 %v749, %v911
        %v956 = vsub.f32 %v754, %v914
        %v957 = vsub.f32 %v757, %v917
        %v958 = vsub.f32 %v762, %v920
        %v959 = vsub.f32 %v765, %v923
        %v960 = vsub.f32 %v770, %v926
        %v961 = vsub.f32 %v773, %v929
        %v962 = vsub.f32 %v875, %v932
        %v963 = vsub.f32 %v878, %v935
        %v964 = vsub.f32 %v883, %v938
        %v965 = vsub.f32 %v886, %v941
        %v966 = vsub.f32 %v891, %v944
        %v967 = vsub.f32 %v894, %v947
        %v968 = vsub.f32 %v899, %v950
        %v969 = vsub.f32 %v902, %v953
        %v970 = vmul.f32 %v954, 1.442695
        %v971 = vpow.pop %v970
        %v972 = vmul.f32 %v955, 1.442695
        %v973 = vpow.pop %v972
        %v974 = vmul.f32 %v956, 1.442695
        %v975 = vpow.pop %v974
        %v976 = vmul.f32 %v957, 1.442695
        %v977 = vpow.pop %v976
        %v978 = vmul.f32 %v958, 1.442695
        %v979 = vpow.pop %v978
        %v980 = vmul.f32 %v959, 1.442695
        %v981 = vpow.pop %v980
        %v982 = vmul.f32 %v960, 1.442695
        %v983 = vpow.pop %v982
        %v984 = vmul.f32 %v961, 1.442695
        %v985 = vpow.pop %v984
        %v986 = vmul.f32 %v962, 1.442695
        %v987 = vpow.pop %v986
        %v988 = vmul.f32 %v963, 1.442695
        %v989 = vpow.pop %v988
        %v990 = vmul.f32 %v964, 1.442695
        %v991 = vpow.pop %v990
        %v992 = vmul.f32 %v965, 1.442695
        %v993 = vpow.pop %v992
        %v994 = vmul.f32 %v966, 1.442695
        %v995 = vpow.pop %v994
        %v996 = vmul.f32 %v967, 1.442695
        %v997 = vpow.pop %v996
        %v998 = vmul.f32 %v968, 1.442695
        %v999 = vpow.pop %v998
        %v1000 = vmul.f32 %v969, 1.442695
        %v1001 = vpow.pop %v1000
        %v1002 = vsel %vm905, %v971, 0.0
        %1003 = vadd.xlane.f32.xlu0 %v1002
        %v1004 = vpop.xlane.xlu0 %1003
        %v1005 = vsel %vm905, %v973, 0.0
        %1006 = vadd.xlane.f32.xlu0 %v1005
        %v1007 = vpop.xlane.xlu0 %1006
        %v1008 = vsel %vm905, %v975, 0.0
        %1009 = vadd.xlane.f32.xlu0 %v1008
        %v1010 = vpop.xlane.xlu0 %1009
        %v1011 = vsel %vm905, %v977, 0.0
        %1012 = vadd.xlane.f32.xlu0 %v1011
        %v1013 = vpop.xlane.xlu0 %1012
        %v1014 = vsel %vm905, %v979, 0.0
        %1015 = vadd.xlane.f32.xlu0 %v1014
        %v1016 = vpop.xlane.xlu0 %1015
        %v1017 = vsel %vm905, %v981, 0.0
        %1018 = vadd.xlane.f32.xlu0 %v1017
        %v1019 = vpop.xlane.xlu0 %1018
        %v1020 = vsel %vm905, %v983, 0.0
        %1021 = vadd.xlane.f32.xlu0 %v1020
        %v1022 = vpop.xlane.xlu0 %1021
        %v1023 = vsel %vm905, %v985, 0.0
        %1024 = vadd.xlane.f32.xlu0 %v1023
        %v1025 = vpop.xlane.xlu0 %1024
        %v1026 = vsel %vm905, %v987, 0.0
        %1027 = vadd.xlane.f32.xlu0 %v1026
        %v1028 = vpop.xlane.xlu0 %1027
        %v1029 = vsel %vm905, %v989, 0.0
        %1030 = vadd.xlane.f32.xlu0 %v1029
        %v1031 = vpop.xlane.xlu0 %1030
        %v1032 = vsel %vm905, %v991, 0.0
        %1033 = vadd.xlane.f32.xlu0 %v1032
        %v1034 = vpop.xlane.xlu0 %1033
        %v1035 = vsel %vm905, %v993, 0.0
        %1036 = vadd.xlane.f32.xlu0 %v1035
        %v1037 = vpop.xlane.xlu0 %1036
        %v1038 = vsel %vm905, %v995, 0.0
        %1039 = vadd.xlane.f32.xlu0 %v1038
        %v1040 = vpop.xlane.xlu0 %1039
        %v1041 = vsel %vm905, %v997, 0.0
        %1042 = vadd.xlane.f32.xlu0 %v1041
        %v1043 = vpop.xlane.xlu0 %1042
        %v1044 = vsel %vm905, %v999, 0.0
        %1045 = vadd.xlane.f32.xlu0 %v1044
        %v1046 = vpop.xlane.xlu0 %1045
        %v1047 = vsel %vm905, %v1001, 0.0
        %1048 = vadd.xlane.f32.xlu0 %v1047
        %v1049 = vpop.xlane.xlu0 %1048
        %v1050 = vrcp.pop %v1004
        %v1051 = vrcp.pop %v1007
        %v1052 = vrcp.pop %v1010
        %v1053 = vrcp.pop %v1013
        %v1054 = vrcp.pop %v1016
        %v1055 = vrcp.pop %v1019
        %v1056 = vrcp.pop %v1022
        %v1057 = vrcp.pop %v1025
        %v1058 = vrcp.pop %v1028
        %v1059 = vrcp.pop %v1031
        %v1060 = vrcp.pop %v1034
        %v1061 = vrcp.pop %v1037
        %v1062 = vrcp.pop %v1040
        %v1063 = vrcp.pop %v1043
        %v1064 = vrcp.pop %v1046
        %v1065 = vrcp.pop %v1049
        %v1066 = vmul.f32 %v971, %v1050
        %v1067 = vmul.f32 %v973, %v1051
        %v1068 = vmul.f32 %v975, %v1052
        %v1069 = vmul.f32 %v977, %v1053
        %v1070 = vmul.f32 %v979, %v1054
        %v1071 = vmul.f32 %v981, %v1055
        %v1072 = vmul.f32 %v983, %v1056
        %v1073 = vmul.f32 %v985, %v1057
        %v1074 = vmul.f32 %v987, %v1058
        %v1075 = vmul.f32 %v989, %v1059
        %v1076 = vmul.f32 %v991, %v1060
        %v1077 = vmul.f32 %v993, %v1061
        %v1078 = vmul.f32 %v995, %v1062
        %v1079 = vmul.f32 %v997, %v1063
        %v1080 = vmul.f32 %v999, %v1064
        %v1081 = vmul.f32 %v1001, %v1065
        %v1082 = vpack.c.bf16 %v1067, %v1066
        %v1083 = vpack.c.bf16 %v1069, %v1068
        %v1084 = vpack.c.bf16 %v1071, %v1070
        %v1085 = vpack.c.bf16 %v1073, %v1072
        %v1086 = vpack.c.bf16 %v1075, %v1074
        %v1087 = vpack.c.bf16 %v1077, %v1076
        %v1088 = vpack.c.bf16 %v1079, %v1078
        %v1089 = vpack.c.bf16 %v1081, %v1080
        %v1098 = vunpack.c.l.b16 %v614
        %v1099 = vunpack.c.l.b16 %v615
        %v1100 = vunpack.c.l.b16 %v616
        %v1101 = vunpack.c.l.b16 %v617
        %v1102 = vunpack.c.l.b16 %v618
        %v1103 = vunpack.c.l.b16 %v619
        %v1104 = vunpack.c.l.b16 %v620
        %v1105 = vunpack.c.l.b16 %v621
        %v1106 = vpack.c.b16 %v1099, %v1098
        %v1107 = vpack.c.b16 %v1101, %v1100
        %v1108 = vpack.c.b16 %v1103, %v1102
        %v1109 = vpack.c.b16 %v1105, %v1104
        %v1115 = vsel %vm905, %v1082, 0
        %v1118 = vsel %vm905, %v1083, 0
        %v1121 = vsel %vm905, %v1084, 0
        %v1124 = vsel %vm905, %v1085, 0
        %1126 = vmatprep.subr.bf16.mxu0 0
        %1127 = vmatpush1.bf16.msra.mxu0 %v1106
        %1128 = vmatprep.subr.bf16.mxu0 0
        %1129 = vmatpush1.bf16.msra.mxu0 %v1107
        %1130 = vmatprep.subr.bf16.mxu0 0
        %1131 = vmatpush1.bf16.msra.mxu0 %v1108
        %1132 = vmatprep.subr.bf16.mxu0 0
        %1133 = vmatpush1.bf16.msra.mxu0 %v1109
        %1134 = vmatprep.subr.bf16.mxu0 0
        %1135 = vmatpush1.bf16.msra.mxu0 0
        %1136 = vmatprep.subr.bf16.mxu0 0
        %1137 = vmatpush1.bf16.msra.mxu0 0
        %1138 = vmatprep.subr.bf16.mxu0 0
        %1139 = vmatpush1.bf16.msra.mxu0 0
        %1140 = vmatprep.subr.bf16.mxu0 0
        %1141 = vmatpush1.bf16.msra.mxu0 0
        %1142 = vmatprep.subr.bf16.mxu0 0
        %1143 = vmatpush1.bf16.msra.mxu0 0
        %1144 = vmatprep.subr.bf16.mxu0 0
        %1145 = vmatpush1.bf16.msra.mxu0 0
        %1146 = vmatprep.subr.bf16.mxu0 0
        %1147 = vmatpush1.bf16.msra.mxu0 0
        %1148 = vmatprep.subr.bf16.mxu0 0
        %1149 = vmatpush1.bf16.msra.mxu0 0
        %1150 = vmatprep.subr.bf16.mxu0 0
        %1151 = vmatpush1.bf16.msra.mxu0 0
        %1152 = vmatprep.subr.bf16.mxu0 0
        %1153 = vmatpush1.bf16.msra.mxu0 0
        %1154 = vmatprep.subr.bf16.mxu0 0
        %1155 = vmatpush1.bf16.msra.mxu0 0
        %1156 = vmatprep.subr.bf16.mxu0 0
        %1157 = vmatpush1.bf16.msra.mxu0 0
        %1158 = vmatprep.mubr.bf16.mxu0 0
        %1159 = vmatmul.mubr.bf16.gmra.mrb[0].mxu0 %v1115
        %v1160 = vpop.f32.mrb[0].mxu0
        %v1161 = vadd.f32 0.0, %v1160
        %v1162 = vpop.f32.mrb[0].mxu0
        %v1163 = vpop.f32.mrb[0].mxu0
        %v1164 = vadd.f32 0.0, %v1163
        %v1165 = vpop.f32.mrb[0].mxu0
        %1166 = vmatprep.mubr.bf16.mxu0 0
        %1167 = vmatmul.mubr.bf16.gmra.mrb[0].mxu0 %v1118
        %v1168 = vpop.f32.mrb[0].mxu0
        %v1169 = vadd.f32 0.0, %v1168
        %v1170 = vpop.f32.mrb[0].mxu0
        %v1171 = vpop.f32.mrb[0].mxu0
        %v1172 = vadd.f32 0.0, %v1171
        %v1173 = vpop.f32.mrb[0].mxu0
        %1174 = vmatprep.mubr.bf16.mxu0 0
        %1175 = vmatmul.mubr.bf16.gmra.mrb[0].mxu0 %v1121
        %v1176 = vpop.f32.mrb[0].mxu0
        %v1177 = vadd.f32 0.0, %v1176
        %v1178 = vpop.f32.mrb[0].mxu0
        %v1179 = vpop.f32.mrb[0].mxu0
        %v1180 = vadd.f32 0.0, %v1179
        %v1181 = vpop.f32.mrb[0].mxu0
        %1182 = vmatprep.mubr.bf16.mxu0 0
        %1183 = vmatmul.mubr.bf16.gmra.mrb[0].mxu0 %v1124
        %v1184 = vpop.f32.mrb[0].mxu0
        %v1185 = vadd.f32 0.0, %v1184
        %v1186 = vpop.f32.mrb[0].mxu0
        %v1187 = vpop.f32.mrb[0].mxu0
        %v1188 = vadd.f32 0.0, %v1187
        %v1189 = vpop.f32.mrb[0].mxu0
        %1190 = vdwg.mxu0
        %v1199 = vunpack.c.l.b16 %v622
        %v1200 = vunpack.c.l.b16 %v623
        %v1201 = vunpack.c.l.b16 %v624
        %v1202 = vunpack.c.l.b16 %v625
        %v1203 = vunpack.c.l.b16 %v626
        %v1204 = vunpack.c.l.b16 %v627
        %v1205 = vunpack.c.l.b16 %v628
        %v1206 = vunpack.c.l.b16 %v629
        %v1207 = vpack.c.b16 %v1200, %v1199
        %v1208 = vpack.c.b16 %v1202, %v1201
        %v1209 = vpack.c.b16 %v1204, %v1203
        %v1210 = vpack.c.b16 %v1206, %v1205
        %v1216 = vsel %vm905, %v1086, 0
        %v1219 = vsel %vm905, %v1087, 0
        %v1222 = vsel %vm905, %v1088, 0
        %v1225 = vsel %vm905, %v1089, 0
        %1227 = vmatprep.subr.bf16.mxu0 0
        %1228 = vmatpush1.bf16.msra.mxu0 %v1207
        %1229 = vmatprep.subr.bf16.mxu0 0
        %1230 = vmatpush1.bf16.msra.mxu0 %v1208
        %1231 = vmatprep.subr.bf16.mxu0 0
        %1232 = vmatpush1.bf16.msra.mxu0 %v1209
        %1233 = vmatprep.subr.bf16.mxu0 0
        %1234 = vmatpush1.bf16.msra.mxu0 %v1210
        %1235 = vmatprep.subr.bf16.mxu0 0
        %1236 = vmatpush1.bf16.msra.mxu0 0
        %1237 = vmatprep.subr.bf16.mxu0 0
        %1238 = vmatpush1.bf16.msra.mxu0 0
        %1239 = vmatprep.subr.bf16.mxu0 0
        %1240 = vmatpush1.bf16.msra.mxu0 0
        %1241 = vmatprep.subr.bf16.mxu0 0
        %1242 = vmatpush1.bf16.msra.mxu0 0
        %1243 = vmatprep.subr.bf16.mxu0 0
        %1244 = vmatpush1.bf16.msra.mxu0 0
        %1245 = vmatprep.subr.bf16.mxu0 0
        %1246 = vmatpush1.bf16.msra.mxu0 0
        %1247 = vmatprep.subr.bf16.mxu0 0
        %1248 = vmatpush1.bf16.msra.mxu0 0
        %1249 = vmatprep.subr.bf16.mxu0 0
        %1250 = vmatpush1.bf16.msra.mxu0 0
        %1251 = vmatprep.subr.bf16.mxu0 0
        %1252 = vmatpush1.bf16.msra.mxu0 0
        %1253 = vmatprep.subr.bf16.mxu0 0
        %1254 = vmatpush1.bf16.msra.mxu0 0
        %1255 = vmatprep.subr.bf16.mxu0 0
        %1256 = vmatpush1.bf16.msra.mxu0 0
        %1257 = vmatprep.subr.bf16.mxu0 0
        %1258 = vmatpush1.bf16.msra.mxu0 0
        %1259 = vmatprep.mubr.bf16.mxu0 0
        %1260 = vmatmul.mubr.bf16.gmra.mrb[0].mxu0 %v1216
        %v1261 = vpop.f32.mrb[0].mxu0
        %v1262 = vadd.f32 0.0, %v1261
        %v1263 = vpop.f32.mrb[0].mxu0
        %v1264 = vpop.f32.mrb[0].mxu0
        %v1265 = vadd.f32 0.0, %v1264
        %v1266 = vpop.f32.mrb[0].mxu0
        %1267 = vmatprep.mubr.bf16.mxu0 0
        %1268 = vmatmul.mubr.bf16.gmra.mrb[0].mxu0 %v1219
        %v1269 = vpop.f32.mrb[0].mxu0
        %v1270 = vadd.f32 0.0, %v1269
        %v1271 = vpop.f32.mrb[0].mxu0
        %v1272 = vpop.f32.mrb[0].mxu0
        %v1273 = vadd.f32 0.0, %v1272
        %v1274 = vpop.f32.mrb[0].mxu0
        %1275 = vmatprep.mubr.bf16.mxu0 0
        %1276 = vmatmul.mubr.bf16.gmra.mrb[0].mxu0 %v1222
        %v1277 = vpop.f32.mrb[0].mxu0
        %v1278 = vadd.f32 0.0, %v1277
        %v1279 = vpop.f32.mrb[0].mxu0
        %v1280 = vpop.f32.mrb[0].mxu0
        %v1281 = vadd.f32 0.0, %v1280
        %v1282 = vpop.f32.mrb[0].mxu0
        %1283 = vmatprep.mubr.bf16.mxu0 0
        %1284 = vmatmul.mubr.bf16.gmra.mrb[0].mxu0 %v1225
        %v1285 = vpop.f32.mrb[0].mxu0
        %v1286 = vadd.f32 0.0, %v1285
        %v1287 = vpop.f32.mrb[0].mxu0
        %v1288 = vpop.f32.mrb[0].mxu0
        %v1289 = vadd.f32 0.0, %v1288
        %v1290 = vpop.f32.mrb[0].mxu0
        %1291 = vdwg.mxu0
        %v1292 = vpack.c.bf16 %v1164, %v1161
        %v1293 = vpack.c.bf16 %v1172, %v1169
        %v1294 = vpack.c.bf16 %v1180, %v1177
        %v1295 = vpack.c.bf16 %v1188, %v1185
        %v1296 = vld [vmem:[%s3] sm:$0x3]
        %v1297 = vpack.c.bf16 %v1265, %v1262
        %v1298 = vpack.c.bf16 %v1273, %v1270
        %v1299 = vpack.c.bf16 %v1281, %v1278
        %v1300 = vpack.c.bf16 %v1289, %v1286
        %s1301 = scalar_lea.vmem %s3, 2
        %v1302 = vld [vmem:[%s1301] sm:$0x3]
        %v1304 = vsel %vm686, %v1297, 0
        %v1307 = vsel %vm686, %v1298, 0
        %v1310 = vsel %vm686, %v1299, 0
        %v1313 = vsel %vm686, %v1300, 0
        %vm1315 = vcmask 1041408
        %v1317 = vsel %vm1315, %v1302, 0
        %1319 = vmatprep.subr.bf16.mxu0 0
        %1320 = vmatpush1.bf16.msra.mxu0 %v1317
        %1321 = vmatprep.subr.bf16.mxu0 0
        %1322 = vmatpush1.bf16.msra.mxu0 0
        %1323 = vmatprep.subr.bf16.mxu0 0
        %1324 = vmatpush1.bf16.msra.mxu0 0
        %1325 = vmatprep.subr.bf16.mxu0 0
        %1326 = vmatpush1.bf16.msra.mxu0 0
        %1327 = vmatprep.subr.bf16.mxu0 0
        %1328 = vmatpush1.bf16.msra.mxu0 0
        %1329 = vmatprep.subr.bf16.mxu0 0
        %1330 = vmatpush1.bf16.msra.mxu0 0
        %1331 = vmatprep.subr.bf16.mxu0 0
        %1332 = vmatpush1.bf16.msra.mxu0 0
        %1333 = vmatprep.subr.bf16.mxu0 0
        %1334 = vmatpush1.bf16.msra.mxu0 0
        %1335 = vmatprep.subr.bf16.mxu0 0
        %1336 = vmatpush1.bf16.msra.mxu0 0
        %1337 = vmatprep.subr.bf16.mxu0 0
        %1338 = vmatpush1.bf16.msra.mxu0 0
        %1339 = vmatprep.subr.bf16.mxu0 0
        %1340 = vmatpush1.bf16.msra.mxu0 0
        %1341 = vmatprep.subr.bf16.mxu0 0
        %1342 = vmatpush1.bf16.msra.mxu0 0
        %1343 = vmatprep.subr.bf16.mxu0 0
        %1344 = vmatpush1.bf16.msra.mxu0 0
        %1345 = vmatprep.subr.bf16.mxu0 0
        %1346 = vmatpush1.bf16.msra.mxu0 0
        %1347 = vmatprep.subr.bf16.mxu0 0
        %1348 = vmatpush1.bf16.msra.mxu0 0
        %1349 = vmatprep.subr.bf16.mxu0 0
        %1350 = vmatpush1.bf16.msra.mxu0 0
        %1351 = vmatprep.mubr.bf16.mxu0 0
        %1352 = vmatmul.mubr.bf16.gmra.mrb[0].mxu0 %v1304
        %v1353 = vpop.f32.mrb[0].mxu0
        %v1354 = vadd.f32 0.0, %v1353
        %v1355 = vpop.f32.mrb[0].mxu0
        %v1356 = vpop.f32.mrb[0].mxu0
        %v1357 = vadd.f32 0.0, %v1356
        %v1358 = vpop.f32.mrb[0].mxu0
        %1359 = vmatprep.mubr.bf16.mxu0 0
        %1360 = vmatmul.mubr.bf16.gmra.mrb[0].mxu0 %v1307
        %v1361 = vpop.f32.mrb[0].mxu0
        %v1362 = vadd.f32 0.0, %v1361
        %v1363 = vpop.f32.mrb[0].mxu0
        %v1364 = vpop.f32.mrb[0].mxu0
        %v1365 = vadd.f32 0.0, %v1364
        %v1366 = vpop.f32.mrb[0].mxu0
        %1367 = vmatprep.mubr.bf16.mxu0 0
        %1368 = vmatmul.mubr.bf16.gmra.mrb[0].mxu0 %v1310
        %v1369 = vpop.f32.mrb[0].mxu0
        %v1370 = vadd.f32 0.0, %v1369
        %v1371 = vpop.f32.mrb[0].mxu0
        %v1372 = vpop.f32.mrb[0].mxu0
        %v1373 = vadd.f32 0.0, %v1372
        %v1374 = vpop.f32.mrb[0].mxu0
        %1375 = vmatprep.mubr.bf16.mxu0 0
        %1376 = vmatmul.mubr.bf16.gmra.mrb[0].mxu0 %v1313
        %v1377 = vpop.f32.mrb[0].mxu0
        %v1378 = vadd.f32 0.0, %v1377
        %v1379 = vpop.f32.mrb[0].mxu0
        %v1380 = vpop.f32.mrb[0].mxu0
        %v1381 = vadd.f32 0.0, %v1380
        %v1382 = vpop.f32.mrb[0].mxu0
        %1383 = vdwg.mxu0
        %v1385 = vsel %vm686, %v1292, 0
        %v1388 = vsel %vm686, %v1293, 0
        %v1391 = vsel %vm686, %v1294, 0
        %v1394 = vsel %vm686, %v1295, 0
        %v1397 = vsel %vm1315, %v1296, 0
        %1399 = vmatprep.subr.bf16.mxu0 0
        %1400 = vmatpush1.bf16.msra.mxu0 %v1397
        %1401 = vmatprep.subr.bf16.mxu0 0
        %1402 = vmatpush1.bf16.msra.mxu0 0
        %1403 = vmatprep.subr.bf16.mxu0 0
        %1404 = vmatpush1.bf16.msra.mxu0 0
        %1405 = vmatprep.subr.bf16.mxu0 0
        %1406 = vmatpush1.bf16.msra.mxu0 0
        %1407 = vmatprep.subr.bf16.mxu0 0
        %1408 = vmatpush1.bf16.msra.mxu0 0
        %1409 = vmatprep.subr.bf16.mxu0 0
        %1410 = vmatpush1.bf16.msra.mxu0 0
        %1411 = vmatprep.subr.bf16.mxu0 0
        %1412 = vmatpush1.bf16.msra.mxu0 0
        %1413 = vmatprep.subr.bf16.mxu0 0
        %1414 = vmatpush1.bf16.msra.mxu0 0
        %1415 = vmatprep.subr.bf16.mxu0 0
        %1416 = vmatpush1.bf16.msra.mxu0 0
        %1417 = vmatprep.subr.bf16.mxu0 0
        %1418 = vmatpush1.bf16.msra.mxu0 0
        %1419 = vmatprep.subr.bf16.mxu0 0
        %1420 = vmatpush1.bf16.msra.mxu0 0
        %1421 = vmatprep.subr.bf16.mxu0 0
        %1422 = vmatpush1.bf16.msra.mxu0 0
        %1423 = vmatprep.subr.bf16.mxu0 0
        %1424 = vmatpush1.bf16.msra.mxu0 0
        %1425 = vmatprep.subr.bf16.mxu0 0
        %1426 = vmatpush1.bf16.msra.mxu0 0
        %1427 = vmatprep.subr.bf16.mxu0 0
        %1428 = vmatpush1.bf16.msra.mxu0 0
        %1429 = vmatprep.subr.bf16.mxu0 0
        %1430 = vmatpush1.bf16.msra.mxu0 0
        %1431 = vmatprep.mubr.bf16.mxu0 0
        %1432 = vmatmul.mubr.bf16.gmra.mrb[0].mxu0 %v1385
        %v1433 = vpop.f32.mrb[0].mxu0
        %v1434 = vadd.f32 %v1354, %v1433
        %v1435 = vpop.f32.mrb[0].mxu0
        %v1436 = vpop.f32.mrb[0].mxu0
        %v1437 = vadd.f32 %v1357, %v1436
        %v1438 = vpop.f32.mrb[0].mxu0
        %1439 = vmatprep.mubr.bf16.mxu0 0
        %1440 = vmatmul.mubr.bf16.gmra.mrb[0].mxu0 %v1388
        %v1441 = vpop.f32.mrb[0].mxu0
        %v1442 = vadd.f32 %v1362, %v1441
        %v1443 = vpop.f32.mrb[0].mxu0
        %v1444 = vpop.f32.mrb[0].mxu0
        %v1445 = vadd.f32 %v1365, %v1444
        %v1446 = vpop.f32.mrb[0].mxu0
        %1447 = vmatprep.mubr.bf16.mxu0 0
        %1448 = vmatmul.mubr.bf16.gmra.mrb[0].mxu0 %v1391
        %v1449 = vpop.f32.mrb[0].mxu0
        %v1450 = vadd.f32 %v1370, %v1449
        %v1451 = vpop.f32.mrb[0].mxu0
        %v1452 = vpop.f32.mrb[0].mxu0
        %v1453 = vadd.f32 %v1373, %v1452
        %v1454 = vpop.f32.mrb[0].mxu0
        %1455 = vmatprep.mubr.bf16.mxu0 0
        %1456 = vmatmul.mubr.bf16.gmra.mrb[0].mxu0 %v1394
        %v1457 = vpop.f32.mrb[0].mxu0
        %v1458 = vadd.f32 %v1378, %v1457
        %v1459 = vpop.f32.mrb[0].mxu0
        %v1460 = vpop.f32.mrb[0].mxu0
        %v1461 = vadd.f32 %v1381, %v1460
        %v1462 = vpop.f32.mrb[0].mxu0
        %1463 = vdwg.mxu0
        %v1464 = vld [vmem:[%s547] sm:$0xff]
        %v1465 = vld [vmem:[%s547 + $0x8] sm:$0xff]
        %v1466 = vld [vmem:[%s547 + $0x10] sm:$0xff]
        %v1467 = vld [vmem:[%s547 + $0x18] sm:$0xff]
        %v1468 = vld [vmem:[%s547 + $0x20] sm:$0xff]
        %v1469 = vld [vmem:[%s547 + $0x28] sm:$0xff]
        %v1470 = vld [vmem:[%s547 + $0x30] sm:$0xff]
        %v1471 = vld [vmem:[%s547 + $0x38] sm:$0xff]
        %v1472 = vadd.f32 %v1434, %v1464
        %v1473 = vadd.f32 %v1437, %v1465
        %v1474 = vadd.f32 %v1442, %v1466
        %v1475 = vadd.f32 %v1445, %v1467
        %v1476 = vadd.f32 %v1450, %v1468
        %v1477 = vadd.f32 %v1453, %v1469
        %v1478 = vadd.f32 %v1458, %v1470
        %v1479 = vadd.f32 %v1461, %v1471
        %v1480 = vld [vmem:[%s4] sm:$0x1]
        %v1482 = vlaneseq
        %v1483 = vshrl.u32 %v1482, 7
        %v1484 = vsub.s32 0, %v1483
        %v1485 = vrot.slane %v1480, %v1484
        %v1487 = vadd.f32 %v1472, %v1485
        %v1488 = vadd.f32 %v1473, %v1485
        %v1489 = vadd.f32 %v1474, %v1485
        %v1490 = vadd.f32 %v1475, %v1485
        %v1491 = vadd.f32 %v1476, %v1485
        %v1492 = vadd.f32 %v1477, %v1485
        %v1493 = vadd.f32 %v1478, %v1485
        %v1494 = vadd.f32 %v1479, %v1485
        %vm1495 = vcmask 64512
        %1496 = vst.msk [vmem:[%s574] sm:$0xff] %vm1495, %v1487
        %1497 = vst.msk [vmem:[%s574 + $0x8] sm:$0xff] %vm1495, %v1488
        %1498 = vst.msk [vmem:[%s574 + $0x10] sm:$0xff] %vm1495, %v1489
        %1499 = vst.msk [vmem:[%s574 + $0x18] sm:$0xff] %vm1495, %v1490
        %1500 = vst.msk [vmem:[%s574 + $0x20] sm:$0xff] %vm1495, %v1491
        %1501 = vst.msk [vmem:[%s574 + $0x28] sm:$0xff] %vm1495, %v1492
        %1502 = vst.msk [vmem:[%s574 + $0x30] sm:$0xff] %vm1495, %v1493
        %1503 = vst.msk [vmem:[%s574 + $0x38] sm:$0xff] %vm1495, %v1494
        %s1504 = sand.u32 %s174, 1
        %s1505 = sand.u32 %s174, 1
        %s1506 = smul.addr %s1505, 64
        %s1507 = scalar_lea.vmem [#allocation4], %s1506
        // Predicated region
        $region120: #{transformer_block_forward.6} parent=110 // pred_check
          %p1508 = pneg %p184
        $region121: #{transformer_block_forward.6} parent=110 // pred_check_branch
          %1510 = sbr.rel (%p1508) target = $region123
        $region122: #{transformer_block_forward.6} parent=110 // pred_region
          %s1511 = smul.u32 8, %s22
          %s1512 = smul.addr %s1511, 2
          %s1513 = sadd.s32 %s23, %s1512
          %s1514 = smul.addr %s21, 32
          %s1515 = sadd.s32 %s1513, %s1514
          %s1516 = smul.addr %s1515, 8
          %s1517 = scalar_lea.vmem %s5, %s1516
          // Predicated region
          $region124: #{transformer_block_forward.6} parent=122 // pred_check
            _
          $region125: #{transformer_block_forward.6} parent=122 // pred_check_branch
            %1519 = sbr.rel (0) target = $region127
          $region126: #{transformer_block_forward.6} parent=122 // pred_region
            // Predicated region
            $region128: #{transformer_block_forward.6} parent=126 // pred_check
              _
            $region129: #{transformer_block_forward.6} parent=126 // pred_check_branch
              %1521 = sbr.rel (0) target = $region131
            $region130: #{transformer_block_forward.6} parent=126 // pred_region
              // Predicated region
              $region143: #{transformer_block_forward.6} parent=130 // pred_check
                _
              $region144: #{transformer_block_forward.6} parent=130 // pred_check_branch
                %1550 = sbr.rel (0) target = $region146
              $region145: #{transformer_block_forward.6} parent=130 // pred_region
                loop: start=0, step=1, limit=1
                $region147: #{transformer_block_forward.6} parent=145 // loop_pre_header
                  _
                $region148: #{transformer_block_forward.6} parent=145 // loop_header
                  %s1552 = sphi 0, %s1556
                  %p1553 = scmp.ge.s32.totalorder %s1552, 1
                  %s1557 = sphi %s1507, %s1507
                  %s1558 = sphi %s1517, %s1517
                $region149: #{transformer_block_forward.6} parent=145 // loop_header_branch
                  %1555 = sbr.rel (%p1553) target = $region153
                $region150: #{transformer_block_forward.6} parent=145 // loop_body
                  %v1559 = vld [vmem:[%s1557] sm:$0xff]
                  %1560 = vst [vmem:[%s1558] sm:$0xff] %v1559
                  %v1561 = vld [vmem:[%s1557 + $0x8] sm:$0xff]
                  %1562 = vst [vmem:[%s1558 + $0x10] sm:$0xff] %v1561
                  %v1563 = vld [vmem:[%s1557 + $0x10] sm:$0xff]
                  %1564 = vst [vmem:[%s1558 + $0x20] sm:$0xff] %v1563
                  %v1565 = vld [vmem:[%s1557 + $0x18] sm:$0xff]
                  %1566 = vst [vmem:[%s1558 + $0x30] sm:$0xff] %v1565
                  %v1567 = vld [vmem:[%s1557 + $0x20] sm:$0xff]
                  %1568 = vst [vmem:[%s1558 + $0x40] sm:$0xff] %v1567
                  %v1569 = vld [vmem:[%s1557 + $0x28] sm:$0xff]
                  %1570 = vst [vmem:[%s1558 + $0x50] sm:$0xff] %v1569
                  %v1571 = vld [vmem:[%s1557 + $0x30] sm:$0xff]
                  %1572 = vst [vmem:[%s1558 + $0x60] sm:$0xff] %v1571
                  %v1573 = vld [vmem:[%s1557 + $0x38] sm:$0xff]
                  %1574 = vst [vmem:[%s1558 + $0x70] sm:$0xff] %v1573
                $region151: #{transformer_block_forward.6} parent=145 // loop_footer
                  %s1556 = sadd.s32 1, %s1552
                $region152: #{transformer_block_forward.6} parent=145 // loop_footer_branch
                  %1551 = sbr.rel target = $region148
                $region153: #{transformer_block_forward.6} parent=145 // loop_exit
                  _
              $region146: #{transformer_block_forward.6} parent=130 // pred_fallthru
                _
              // Predicated region
              $region154: #{transformer_block_forward.6} parent=130 // pred_check
                _
              $region155: #{transformer_block_forward.6} parent=130 // pred_check_branch
                %1576 = sbr.rel target = $region157
              $region156: #{transformer_block_forward.6} parent=130 // pred_region
                _
              $region157: #{transformer_block_forward.6} parent=130 // pred_fallthru
                _
            $region131: #{transformer_block_forward.6} parent=126 // pred_fallthru
              _
            // Predicated region
            $region132: #{transformer_block_forward.6} parent=126 // pred_check
              _
            $region133: #{transformer_block_forward.6} parent=126 // pred_check_branch
              %1523 = sbr.rel target = $region135
            $region134: #{transformer_block_forward.6} parent=126 // pred_region
              loop: start=0, step=1, limit=1
              $region136: #{transformer_block_forward.6} parent=134 // loop_pre_header
                _
              $region137: #{transformer_block_forward.6} parent=134 // loop_header
                %s1526 = sphi 0, %s1530
                %p1527 = scmp.ge.s32.totalorder %s1526, 1
                %s1531 = sphi %s1507, %s1507
                %s1532 = sphi %s1517, %s1517
              $region138: #{transformer_block_forward.6} parent=134 // loop_header_branch
                %1529 = sbr.rel (%p1527) target = $region142
              $region139: #{transformer_block_forward.6} parent=134 // loop_body
                %v1533 = vld [vmem:[%s1531] sm:$0xff]
                %1534 = vst [vmem:[%s1532] sm:$0xff] %v1533
                %v1535 = vld [vmem:[%s1531 + $0x8] sm:$0xff]
                %1536 = vst [vmem:[%s1532 + $0x10] sm:$0xff] %v1535
                %v1537 = vld [vmem:[%s1531 + $0x10] sm:$0xff]
                %1538 = vst [vmem:[%s1532 + $0x20] sm:$0xff] %v1537
                %v1539 = vld [vmem:[%s1531 + $0x18] sm:$0xff]
                %1540 = vst [vmem:[%s1532 + $0x30] sm:$0xff] %v1539
                %v1541 = vld [vmem:[%s1531 + $0x20] sm:$0xff]
                %1542 = vst [vmem:[%s1532 + $0x40] sm:$0xff] %v1541
                %v1543 = vld [vmem:[%s1531 + $0x28] sm:$0xff]
                %1544 = vst [vmem:[%s1532 + $0x50] sm:$0xff] %v1543
                %v1545 = vld [vmem:[%s1531 + $0x30] sm:$0xff]
                %1546 = vst [vmem:[%s1532 + $0x60] sm:$0xff] %v1545
                %v1547 = vld [vmem:[%s1531 + $0x38] sm:$0xff]
                %1548 = vst [vmem:[%s1532 + $0x70] sm:$0xff] %v1547
              $region140: #{transformer_block_forward.6} parent=134 // loop_footer
                %s1530 = sadd.s32 1, %s1526
              $region141: #{transformer_block_forward.6} parent=134 // loop_footer_branch
                %1525 = sbr.rel target = $region137
              $region142: #{transformer_block_forward.6} parent=134 // loop_exit
                _
            $region135: #{transformer_block_forward.6} parent=126 // pred_fallthru
              _
          $region127: #{transformer_block_forward.6} parent=122 // pred_fallthru
            _
          %1577 = vnop
        $region123: #{transformer_block_forward.6} parent=110 // pred_fallthru
          _
      $region111: #{transformer_block_forward.6} parent=5 // pred_fallthru
        _
      %p1578 = scmp.le.s32.totalorder 2, %s11
      // Predicated region
      $region158: #{transformer_block_forward.6} parent=5 // pred_check
        %p1579 = pneg %p1578
      $region159: #{transformer_block_forward.6} parent=5 // pred_check_branch
        %1581 = sbr.rel (%p1579) target = $region161
      $region160: #{transformer_block_forward.6} parent=5 // pred_region
        %s1582 = ssub.s32 %s11, 2
        // Predicated region
        $region162: #{transformer_block_forward.6} parent=160 // pred_check
          %p1583 = pneg %p190
        $region163: #{transformer_block_forward.6} parent=160 // pred_check_branch
          %1585 = sbr.rel (%p1583) target = $region165
        $region164: #{transformer_block_forward.6} parent=160 // pred_region
          %s1586 = sand.u32 %s175, 1
          %s1587 = sand.u32 %s175, 1
          %s1588 = smul.addr %s1587, 64
          %s1589 = scalar_lea.vmem [#allocation4], %s1588
        $region165: #{transformer_block_forward.6} parent=160 // pred_fallthru
          _
      $region161: #{transformer_block_forward.6} parent=5 // pred_fallthru
        _
    $region6: #{transformer_block_forward.6} parent=1 // loop_footer
      %s15 = sadd.s32 1, %s11
    $region7: #{transformer_block_forward.6} parent=1 // loop_footer_branch
      %10 = sbr.rel target = $region3
    $region8: #{transformer_block_forward.6} parent=1 // loop_exit
      _

// kernel: transformer_block_forward.7
$region0: #{transformer_block_forward.7}
  #allocation0 [shape = 'u32[]', space=smem, size = 0x4, offset = 0x4, fixed_abs, tag = 'smem constant byte address 0x4 - core index']
  #allocation1 [shape = 'u32[144,128]{1,0:T(1,128)}', space=vmem, size = 0x12000, scoped, tag = 'internal scratch']
  #allocation2 [shape = 'f32[512,8]{1,0:T(8,128)}', space=vmem, size = 0x40000, scoped, tag = 'scratch operand']
  %s0 = inlined_call_operand.vmem [shape: f32[512,8], index: 0, kind: input, shape index: {}]
  %s1 = inlined_call_operand.vmem [shape: bf16[8,32], index: 1, kind: input, shape index: {}]
  %s2 = inlined_call_operand.vmem [shape: f32[1,32], index: 2, kind: input, shape index: {}]
  %s3 = inlined_call_operand.vmem [shape: bf16[32,8], index: 3, kind: input, shape index: {}]
  %s4 = inlined_call_operand.vmem [shape: f32[1,8], index: 4, kind: input, shape index: {}]
  %s5 = inlined_call_operand.vmem [shape: f32[512,8], index: 5, kind: output, shape index: {}]
  %s6 = sld [smem:[#allocation0]]
  $region38: #{transformer_block_forward.7} parent=0
    _
  %s8 = ssub.s32 1, %s6
  %s9 = scalar_select 0, %s8, %s6
  // Predicated region
  $region2: #{transformer_block_forward.7} parent=0 // pred_check
    _
  $region3: #{transformer_block_forward.7} parent=0 // pred_check_branch
    %11 = sbr.rel (0) target = $region5
  $region4: #{transformer_block_forward.7} parent=0 // pred_region
    _
  $region5: #{transformer_block_forward.7} parent=0 // pred_fallthru
    _
  // Predicated region
  $region6: #{transformer_block_forward.7} parent=0 // pred_check
    _
  $region7: #{transformer_block_forward.7} parent=0 // pred_check_branch
    %13 = sbr.rel (0) target = $region9
  $region8: #{transformer_block_forward.7} parent=0 // pred_region
    _
  $region9: #{transformer_block_forward.7} parent=0 // pred_fallthru
    _
  // Predicated region
  $region10: #{transformer_block_forward.7} parent=0 // pred_check
    _
  $region11: #{transformer_block_forward.7} parent=0 // pred_check_branch
    %15 = sbr.rel (0) target = $region13
  $region12: #{transformer_block_forward.7} parent=0 // pred_region
    _
  $region13: #{transformer_block_forward.7} parent=0 // pred_fallthru
    _
  // Predicated region
  $region14: #{transformer_block_forward.7} parent=0 // pred_check
    _
  $region15: #{transformer_block_forward.7} parent=0 // pred_check_branch
    %17 = sbr.rel (0) target = $region17
  $region16: #{transformer_block_forward.7} parent=0 // pred_region
    _
  $region17: #{transformer_block_forward.7} parent=0 // pred_fallthru
    _
  // Predicated region
  $region18: #{transformer_block_forward.7} parent=0 // pred_check
    _
  $region19: #{transformer_block_forward.7} parent=0 // pred_check_branch
    %19 = sbr.rel (0) target = $region21
  $region20: #{transformer_block_forward.7} parent=0 // pred_region
    _
  $region21: #{transformer_block_forward.7} parent=0 // pred_fallthru
    _
  %p21 = scmp.eq.s32.totalorder 0, 0
  // Predicated region
  $region22: #{transformer_block_forward.7} parent=0 // pred_check
    %p22 = pneg %p21
  $region23: #{transformer_block_forward.7} parent=0 // pred_check_branch
    %24 = sbr.rel (%p22) target = $region25
  $region24: #{transformer_block_forward.7} parent=0 // pred_region
    %vm25 = vcmask 64512
    %26 = vst.msk [vmem:[#allocation2] sm:$0xff] %vm25, 0.0
    %27 = vst.msk [vmem:[#allocation2 + $0x8] sm:$0xff] %vm25, 0.0
    %28 = vst.msk [vmem:[#allocation2 + $0x10] sm:$0xff] %vm25, 0.0
    %29 = vst.msk [vmem:[#allocation2 + $0x18] sm:$0xff] %vm25, 0.0
    %30 = vst.msk [vmem:[#allocation2 + $0x20] sm:$0xff] %vm25, 0.0
    %31 = vst.msk [vmem:[#allocation2 + $0x28] sm:$0xff] %vm25, 0.0
    %32 = vst.msk [vmem:[#allocation2 + $0x30] sm:$0xff] %vm25, 0.0
    %33 = vst.msk [vmem:[#allocation2 + $0x38] sm:$0xff] %vm25, 0.0
    %34 = vst.msk [vmem:[#allocation2 + $0x40] sm:$0xff] %vm25, 0.0
    %35 = vst.msk [vmem:[#allocation2 + $0x48] sm:$0xff] %vm25, 0.0
    %36 = vst.msk [vmem:[#allocation2 + $0x50] sm:$0xff] %vm25, 0.0
    %37 = vst.msk [vmem:[#allocation2 + $0x58] sm:$0xff] %vm25, 0.0
    %38 = vst.msk [vmem:[#allocation2 + $0x60] sm:$0xff] %vm25, 0.0
    %39 = vst.msk [vmem:[#allocation2 + $0x68] sm:$0xff] %vm25, 0.0
    %40 = vst.msk [vmem:[#allocation2 + $0x70] sm:$0xff] %vm25, 0.0
    %41 = vst.msk [vmem:[#allocation2 + $0x78] sm:$0xff] %vm25, 0.0
    %42 = vst.msk [vmem:[#allocation2 + $0x80] sm:$0xff] %vm25, 0.0
    %43 = vst.msk [vmem:[#allocation2 + $0x88] sm:$0xff] %vm25, 0.0
    %44 = vst.msk [vmem:[#allocation2 + $0x90] sm:$0xff] %vm25, 0.0
    %45 = vst.msk [vmem:[#allocation2 + $0x98] sm:$0xff] %vm25, 0.0
    %46 = vst.msk [vmem:[#allocation2 + $0xa0] sm:$0xff] %vm25, 0.0
    %47 = vst.msk [vmem:[#allocation2 + $0xa8] sm:$0xff] %vm25, 0.0
    %48 = vst.msk [vmem:[#allocation2 + $0xb0] sm:$0xff] %vm25, 0.0
    %49 = vst.msk [vmem:[#allocation2 + $0xb8] sm:$0xff] %vm25, 0.0
    %50 = vst.msk [vmem:[#allocation2 + $0xc0] sm:$0xff] %vm25, 0.0
    %51 = vst.msk [vmem:[#allocation2 + $0xc8] sm:$0xff] %vm25, 0.0
    %52 = vst.msk [vmem:[#allocation2 + $0xd0] sm:$0xff] %vm25, 0.0
    %53 = vst.msk [vmem:[#allocation2 + $0xd8] sm:$0xff] %vm25, 0.0
    %54 = vst.msk [vmem:[#allocation2 + $0xe0] sm:$0xff] %vm25, 0.0
    %55 = vst.msk [vmem:[#allocation2 + $0xe8] sm:$0xff] %vm25, 0.0
    %56 = vst.msk [vmem:[#allocation2 + $0xf0] sm:$0xff] %vm25, 0.0
    %57 = vst.msk [vmem:[#allocation2 + $0xf8] sm:$0xff] %vm25, 0.0
    %58 = vst.msk [vmem:[#allocation2 + $0x100] sm:$0xff] %vm25, 0.0
    %59 = vst.msk [vmem:[#allocation2 + $0x108] sm:$0xff] %vm25, 0.0
    %60 = vst.msk [vmem:[#allocation2 + $0x110] sm:$0xff] %vm25, 0.0
    %61 = vst.msk [vmem:[#allocation2 + $0x118] sm:$0xff] %vm25, 0.0
    %62 = vst.msk [vmem:[#allocation2 + $0x120] sm:$0xff] %vm25, 0.0
    %63 = vst.msk [vmem:[#allocation2 + $0x128] sm:$0xff] %vm25, 0.0
    %64 = vst.msk [vmem:[#allocation2 + $0x130] sm:$0xff] %vm25, 0.0
    %65 = vst.msk [vmem:[#allocation2 + $0x138] sm:$0xff] %vm25, 0.0
    %66 = vst.msk [vmem:[#allocation2 + $0x140] sm:$0xff] %vm25, 0.0
    %67 = vst.msk [vmem:[#allocation2 + $0x148] sm:$0xff] %vm25, 0.0
    %68 = vst.msk [vmem:[#allocation2 + $0x150] sm:$0xff] %vm25, 0.0
    %69 = vst.msk [vmem:[#allocation2 + $0x158] sm:$0xff] %vm25, 0.0
    %70 = vst.msk [vmem:[#allocation2 + $0x160] sm:$0xff] %vm25, 0.0
    %71 = vst.msk [vmem:[#allocation2 + $0x168] sm:$0xff] %vm25, 0.0
    %72 = vst.msk [vmem:[#allocation2 + $0x170] sm:$0xff] %vm25, 0.0
    %73 = vst.msk [vmem:[#allocation2 + $0x178] sm:$0xff] %vm25, 0.0
    %74 = vst.msk [vmem:[#allocation2 + $0x180] sm:$0xff] %vm25, 0.0
    %75 = vst.msk [vmem:[#allocation2 + $0x188] sm:$0xff] %vm25, 0.0
    %76 = vst.msk [vmem:[#allocation2 + $0x190] sm:$0xff] %vm25, 0.0
    %77 = vst.msk [vmem:[#allocation2 + $0x198] sm:$0xff] %vm25, 0.0
    %78 = vst.msk [vmem:[#allocation2 + $0x1a0] sm:$0xff] %vm25, 0.0
    %79 = vst.msk [vmem:[#allocation2 + $0x1a8] sm:$0xff] %vm25, 0.0
    %80 = vst.msk [vmem:[#allocation2 + $0x1b0] sm:$0xff] %vm25, 0.0
    %81 = vst.msk [vmem:[#allocation2 + $0x1b8] sm:$0xff] %vm25, 0.0
    %82 = vst.msk [vmem:[#allocation2 + $0x1c0] sm:$0xff] %vm25, 0.0
    %83 = vst.msk [vmem:[#allocation2 + $0x1c8] sm:$0xff] %vm25, 0.0
    %84 = vst.msk [vmem:[#allocation2 + $0x1d0] sm:$0xff] %vm25, 0.0
    %85 = vst.msk [vmem:[#allocation2 + $0x1d8] sm:$0xff] %vm25, 0.0
    %86 = vst.msk [vmem:[#allocation2 + $0x1e0] sm:$0xff] %vm25, 0.0
    %87 = vst.msk [vmem:[#allocation2 + $0x1e8] sm:$0xff] %vm25, 0.0
    %88 = vst.msk [vmem:[#allocation2 + $0x1f0] sm:$0xff] %vm25, 0.0
    %89 = vst.msk [vmem:[#allocation2 + $0x1f8] sm:$0xff] %vm25, 0.0
  $region25: #{transformer_block_forward.7} parent=0 // pred_fallthru
    _
  %v90 = vld [vmem:[%s0] sm:$0xff]
  %v91 = vld [vmem:[%s0 + $0x8] sm:$0xff]
  %v92 = vld [vmem:[%s0 + $0x10] sm:$0xff]
  %v93 = vld [vmem:[%s0 + $0x18] sm:$0xff]
  %v94 = vld [vmem:[%s0 + $0x20] sm:$0xff]
  %v95 = vld [vmem:[%s0 + $0x28] sm:$0xff]
  %v96 = vld [vmem:[%s0 + $0x30] sm:$0xff]
  %v97 = vld [vmem:[%s0 + $0x38] sm:$0xff]
  %v98 = vld [vmem:[%s0 + $0x40] sm:$0xff]
  %v99 = vld [vmem:[%s0 + $0x48] sm:$0xff]
  %v100 = vld [vmem:[%s0 + $0x50] sm:$0xff]
  %v101 = vld [vmem:[%s0 + $0x58] sm:$0xff]
  %v102 = vld [vmem:[%s0 + $0x60] sm:$0xff]
  %v103 = vld [vmem:[%s0 + $0x68] sm:$0xff]
  %v104 = vld [vmem:[%s0 + $0x70] sm:$0xff]
  %v105 = vld [vmem:[%s0 + $0x78] sm:$0xff]
  %v106 = vld [vmem:[%s0 + $0x80] sm:$0xff]
  %v107 = vld [vmem:[%s0 + $0x88] sm:$0xff]
  %v108 = vld [vmem:[%s0 + $0x90] sm:$0xff]
  %v109 = vld [vmem:[%s0 + $0x98] sm:$0xff]
  %v110 = vld [vmem:[%s0 + $0xa0] sm:$0xff]
  %v111 = vld [vmem:[%s0 + $0xa8] sm:$0xff]
  %v112 = vld [vmem:[%s0 + $0xb0] sm:$0xff]
  %v113 = vld [vmem:[%s0 + $0xb8] sm:$0xff]
  %v114 = vld [vmem:[%s0 + $0xc0] sm:$0xff]
  %v115 = vld [vmem:[%s0 + $0xc8] sm:$0xff]
  %v116 = vld [vmem:[%s0 + $0xd0] sm:$0xff]
  %v117 = vld [vmem:[%s0 + $0xd8] sm:$0xff]
  %v118 = vld [vmem:[%s0 + $0xe0] sm:$0xff]
  %v119 = vld [vmem:[%s0 + $0xe8] sm:$0xff]
  %v120 = vld [vmem:[%s0 + $0xf0] sm:$0xff]
  %v121 = vld [vmem:[%s0 + $0xf8] sm:$0xff]
  %v122 = vld [vmem:[%s0 + $0x100] sm:$0xff]
  %v123 = vld [vmem:[%s0 + $0x108] sm:$0xff]
  %v124 = vld [vmem:[%s0 + $0x110] sm:$0xff]
  %v125 = vld [vmem:[%s0 + $0x118] sm:$0xff]
  %v126 = vld [vmem:[%s0 + $0x120] sm:$0xff]
  %v127 = vld [vmem:[%s0 + $0x128] sm:$0xff]
  %v128 = vld [vmem:[%s0 + $0x130] sm:$0xff]
  %v129 = vld [vmem:[%s0 + $0x138] sm:$0xff]
  %v130 = vld [vmem:[%s0 + $0x140] sm:$0xff]
  %v131 = vld [vmem:[%s0 + $0x148] sm:$0xff]
  %v132 = vld [vmem:[%s0 + $0x150] sm:$0xff]
  %v133 = vld [vmem:[%s0 + $0x158] sm:$0xff]
  %v134 = vld [vmem:[%s0 + $0x160] sm:$0xff]
  %v135 = vld [vmem:[%s0 + $0x168] sm:$0xff]
  %v136 = vld [vmem:[%s0 + $0x170] sm:$0xff]
  %v137 = vld [vmem:[%s0 + $0x178] sm:$0xff]
  %v138 = vld [vmem:[%s0 + $0x180] sm:$0xff]
  %v139 = vld [vmem:[%s0 + $0x188] sm:$0xff]
  %v140 = vld [vmem:[%s0 + $0x190] sm:$0xff]
  %v141 = vld [vmem:[%s0 + $0x198] sm:$0xff]
  %v142 = vld [vmem:[%s0 + $0x1a0] sm:$0xff]
  %v143 = vld [vmem:[%s0 + $0x1a8] sm:$0xff]
  %v144 = vld [vmem:[%s0 + $0x1b0] sm:$0xff]
  %v145 = vld [vmem:[%s0 + $0x1b8] sm:$0xff]
  %v146 = vld [vmem:[%s0 + $0x1c0] sm:$0xff]
  %v147 = vld [vmem:[%s0 + $0x1c8] sm:$0xff]
  %v148 = vld [vmem:[%s0 + $0x1d0] sm:$0xff]
  %v149 = vld [vmem:[%s0 + $0x1d8] sm:$0xff]
  %v150 = vld [vmem:[%s0 + $0x1e0] sm:$0xff]
  %v151 = vld [vmem:[%s0 + $0x1e8] sm:$0xff]
  %v152 = vld [vmem:[%s0 + $0x1f0] sm:$0xff]
  %v153 = vld [vmem:[%s0 + $0x1f8] sm:$0xff]
  %v154 = vpack.c.bf16 %v91, %v90
  %v155 = vpack.c.bf16 %v93, %v92
  %v156 = vpack.c.bf16 %v95, %v94
  %v157 = vpack.c.bf16 %v97, %v96
  %v158 = vpack.c.bf16 %v99, %v98
  %v159 = vpack.c.bf16 %v101, %v100
  %v160 = vpack.c.bf16 %v103, %v102
  %v161 = vpack.c.bf16 %v105, %v104
  %v162 = vpack.c.bf16 %v107, %v106
  %v163 = vpack.c.bf16 %v109, %v108
  %v164 = vpack.c.bf16 %v111, %v110
  %v165 = vpack.c.bf16 %v113, %v112
  %v166 = vpack.c.bf16 %v115, %v114
  %v167 = vpack.c.bf16 %v117, %v116
  %v168 = vpack.c.bf16 %v119, %v118
  %v169 = vpack.c.bf16 %v121, %v120
  %v170 = vpack.c.bf16 %v123, %v122
  %v171 = vpack.c.bf16 %v125, %v124
  %v172 = vpack.c.bf16 %v127, %v126
  %v173 = vpack.c.bf16 %v129, %v128
  %v174 = vpack.c.bf16 %v131, %v130
  %v175 = vpack.c.bf16 %v133, %v132
  %v176 = vpack.c.bf16 %v135, %v134
  %v177 = vpack.c.bf16 %v137, %v136
  %v178 = vpack.c.bf16 %v139, %v138
  %v179 = vpack.c.bf16 %v141, %v140
  %v180 = vpack.c.bf16 %v143, %v142
  %v181 = vpack.c.bf16 %v145, %v144
  %v182 = vpack.c.bf16 %v147, %v146
  %v183 = vpack.c.bf16 %v149, %v148
  %v184 = vpack.c.bf16 %v151, %v150
  %v185 = vpack.c.bf16 %v153, %v152
  %v186 = vld [vmem:[%s1] sm:$0xf]
  %v187 = vld [vmem:[%s2] sm:$0x1]
  %v189 = vlaneseq
  %v190 = vshrl.u32 %v189, 7
  %v191 = vsub.s32 0, %v190
  %v192 = vrot.slane %v187, %v191
  %vm194 = vcmask 64512
  %v196 = vsel %vm194, %v154, 0
  %v199 = vsel %vm194, %v155, 0
  %v202 = vsel %vm194, %v156, 0
  %v205 = vsel %vm194, %v157, 0
  %v208 = vsel %vm194, %v158, 0
  %v211 = vsel %vm194, %v159, 0
  %v214 = vsel %vm194, %v160, 0
  %v217 = vsel %vm194, %v161, 0
  %v220 = vsel %vm194, %v162, 0
  %v223 = vsel %vm194, %v163, 0
  %v226 = vsel %vm194, %v164, 0
  %v229 = vsel %vm194, %v165, 0
  %v232 = vsel %vm194, %v166, 0
  %v235 = vsel %vm194, %v167, 0
  %v238 = vsel %vm194, %v168, 0
  %v241 = vsel %vm194, %v169, 0
  %v244 = vsel %vm194, %v170, 0
  %v247 = vsel %vm194, %v171, 0
  %v250 = vsel %vm194, %v172, 0
  %v253 = vsel %vm194, %v173, 0
  %v256 = vsel %vm194, %v174, 0
  %v259 = vsel %vm194, %v175, 0
  %v262 = vsel %vm194, %v176, 0
  %v265 = vsel %vm194, %v177, 0
  %v268 = vsel %vm194, %v178, 0
  %v271 = vsel %vm194, %v179, 0
  %v274 = vsel %vm194, %v180, 0
  %v277 = vsel %vm194, %v181, 0
  %v280 = vsel %vm194, %v182, 0
  %v283 = vsel %vm194, %v183, 0
  %v286 = vsel %vm194, %v184, 0
  %v289 = vsel %vm194, %v185, 0
  %vm291 = vcmask 1043456
  %v293 = vsel %vm291, %v186, 0
  %295 = vmatprep.subr.bf16.mxu0 0
  %296 = vmatpush1.bf16.msra.mxu0 %v293
  %297 = vmatprep.subr.bf16.mxu0 0
  %298 = vmatpush1.bf16.msra.mxu0 0
  %299 = vmatprep.subr.bf16.mxu0 0
  %300 = vmatpush1.bf16.msra.mxu0 0
  %301 = vmatprep.subr.bf16.mxu0 0
  %302 = vmatpush1.bf16.msra.mxu0 0
  %303 = vmatprep.subr.bf16.mxu0 0
  %304 = vmatpush1.bf16.msra.mxu0 0
  %305 = vmatprep.subr.bf16.mxu0 0
  %306 = vmatpush1.bf16.msra.mxu0 0
  %307 = vmatprep.subr.bf16.mxu0 0
  %308 = vmatpush1.bf16.msra.mxu0 0
  %309 = vmatprep.subr.bf16.mxu0 0
  %310 = vmatpush1.bf16.msra.mxu0 0
  %311 = vmatprep.subr.bf16.mxu0 0
  %312 = vmatpush1.bf16.msra.mxu0 0
  %313 = vmatprep.subr.bf16.mxu0 0
  %314 = vmatpush1.bf16.msra.mxu0 0
  %315 = vmatprep.subr.bf16.mxu0 0
  %316 = vmatpush1.bf16.msra.mxu0 0
  %317 = vmatprep.subr.bf16.mxu0 0
  %318 = vmatpush1.bf16.msra.mxu0 0
  %319 = vmatprep.subr.bf16.mxu0 0
  %320 = vmatpush1.bf16.msra.mxu0 0
  %321 = vmatprep.subr.bf16.mxu0 0
  %322 = vmatpush1.bf16.msra.mxu0 0
  %323 = vmatprep.subr.bf16.mxu0 0
  %324 = vmatpush1.bf16.msra.mxu0 0
  %325 = vmatprep.subr.bf16.mxu0 0
  %326 = vmatpush1.bf16.msra.mxu0 0
  %327 = vmatprep.mubr.bf16.mxu0 0
  %328 = vmatmul.mubr.bf16.gmra.mrb[0].mxu0 %v196
  %v329 = vpop.f32.mrb[0].mxu0
  %v330 = vadd.f32 %v192, %v329
  %v331 = vpop.f32.mrb[0].mxu0
  %v332 = vpop.f32.mrb[0].mxu0
  %v333 = vadd.f32 %v192, %v332
  %v334 = vpop.f32.mrb[0].mxu0
  %335 = vmatprep.mubr.bf16.mxu0 0
  %336 = vmatmul.mubr.bf16.gmra.mrb[0].mxu0 %v199
  %v337 = vpop.f32.mrb[0].mxu0
  %v338 = vadd.f32 %v192, %v337
  %v339 = vpop.f32.mrb[0].mxu0
  %v340 = vpop.f32.mrb[0].mxu0
  %v341 = vadd.f32 %v192, %v340
  %v342 = vpop.f32.mrb[0].mxu0
  %343 = vmatprep.mubr.bf16.mxu0 0
  %344 = vmatmul.mubr.bf16.gmra.mrb[0].mxu0 %v202
  %v345 = vpop.f32.mrb[0].mxu0
  %v346 = vadd.f32 %v192, %v345
  %v347 = vpop.f32.mrb[0].mxu0
  %v348 = vpop.f32.mrb[0].mxu0
  %v349 = vadd.f32 %v192, %v348
  %v350 = vpop.f32.mrb[0].mxu0
  %351 = vmatprep.mubr.bf16.mxu0 0
  %352 = vmatmul.mubr.bf16.gmra.mrb[0].mxu0 %v205
  %v353 = vpop.f32.mrb[0].mxu0
  %v354 = vadd.f32 %v192, %v353
  %v355 = vpop.f32.mrb[0].mxu0
  %v356 = vpop.f32.mrb[0].mxu0
  %v357 = vadd.f32 %v192, %v356
  %v358 = vpop.f32.mrb[0].mxu0
  %359 = vmatprep.mubr.bf16.mxu0 0
  %360 = vmatmul.mubr.bf16.gmra.mrb[0].mxu0 %v208
  %v361 = vpop.f32.mrb[0].mxu0
  %v362 = vadd.f32 %v192, %v361
  %v363 = vpop.f32.mrb[0].mxu0
  %v364 = vpop.f32.mrb[0].mxu0
  %v365 = vadd.f32 %v192, %v364
  %v366 = vpop.f32.mrb[0].mxu0
  %367 = vmatprep.mubr.bf16.mxu0 0
  %368 = vmatmul.mubr.bf16.gmra.mrb[0].mxu0 %v211
  %v369 = vpop.f32.mrb[0].mxu0
  %v370 = vadd.f32 %v192, %v369
  %v371 = vpop.f32.mrb[0].mxu0
  %v372 = vpop.f32.mrb[0].mxu0
  %v373 = vadd.f32 %v192, %v372
  %v374 = vpop.f32.mrb[0].mxu0
  %375 = vmatprep.mubr.bf16.mxu0 0
  %376 = vmatmul.mubr.bf16.gmra.mrb[0].mxu0 %v214
  %v377 = vpop.f32.mrb[0].mxu0
  %v378 = vadd.f32 %v192, %v377
  %v379 = vpop.f32.mrb[0].mxu0
  %v380 = vpop.f32.mrb[0].mxu0
  %v381 = vadd.f32 %v192, %v380
  %v382 = vpop.f32.mrb[0].mxu0
  %383 = vmatprep.mubr.bf16.mxu0 0
  %384 = vmatmul.mubr.bf16.gmra.mrb[0].mxu0 %v217
  %v385 = vpop.f32.mrb[0].mxu0
  %v386 = vadd.f32 %v192, %v385
  %v387 = vpop.f32.mrb[0].mxu0
  %v388 = vpop.f32.mrb[0].mxu0
  %v389 = vadd.f32 %v192, %v388
  %v390 = vpop.f32.mrb[0].mxu0
  %391 = vmatprep.mubr.bf16.mxu0 0
  %392 = vmatmul.mubr.bf16.gmra.mrb[0].mxu0 %v220
  %v393 = vpop.f32.mrb[0].mxu0
  %v394 = vadd.f32 %v192, %v393
  %v395 = vpop.f32.mrb[0].mxu0
  %v396 = vpop.f32.mrb[0].mxu0
  %v397 = vadd.f32 %v192, %v396
  %v398 = vpop.f32.mrb[0].mxu0
  %399 = vmatprep.mubr.bf16.mxu0 0
  %400 = vmatmul.mubr.bf16.gmra.mrb[0].mxu0 %v223
  %v401 = vpop.f32.mrb[0].mxu0
  %v402 = vadd.f32 %v192, %v401
  %v403 = vpop.f32.mrb[0].mxu0
  %v404 = vpop.f32.mrb[0].mxu0
  %v405 = vadd.f32 %v192, %v404
  %v406 = vpop.f32.mrb[0].mxu0
  %407 = vmatprep.mubr.bf16.mxu0 0
  %408 = vmatmul.mubr.bf16.gmra.mrb[0].mxu0 %v226
  %v409 = vpop.f32.mrb[0].mxu0
  %v410 = vadd.f32 %v192, %v409
  %v411 = vpop.f32.mrb[0].mxu0
  %v412 = vpop.f32.mrb[0].mxu0
  %v413 = vadd.f32 %v192, %v412
  %v414 = vpop.f32.mrb[0].mxu0
  %415 = vmatprep.mubr.bf16.mxu0 0
  %416 = vmatmul.mubr.bf16.gmra.mrb[0].mxu0 %v229
  %v417 = vpop.f32.mrb[0].mxu0
  %v418 = vadd.f32 %v192, %v417
  %v419 = vpop.f32.mrb[0].mxu0
  %v420 = vpop.f32.mrb[0].mxu0
  %v421 = vadd.f32 %v192, %v420
  %v422 = vpop.f32.mrb[0].mxu0
  %423 = vmatprep.mubr.bf16.mxu0 0
  %424 = vmatmul.mubr.bf16.gmra.mrb[0].mxu0 %v232
  %v425 = vpop.f32.mrb[0].mxu0
  %v426 = vadd.f32 %v192, %v425
  %v427 = vpop.f32.mrb[0].mxu0
  %v428 = vpop.f32.mrb[0].mxu0
  %v429 = vadd.f32 %v192, %v428
  %v430 = vpop.f32.mrb[0].mxu0
  %431 = vmatprep.mubr.bf16.mxu0 0
  %432 = vmatmul.mubr.bf16.gmra.mrb[0].mxu0 %v235
  %v433 = vpop.f32.mrb[0].mxu0
  %v434 = vadd.f32 %v192, %v433
  %v435 = vpop.f32.mrb[0].mxu0
  %v436 = vpop.f32.mrb[0].mxu0
  %v437 = vadd.f32 %v192, %v436
  %v438 = vpop.f32.mrb[0].mxu0
  %439 = vmatprep.mubr.bf16.mxu0 0
  %440 = vmatmul.mubr.bf16.gmra.mrb[0].mxu0 %v238
  %v441 = vpop.f32.mrb[0].mxu0
  %v442 = vadd.f32 %v192, %v441
  %v443 = vpop.f32.mrb[0].mxu0
  %v444 = vpop.f32.mrb[0].mxu0
  %v445 = vadd.f32 %v192, %v444
  %v446 = vpop.f32.mrb[0].mxu0
  %447 = vmatprep.mubr.bf16.mxu0 0
  %448 = vmatmul.mubr.bf16.gmra.mrb[0].mxu0 %v241
  %v449 = vpop.f32.mrb[0].mxu0
  %v450 = vadd.f32 %v192, %v449
  %v451 = vpop.f32.mrb[0].mxu0
  %v452 = vpop.f32.mrb[0].mxu0
  %v453 = vadd.f32 %v192, %v452
  %v454 = vpop.f32.mrb[0].mxu0
  %455 = vmatprep.mubr.bf16.mxu0 0
  %456 = vmatmul.mubr.bf16.gmra.mrb[0].mxu0 %v244
  %v457 = vpop.f32.mrb[0].mxu0
  %v458 = vadd.f32 %v192, %v457
  %v459 = vpop.f32.mrb[0].mxu0
  %v460 = vpop.f32.mrb[0].mxu0
  %v461 = vadd.f32 %v192, %v460
  %v462 = vpop.f32.mrb[0].mxu0
  %463 = vmatprep.mubr.bf16.mxu0 0
  %464 = vmatmul.mubr.bf16.gmra.mrb[0].mxu0 %v247
  %v465 = vpop.f32.mrb[0].mxu0
  %v466 = vadd.f32 %v192, %v465
  %v467 = vpop.f32.mrb[0].mxu0
  %v468 = vpop.f32.mrb[0].mxu0
  %v469 = vadd.f32 %v192, %v468
  %v470 = vpop.f32.mrb[0].mxu0
  %471 = vmatprep.mubr.bf16.mxu0 0
  %472 = vmatmul.mubr.bf16.gmra.mrb[0].mxu0 %v250
  %v473 = vpop.f32.mrb[0].mxu0
  %v474 = vadd.f32 %v192, %v473
  %v475 = vpop.f32.mrb[0].mxu0
  %v476 = vpop.f32.mrb[0].mxu0
  %v477 = vadd.f32 %v192, %v476
  %v478 = vpop.f32.mrb[0].mxu0
  %479 = vmatprep.mubr.bf16.mxu0 0
  %480 = vmatmul.mubr.bf16.gmra.mrb[0].mxu0 %v253
  %v481 = vpop.f32.mrb[0].mxu0
  %v482 = vadd.f32 %v192, %v481
  %v483 = vpop.f32.mrb[0].mxu0
  %v484 = vpop.f32.mrb[0].mxu0
  %v485 = vadd.f32 %v192, %v484
  %v486 = vpop.f32.mrb[0].mxu0
  %487 = vmatprep.mubr.bf16.mxu0 0
  %488 = vmatmul.mubr.bf16.gmra.mrb[0].mxu0 %v256
  %v489 = vpop.f32.mrb[0].mxu0
  %v490 = vadd.f32 %v192, %v489
  %v491 = vpop.f32.mrb[0].mxu0
  %v492 = vpop.f32.mrb[0].mxu0
  %v493 = vadd.f32 %v192, %v492
  %v494 = vpop.f32.mrb[0].mxu0
  %495 = vmatprep.mubr.bf16.mxu0 0
  %496 = vmatmul.mubr.bf16.gmra.mrb[0].mxu0 %v259
  %v497 = vpop.f32.mrb[0].mxu0
  %v498 = vadd.f32 %v192, %v497
  %v499 = vpop.f32.mrb[0].mxu0
  %v500 = vpop.f32.mrb[0].mxu0
  %v501 = vadd.f32 %v192, %v500
  %v502 = vpop.f32.mrb[0].mxu0
  %503 = vmatprep.mubr.bf16.mxu0 0
  %504 = vmatmul.mubr.bf16.gmra.mrb[0].mxu0 %v262
  %v505 = vpop.f32.mrb[0].mxu0
  %v506 = vadd.f32 %v192, %v505
  %v507 = vpop.f32.mrb[0].mxu0
  %v508 = vpop.f32.mrb[0].mxu0
  %v509 = vadd.f32 %v192, %v508
  %v510 = vpop.f32.mrb[0].mxu0
  %511 = vmatprep.mubr.bf16.mxu0 0
  %512 = vmatmul.mubr.bf16.gmra.mrb[0].mxu0 %v265
  %v513 = vpop.f32.mrb[0].mxu0
  %v514 = vadd.f32 %v192, %v513
  %v515 = vpop.f32.mrb[0].mxu0
  %v516 = vpop.f32.mrb[0].mxu0
  %v517 = vadd.f32 %v192, %v516
  %v518 = vpop.f32.mrb[0].mxu0
  %519 = vmatprep.mubr.bf16.mxu0 0
  %520 = vmatmul.mubr.bf16.gmra.mrb[0].mxu0 %v268
  %v521 = vpop.f32.mrb[0].mxu0
  %v522 = vadd.f32 %v192, %v521
  %v523 = vpop.f32.mrb[0].mxu0
  %v524 = vpop.f32.mrb[0].mxu0
  %v525 = vadd.f32 %v192, %v524
  %v526 = vpop.f32.mrb[0].mxu0
  %527 = vmatprep.mubr.bf16.mxu0 0
  %528 = vmatmul.mubr.bf16.gmra.mrb[0].mxu0 %v271
  %v529 = vpop.f32.mrb[0].mxu0
  %v530 = vadd.f32 %v192, %v529
  %v531 = vpop.f32.mrb[0].mxu0
  %v532 = vpop.f32.mrb[0].mxu0
  %v533 = vadd.f32 %v192, %v532
  %v534 = vpop.f32.mrb[0].mxu0
  %535 = vmatprep.mubr.bf16.mxu0 0
  %536 = vmatmul.mubr.bf16.gmra.mrb[0].mxu0 %v274
  %v537 = vpop.f32.mrb[0].mxu0
  %v538 = vadd.f32 %v192, %v537
  %v539 = vpop.f32.mrb[0].mxu0
  %v540 = vpop.f32.mrb[0].mxu0
  %v541 = vadd.f32 %v192, %v540
  %v542 = vpop.f32.mrb[0].mxu0
  %543 = vmatprep.mubr.bf16.mxu0 0
  %544 = vmatmul.mubr.bf16.gmra.mrb[0].mxu0 %v277
  %v545 = vpop.f32.mrb[0].mxu0
  %v546 = vadd.f32 %v192, %v545
  %v547 = vpop.f32.mrb[0].mxu0
  %v548 = vpop.f32.mrb[0].mxu0
  %v549 = vadd.f32 %v192, %v548
  %v550 = vpop.f32.mrb[0].mxu0
  %551 = vmatprep.mubr.bf16.mxu0 0
  %552 = vmatmul.mubr.bf16.gmra.mrb[0].mxu0 %v280
  %v553 = vpop.f32.mrb[0].mxu0
  %v554 = vadd.f32 %v192, %v553
  %v555 = vpop.f32.mrb[0].mxu0
  %v556 = vpop.f32.mrb[0].mxu0
  %v557 = vadd.f32 %v192, %v556
  %v558 = vpop.f32.mrb[0].mxu0
  %559 = vmatprep.mubr.bf16.mxu0 0
  %560 = vmatmul.mubr.bf16.gmra.mrb[0].mxu0 %v283
  %v561 = vpop.f32.mrb[0].mxu0
  %v562 = vadd.f32 %v192, %v561
  %v563 = vpop.f32.mrb[0].mxu0
  %v564 = vpop.f32.mrb[0].mxu0
  %v565 = vadd.f32 %v192, %v564
  %v566 = vpop.f32.mrb[0].mxu0
  %567 = vmatprep.mubr.bf16.mxu0 0
  %568 = vmatmul.mubr.bf16.gmra.mrb[0].mxu0 %v286
  %v569 = vpop.f32.mrb[0].mxu0
  %v570 = vadd.f32 %v192, %v569
  %v571 = vpop.f32.mrb[0].mxu0
  %v572 = vpop.f32.mrb[0].mxu0
  %v573 = vadd.f32 %v192, %v572
  %v574 = vpop.f32.mrb[0].mxu0
  %575 = vmatprep.mubr.bf16.mxu0 0
  %576 = vmatmul.mubr.bf16.gmra.mrb[0].mxu0 %v289
  %v577 = vpop.f32.mrb[0].mxu0
  %v578 = vadd.f32 %v192, %v577
  %v579 = vpop.f32.mrb[0].mxu0
  %v580 = vpop.f32.mrb[0].mxu0
  %v581 = vadd.f32 %v192, %v580
  %v582 = vpop.f32.mrb[0].mxu0
  %583 = vdwg.mxu0
  %v584 = vmax.f32 %v330, 0.0
  %v585 = vmax.f32 %v333, 0.0
  %v586 = vmax.f32 %v338, 0.0
  %v587 = vmax.f32 %v341, 0.0
  %v588 = vmax.f32 %v346, 0.0
  %v589 = vmax.f32 %v349, 0.0
  %v590 = vmax.f32 %v354, 0.0
  %v591 = vmax.f32 %v357, 0.0
  %v592 = vmax.f32 %v362, 0.0
  %v593 = vmax.f32 %v365, 0.0
  %v594 = vmax.f32 %v370, 0.0
  %v595 = vmax.f32 %v373, 0.0
  %v596 = vmax.f32 %v378, 0.0
  %v597 = vmax.f32 %v381, 0.0
  %v598 = vmax.f32 %v386, 0.0
  %v599 = vmax.f32 %v389, 0.0
  %v600 = vmax.f32 %v394, 0.0
  %v601 = vmax.f32 %v397, 0.0
  %v602 = vmax.f32 %v402, 0.0
  %v603 = vmax.f32 %v405, 0.0
  %v604 = vmax.f32 %v410, 0.0
  %v605 = vmax.f32 %v413, 0.0
  %v606 = vmax.f32 %v418, 0.0
  %v607 = vmax.f32 %v421, 0.0
  %v608 = vmax.f32 %v426, 0.0
  %v609 = vmax.f32 %v429, 0.0
  %v610 = vmax.f32 %v434, 0.0
  %v611 = vmax.f32 %v437, 0.0
  %v612 = vmax.f32 %v442, 0.0
  %v613 = vmax.f32 %v445, 0.0
  %v614 = vmax.f32 %v450, 0.0
  %v615 = vmax.f32 %v453, 0.0
  %v616 = vmax.f32 %v458, 0.0
  %v617 = vmax.f32 %v461, 0.0
  %v618 = vmax.f32 %v466, 0.0
  %v619 = vmax.f32 %v469, 0.0
  %v620 = vmax.f32 %v474, 0.0
  %v621 = vmax.f32 %v477, 0.0
  %v622 = vmax.f32 %v482, 0.0
  %v623 = vmax.f32 %v485, 0.0
  %v624 = vmax.f32 %v490, 0.0
  %v625 = vmax.f32 %v493, 0.0
  %v626 = vmax.f32 %v498, 0.0
  %v627 = vmax.f32 %v501, 0.0
  %v628 = vmax.f32 %v506, 0.0
  %v629 = vmax.f32 %v509, 0.0
  %v630 = vmax.f32 %v514, 0.0
  %v631 = vmax.f32 %v517, 0.0
  %v632 = vmax.f32 %v522, 0.0
  %v633 = vmax.f32 %v525, 0.0
  %v634 = vmax.f32 %v530, 0.0
  %v635 = vmax.f32 %v533, 0.0
  %v636 = vmax.f32 %v538, 0.0
  %v637 = vmax.f32 %v541, 0.0
  %v638 = vmax.f32 %v546, 0.0
  %v639 = vmax.f32 %v549, 0.0
  %v640 = vmax.f32 %v554, 0.0
  %v641 = vmax.f32 %v557, 0.0
  %v642 = vmax.f32 %v562, 0.0
  %v643 = vmax.f32 %v565, 0.0
  %v644 = vmax.f32 %v570, 0.0
  %v645 = vmax.f32 %v573, 0.0
  %v646 = vmax.f32 %v578, 0.0
  %v647 = vmax.f32 %v581, 0.0
  %v648 = vld [vmem:[#allocation2] sm:$0xff]
  %v649 = vld [vmem:[#allocation2 + $0x8] sm:$0xff]
  %v650 = vld [vmem:[#allocation2 + $0x10] sm:$0xff]
  %v651 = vld [vmem:[#allocation2 + $0x18] sm:$0xff]
  %v652 = vld [vmem:[#allocation2 + $0x20] sm:$0xff]
  %v653 = vld [vmem:[#allocation2 + $0x28] sm:$0xff]
  %v654 = vld [vmem:[#allocation2 + $0x30] sm:$0xff]
  %v655 = vld [vmem:[#allocation2 + $0x38] sm:$0xff]
  %v656 = vld [vmem:[#allocation2 + $0x40] sm:$0xff]
  %v657 = vld [vmem:[#allocation2 + $0x48] sm:$0xff]
  %v658 = vld [vmem:[#allocation2 + $0x50] sm:$0xff]
  %v659 = vld [vmem:[#allocation2 + $0x58] sm:$0xff]
  %v660 = vld [vmem:[#allocation2 + $0x60] sm:$0xff]
  %v661 = vld [vmem:[#allocation2 + $0x68] sm:$0xff]
  %v662 = vld [vmem:[#allocation2 + $0x70] sm:$0xff]
  %v663 = vld [vmem:[#allocation2 + $0x78] sm:$0xff]
  %v664 = vld [vmem:[#allocation2 + $0x80] sm:$0xff]
  %v665 = vld [vmem:[#allocation2 + $0x88] sm:$0xff]
  %v666 = vld [vmem:[#allocation2 + $0x90] sm:$0xff]
  %v667 = vld [vmem:[#allocation2 + $0x98] sm:$0xff]
  %v668 = vld [vmem:[#allocation2 + $0xa0] sm:$0xff]
  %v669 = vld [vmem:[#allocation2 + $0xa8] sm:$0xff]
  %v670 = vld [vmem:[#allocation2 + $0xb0] sm:$0xff]
  %v671 = vld [vmem:[#allocation2 + $0xb8] sm:$0xff]
  %v672 = vld [vmem:[#allocation2 + $0xc0] sm:$0xff]
  %v673 = vld [vmem:[#allocation2 + $0xc8] sm:$0xff]
  %v674 = vld [vmem:[#allocation2 + $0xd0] sm:$0xff]
  %v675 = vld [vmem:[#allocation2 + $0xd8] sm:$0xff]
  %v676 = vld [vmem:[#allocation2 + $0xe0] sm:$0xff]
  %v677 = vld [vmem:[#allocation2 + $0xe8] sm:$0xff]
  %v678 = vld [vmem:[#allocation2 + $0xf0] sm:$0xff]
  %v679 = vld [vmem:[#allocation2 + $0xf8] sm:$0xff]
  %v680 = vld [vmem:[#allocation2 + $0x100] sm:$0xff]
  %v681 = vld [vmem:[#allocation2 + $0x108] sm:$0xff]
  %v682 = vld [vmem:[#allocation2 + $0x110] sm:$0xff]
  %v683 = vld [vmem:[#allocation2 + $0x118] sm:$0xff]
  %v684 = vld [vmem:[#allocation2 + $0x120] sm:$0xff]
  %v685 = vld [vmem:[#allocation2 + $0x128] sm:$0xff]
  %v686 = vld [vmem:[#allocation2 + $0x130] sm:$0xff]
  %v687 = vld [vmem:[#allocation2 + $0x138] sm:$0xff]
  %v688 = vld [vmem:[#allocation2 + $0x140] sm:$0xff]
  %v689 = vld [vmem:[#allocation2 + $0x148] sm:$0xff]
  %v690 = vld [vmem:[#allocation2 + $0x150] sm:$0xff]
  %v691 = vld [vmem:[#allocation2 + $0x158] sm:$0xff]
  %v692 = vld [vmem:[#allocation2 + $0x160] sm:$0xff]
  %v693 = vld [vmem:[#allocation2 + $0x168] sm:$0xff]
  %v694 = vld [vmem:[#allocation2 + $0x170] sm:$0xff]
  %v695 = vld [vmem:[#allocation2 + $0x178] sm:$0xff]
  %v696 = vld [vmem:[#allocation2 + $0x180] sm:$0xff]
  %v697 = vld [vmem:[#allocation2 + $0x188] sm:$0xff]
  %v698 = vld [vmem:[#allocation2 + $0x190] sm:$0xff]
  %v699 = vld [vmem:[#allocation2 + $0x198] sm:$0xff]
  %v700 = vld [vmem:[#allocation2 + $0x1a0] sm:$0xff]
  %v701 = vld [vmem:[#allocation2 + $0x1a8] sm:$0xff]
  %v702 = vld [vmem:[#allocation2 + $0x1b0] sm:$0xff]
  %v703 = vld [vmem:[#allocation2 + $0x1b8] sm:$0xff]
  %v704 = vld [vmem:[#allocation2 + $0x1c0] sm:$0xff]
  %v705 = vld [vmem:[#allocation2 + $0x1c8] sm:$0xff]
  %v706 = vld [vmem:[#allocation2 + $0x1d0] sm:$0xff]
  %v707 = vld [vmem:[#allocation2 + $0x1d8] sm:$0xff]
  %v708 = vld [vmem:[#allocation2 + $0x1e0] sm:$0xff]
  %v709 = vld [vmem:[#allocation2 + $0x1e8] sm:$0xff]
  %v710 = vld [vmem:[#allocation2 + $0x1f0] sm:$0xff]
  %v711 = vld [vmem:[#allocation2 + $0x1f8] sm:$0xff]
  %v712 = vpack.c.bf16 %v585, %v584
  %v713 = vpack.c.bf16 %v587, %v586
  %v714 = vpack.c.bf16 %v589, %v588
  %v715 = vpack.c.bf16 %v591, %v590
  %v716 = vpack.c.bf16 %v593, %v592
  %v717 = vpack.c.bf16 %v595, %v594
  %v718 = vpack.c.bf16 %v597, %v596
  %v719 = vpack.c.bf16 %v599, %v598
  %v720 = vpack.c.bf16 %v601, %v600
  %v721 = vpack.c.bf16 %v603, %v602
  %v722 = vpack.c.bf16 %v605, %v604
  %v723 = vpack.c.bf16 %v607, %v606
  %v724 = vpack.c.bf16 %v609, %v608
  %v725 = vpack.c.bf16 %v611, %v610
  %v726 = vpack.c.bf16 %v613, %v612
  %v727 = vpack.c.bf16 %v615, %v614
  %v728 = vpack.c.bf16 %v617, %v616
  %v729 = vpack.c.bf16 %v619, %v618
  %v730 = vpack.c.bf16 %v621, %v620
  %v731 = vpack.c.bf16 %v623, %v622
  %v732 = vpack.c.bf16 %v625, %v624
  %v733 = vpack.c.bf16 %v627, %v626
  %v734 = vpack.c.bf16 %v629, %v628
  %v735 = vpack.c.bf16 %v631, %v630
  %v736 = vpack.c.bf16 %v633, %v632
  %v737 = vpack.c.bf16 %v635, %v634
  %v738 = vpack.c.bf16 %v637, %v636
  %v739 = vpack.c.bf16 %v639, %v638
  %v740 = vpack.c.bf16 %v641, %v640
  %v741 = vpack.c.bf16 %v643, %v642
  %v742 = vpack.c.bf16 %v645, %v644
  %v743 = vpack.c.bf16 %v647, %v646
  %v744 = vld [vmem:[%s3] sm:$0xf]
  %v745 = vld [vmem:[%s3 + $0x4] sm:$0xf]
  %v746 = vld [vmem:[%s3 + $0x8] sm:$0xf]
  %v747 = vld [vmem:[%s3 + $0xc] sm:$0xf]
  %v752 = vunpack.c.l.b16 %v744
  %v753 = vunpack.c.l.b16 %v745
  %v754 = vunpack.c.l.b16 %v746
  %v755 = vunpack.c.l.b16 %v747
  %v756 = vpack.c.b16 %v753, %v752
  %v757 = vpack.c.b16 %v755, %v754
  %vm760 = vcmask 261120
  %v762 = vsel %vm760, %v712, 0
  %v765 = vsel %vm760, %v713, 0
  %v768 = vsel %vm760, %v714, 0
  %v771 = vsel %vm760, %v715, 0
  %v774 = vsel %vm760, %v716, 0
  %v777 = vsel %vm760, %v717, 0
  %v780 = vsel %vm760, %v718, 0
  %v783 = vsel %vm760, %v719, 0
  %v786 = vsel %vm760, %v720, 0
  %v789 = vsel %vm760, %v721, 0
  %v792 = vsel %vm760, %v722, 0
  %v795 = vsel %vm760, %v723, 0
  %v798 = vsel %vm760, %v724, 0
  %v801 = vsel %vm760, %v725, 0
  %v804 = vsel %vm760, %v726, 0
  %v807 = vsel %vm760, %v727, 0
  %v810 = vsel %vm760, %v728, 0
  %v813 = vsel %vm760, %v729, 0
  %v816 = vsel %vm760, %v730, 0
  %v819 = vsel %vm760, %v731, 0
  %v822 = vsel %vm760, %v732, 0
  %v825 = vsel %vm760, %v733, 0
  %v828 = vsel %vm760, %v734, 0
  %v831 = vsel %vm760, %v735, 0
  %v834 = vsel %vm760, %v736, 0
  %v837 = vsel %vm760, %v737, 0
  %v840 = vsel %vm760, %v738, 0
  %v843 = vsel %vm760, %v739, 0
  %v846 = vsel %vm760, %v740, 0
  %v849 = vsel %vm760, %v741, 0
  %v852 = vsel %vm760, %v742, 0
  %v855 = vsel %vm760, %v743, 0
  %857 = vmatprep.subr.bf16.mxu0 0
  %858 = vmatpush1.bf16.msra.mxu0 %v756
  %859 = vmatprep.subr.bf16.mxu0 0
  %860 = vmatpush1.bf16.msra.mxu0 %v757
  %861 = vmatprep.subr.bf16.mxu0 0
  %862 = vmatpush1.bf16.msra.mxu0 0
  %863 = vmatprep.subr.bf16.mxu0 0
  %864 = vmatpush1.bf16.msra.mxu0 0
  %865 = vmatprep.subr.bf16.mxu0 0
  %866 = vmatpush1.bf16.msra.mxu0 0
  %867 = vmatprep.subr.bf16.mxu0 0
  %868 = vmatpush1.bf16.msra.mxu0 0
  %869 = vmatprep.subr.bf16.mxu0 0
  %870 = vmatpush1.bf16.msra.mxu0 0
  %871 = vmatprep.subr.bf16.mxu0 0
  %872 = vmatpush1.bf16.msra.mxu0 0
  %873 = vmatprep.subr.bf16.mxu0 0
  %874 = vmatpush1.bf16.msra.mxu0 0
  %875 = vmatprep.subr.bf16.mxu0 0
  %876 = vmatpush1.bf16.msra.mxu0 0
  %877 = vmatprep.subr.bf16.mxu0 0
  %878 = vmatpush1.bf16.msra.mxu0 0
  %879 = vmatprep.subr.bf16.mxu0 0
  %880 = vmatpush1.bf16.msra.mxu0 0
  %881 = vmatprep.subr.bf16.mxu0 0
  %882 = vmatpush1.bf16.msra.mxu0 0
  %883 = vmatprep.subr.bf16.mxu0 0
  %884 = vmatpush1.bf16.msra.mxu0 0
  %885 = vmatprep.subr.bf16.mxu0 0
  %886 = vmatpush1.bf16.msra.mxu0 0
  %887 = vmatprep.subr.bf16.mxu0 0
  %888 = vmatpush1.bf16.msra.mxu0 0
  %889 = vmatprep.mubr.bf16.mxu0 0
  %890 = vmatmul.mubr.bf16.gmra.mrb[0].mxu0 %v762
  %v891 = vpop.f32.mrb[0].mxu0
  %v892 = vadd.f32 0.0, %v891
  %v893 = vpop.f32.mrb[0].mxu0
  %v894 = vpop.f32.mrb[0].mxu0
  %v895 = vadd.f32 0.0, %v894
  %v896 = vpop.f32.mrb[0].mxu0
  %897 = vmatprep.mubr.bf16.mxu0 0
  %898 = vmatmul.mubr.bf16.gmra.mrb[0].mxu0 %v765
  %v899 = vpop.f32.mrb[0].mxu0
  %v900 = vadd.f32 0.0, %v899
  %v901 = vpop.f32.mrb[0].mxu0
  %v902 = vpop.f32.mrb[0].mxu0
  %v903 = vadd.f32 0.0, %v902
  %v904 = vpop.f32.mrb[0].mxu0
  %905 = vmatprep.mubr.bf16.mxu0 0
  %906 = vmatmul.mubr.bf16.gmra.mrb[0].mxu0 %v768
  %v907 = vpop.f32.mrb[0].mxu0
  %v908 = vadd.f32 0.0, %v907
  %v909 = vpop.f32.mrb[0].mxu0
  %v910 = vpop.f32.mrb[0].mxu0
  %v911 = vadd.f32 0.0, %v910
  %v912 = vpop.f32.mrb[0].mxu0
  %913 = vmatprep.mubr.bf16.mxu0 0
  %914 = vmatmul.mubr.bf16.gmra.mrb[0].mxu0 %v771
  %v915 = vpop.f32.mrb[0].mxu0
  %v916 = vadd.f32 0.0, %v915
  %v917 = vpop.f32.mrb[0].mxu0
  %v918 = vpop.f32.mrb[0].mxu0
  %v919 = vadd.f32 0.0, %v918
  %v920 = vpop.f32.mrb[0].mxu0
  %921 = vmatprep.mubr.bf16.mxu0 0
  %922 = vmatmul.mubr.bf16.gmra.mrb[0].mxu0 %v774
  %v923 = vpop.f32.mrb[0].mxu0
  %v924 = vadd.f32 0.0, %v923
  %v925 = vpop.f32.mrb[0].mxu0
  %v926 = vpop.f32.mrb[0].mxu0
  %v927 = vadd.f32 0.0, %v926
  %v928 = vpop.f32.mrb[0].mxu0
  %929 = vmatprep.mubr.bf16.mxu0 0
  %930 = vmatmul.mubr.bf16.gmra.mrb[0].mxu0 %v777
  %v931 = vpop.f32.mrb[0].mxu0
  %v932 = vadd.f32 0.0, %v931
  %v933 = vpop.f32.mrb[0].mxu0
  %v934 = vpop.f32.mrb[0].mxu0
  %v935 = vadd.f32 0.0, %v934
  %v936 = vpop.f32.mrb[0].mxu0
  %937 = vmatprep.mubr.bf16.mxu0 0
  %938 = vmatmul.mubr.bf16.gmra.mrb[0].mxu0 %v780
  %v939 = vpop.f32.mrb[0].mxu0
  %v940 = vadd.f32 0.0, %v939
  %v941 = vpop.f32.mrb[0].mxu0
  %v942 = vpop.f32.mrb[0].mxu0
  %v943 = vadd.f32 0.0, %v942
  %v944 = vpop.f32.mrb[0].mxu0
  %945 = vmatprep.mubr.bf16.mxu0 0
  %946 = vmatmul.mubr.bf16.gmra.mrb[0].mxu0 %v783
  %v947 = vpop.f32.mrb[0].mxu0
  %v948 = vadd.f32 0.0, %v947
  %v949 = vpop.f32.mrb[0].mxu0
  %v950 = vpop.f32.mrb[0].mxu0
  %v951 = vadd.f32 0.0, %v950
  %v952 = vpop.f32.mrb[0].mxu0
  %953 = vmatprep.mubr.bf16.mxu0 0
  %954 = vmatmul.mubr.bf16.gmra.mrb[0].mxu0 %v786
  %v955 = vpop.f32.mrb[0].mxu0
  %v956 = vadd.f32 0.0, %v955
  %v957 = vpop.f32.mrb[0].mxu0
  %v958 = vpop.f32.mrb[0].mxu0
  %v959 = vadd.f32 0.0, %v958
  %v960 = vpop.f32.mrb[0].mxu0
  %961 = vmatprep.mubr.bf16.mxu0 0
  %962 = vmatmul.mubr.bf16.gmra.mrb[0].mxu0 %v789
  %v963 = vpop.f32.mrb[0].mxu0
  %v964 = vadd.f32 0.0, %v963
  %v965 = vpop.f32.mrb[0].mxu0
  %v966 = vpop.f32.mrb[0].mxu0
  %v967 = vadd.f32 0.0, %v966
  %v968 = vpop.f32.mrb[0].mxu0
  %969 = vmatprep.mubr.bf16.mxu0 0
  %970 = vmatmul.mubr.bf16.gmra.mrb[0].mxu0 %v792
  %v971 = vpop.f32.mrb[0].mxu0
  %v972 = vadd.f32 0.0, %v971
  %v973 = vpop.f32.mrb[0].mxu0
  %v974 = vpop.f32.mrb[0].mxu0
  %v975 = vadd.f32 0.0, %v974
  %v976 = vpop.f32.mrb[0].mxu0
  %977 = vmatprep.mubr.bf16.mxu0 0
  %978 = vmatmul.mubr.bf16.gmra.mrb[0].mxu0 %v795
  %v979 = vpop.f32.mrb[0].mxu0
  %v980 = vadd.f32 0.0, %v979
  %v981 = vpop.f32.mrb[0].mxu0
  %v982 = vpop.f32.mrb[0].mxu0
  %v983 = vadd.f32 0.0, %v982
  %v984 = vpop.f32.mrb[0].mxu0
  %985 = vmatprep.mubr.bf16.mxu0 0
  %986 = vmatmul.mubr.bf16.gmra.mrb[0].mxu0 %v798
  %v987 = vpop.f32.mrb[0].mxu0
  %v988 = vadd.f32 0.0, %v987
  %v989 = vpop.f32.mrb[0].mxu0
  %v990 = vpop.f32.mrb[0].mxu0
  %v991 = vadd.f32 0.0, %v990
  %v992 = vpop.f32.mrb[0].mxu0
  %993 = vmatprep.mubr.bf16.mxu0 0
  %994 = vmatmul.mubr.bf16.gmra.mrb[0].mxu0 %v801
  %v995 = vpop.f32.mrb[0].mxu0
  %v996 = vadd.f32 0.0, %v995
  %v997 = vpop.f32.mrb[0].mxu0
  %v998 = vpop.f32.mrb[0].mxu0
  %v999 = vadd.f32 0.0, %v998
  %v1000 = vpop.f32.mrb[0].mxu0
  %1001 = vmatprep.mubr.bf16.mxu0 0
  %1002 = vmatmul.mubr.bf16.gmra.mrb[0].mxu0 %v804
  %v1003 = vpop.f32.mrb[0].mxu0
  %v1004 = vadd.f32 0.0, %v1003
  %v1005 = vpop.f32.mrb[0].mxu0
  %v1006 = vpop.f32.mrb[0].mxu0
  %v1007 = vadd.f32 0.0, %v1006
  %v1008 = vpop.f32.mrb[0].mxu0
  %1009 = vmatprep.mubr.bf16.mxu0 0
  %1010 = vmatmul.mubr.bf16.gmra.mrb[0].mxu0 %v807
  %v1011 = vpop.f32.mrb[0].mxu0
  %v1012 = vadd.f32 0.0, %v1011
  %v1013 = vpop.f32.mrb[0].mxu0
  %v1014 = vpop.f32.mrb[0].mxu0
  %v1015 = vadd.f32 0.0, %v1014
  %v1016 = vpop.f32.mrb[0].mxu0
  %1017 = vmatprep.mubr.bf16.mxu0 0
  %1018 = vmatmul.mubr.bf16.gmra.mrb[0].mxu0 %v810
  %v1019 = vpop.f32.mrb[0].mxu0
  %v1020 = vadd.f32 0.0, %v1019
  %v1021 = vpop.f32.mrb[0].mxu0
  %v1022 = vpop.f32.mrb[0].mxu0
  %v1023 = vadd.f32 0.0, %v1022
  %v1024 = vpop.f32.mrb[0].mxu0
  %1025 = vmatprep.mubr.bf16.mxu0 0
  %1026 = vmatmul.mubr.bf16.gmra.mrb[0].mxu0 %v813
  %v1027 = vpop.f32.mrb[0].mxu0
  %v1028 = vadd.f32 0.0, %v1027
  %v1029 = vpop.f32.mrb[0].mxu0
  %v1030 = vpop.f32.mrb[0].mxu0
  %v1031 = vadd.f32 0.0, %v1030
  %v1032 = vpop.f32.mrb[0].mxu0
  %1033 = vmatprep.mubr.bf16.mxu0 0
  %1034 = vmatmul.mubr.bf16.gmra.mrb[0].mxu0 %v816
  %v1035 = vpop.f32.mrb[0].mxu0
  %v1036 = vadd.f32 0.0, %v1035
  %v1037 = vpop.f32.mrb[0].mxu0
  %v1038 = vpop.f32.mrb[0].mxu0
  %v1039 = vadd.f32 0.0, %v1038
  %v1040 = vpop.f32.mrb[0].mxu0
  %1041 = vmatprep.mubr.bf16.mxu0 0
  %1042 = vmatmul.mubr.bf16.gmra.mrb[0].mxu0 %v819
  %v1043 = vpop.f32.mrb[0].mxu0
  %v1044 = vadd.f32 0.0, %v1043
  %v1045 = vpop.f32.mrb[0].mxu0
  %v1046 = vpop.f32.mrb[0].mxu0
  %v1047 = vadd.f32 0.0, %v1046
  %v1048 = vpop.f32.mrb[0].mxu0
  %1049 = vmatprep.mubr.bf16.mxu0 0
  %1050 = vmatmul.mubr.bf16.gmra.mrb[0].mxu0 %v822
  %v1051 = vpop.f32.mrb[0].mxu0
  %v1052 = vadd.f32 0.0, %v1051
  %v1053 = vpop.f32.mrb[0].mxu0
  %v1054 = vpop.f32.mrb[0].mxu0
  %v1055 = vadd.f32 0.0, %v1054
  %v1056 = vpop.f32.mrb[0].mxu0
  %1057 = vmatprep.mubr.bf16.mxu0 0
  %1058 = vmatmul.mubr.bf16.gmra.mrb[0].mxu0 %v825
  %v1059 = vpop.f32.mrb[0].mxu0
  %v1060 = vadd.f32 0.0, %v1059
  %v1061 = vpop.f32.mrb[0].mxu0
  %v1062 = vpop.f32.mrb[0].mxu0
  %v1063 = vadd.f32 0.0, %v1062
  %v1064 = vpop.f32.mrb[0].mxu0
  %1065 = vmatprep.mubr.bf16.mxu0 0
  %1066 = vmatmul.mubr.bf16.gmra.mrb[0].mxu0 %v828
  %v1067 = vpop.f32.mrb[0].mxu0
  %v1068 = vadd.f32 0.0, %v1067
  %v1069 = vpop.f32.mrb[0].mxu0
  %v1070 = vpop.f32.mrb[0].mxu0
  %v1071 = vadd.f32 0.0, %v1070
  %v1072 = vpop.f32.mrb[0].mxu0
  %1073 = vmatprep.mubr.bf16.mxu0 0
  %1074 = vmatmul.mubr.bf16.gmra.mrb[0].mxu0 %v831
  %v1075 = vpop.f32.mrb[0].mxu0
  %v1076 = vadd.f32 0.0, %v1075
  %v1077 = vpop.f32.mrb[0].mxu0
  %v1078 = vpop.f32.mrb[0].mxu0
  %v1079 = vadd.f32 0.0, %v1078
  %v1080 = vpop.f32.mrb[0].mxu0
  %1081 = vmatprep.mubr.bf16.mxu0 0
  %1082 = vmatmul.mubr.bf16.gmra.mrb[0].mxu0 %v834
  %v1083 = vpop.f32.mrb[0].mxu0
  %v1084 = vadd.f32 0.0, %v1083
  %v1085 = vpop.f32.mrb[0].mxu0
  %v1086 = vpop.f32.mrb[0].mxu0
  %v1087 = vadd.f32 0.0, %v1086
  %v1088 = vpop.f32.mrb[0].mxu0
  %1089 = vmatprep.mubr.bf16.mxu0 0
  %1090 = vmatmul.mubr.bf16.gmra.mrb[0].mxu0 %v837
  %v1091 = vpop.f32.mrb[0].mxu0
  %v1092 = vadd.f32 0.0, %v1091
  %v1093 = vpop.f32.mrb[0].mxu0
  %v1094 = vpop.f32.mrb[0].mxu0
  %v1095 = vadd.f32 0.0, %v1094
  %v1096 = vpop.f32.mrb[0].mxu0
  %1097 = vmatprep.mubr.bf16.mxu0 0
  %1098 = vmatmul.mubr.bf16.gmra.mrb[0].mxu0 %v840
  %v1099 = vpop.f32.mrb[0].mxu0
  %v1100 = vadd.f32 0.0, %v1099
  %v1101 = vpop.f32.mrb[0].mxu0
  %v1102 = vpop.f32.mrb[0].mxu0
  %v1103 = vadd.f32 0.0, %v1102
  %v1104 = vpop.f32.mrb[0].mxu0
  %1105 = vmatprep.mubr.bf16.mxu0 0
  %1106 = vmatmul.mubr.bf16.gmra.mrb[0].mxu0 %v843
  %v1107 = vpop.f32.mrb[0].mxu0
  %v1108 = vadd.f32 0.0, %v1107
  %v1109 = vpop.f32.mrb[0].mxu0
  %v1110 = vpop.f32.mrb[0].mxu0
  %v1111 = vadd.f32 0.0, %v1110
  %v1112 = vpop.f32.mrb[0].mxu0
  %1113 = vmatprep.mubr.bf16.mxu0 0
  %1114 = vmatmul.mubr.bf16.gmra.mrb[0].mxu0 %v846
  %v1115 = vpop.f32.mrb[0].mxu0
  %v1116 = vadd.f32 0.0, %v1115
  %v1117 = vpop.f32.mrb[0].mxu0
  %v1118 = vpop.f32.mrb[0].mxu0
  %v1119 = vadd.f32 0.0, %v1118
  %v1120 = vpop.f32.mrb[0].mxu0
  %1121 = vmatprep.mubr.bf16.mxu0 0
  %1122 = vmatmul.mubr.bf16.gmra.mrb[0].mxu0 %v849
  %v1123 = vpop.f32.mrb[0].mxu0
  %v1124 = vadd.f32 0.0, %v1123
  %v1125 = vpop.f32.mrb[0].mxu0
  %v1126 = vpop.f32.mrb[0].mxu0
  %v1127 = vadd.f32 0.0, %v1126
  %v1128 = vpop.f32.mrb[0].mxu0
  %1129 = vmatprep.mubr.bf16.mxu0 0
  %1130 = vmatmul.mubr.bf16.gmra.mrb[0].mxu0 %v852
  %v1131 = vpop.f32.mrb[0].mxu0
  %v1132 = vadd.f32 0.0, %v1131
  %v1133 = vpop.f32.mrb[0].mxu0
  %v1134 = vpop.f32.mrb[0].mxu0
  %v1135 = vadd.f32 0.0, %v1134
  %v1136 = vpop.f32.mrb[0].mxu0
  %1137 = vmatprep.mubr.bf16.mxu0 0
  %1138 = vmatmul.mubr.bf16.gmra.mrb[0].mxu0 %v855
  %v1139 = vpop.f32.mrb[0].mxu0
  %v1140 = vadd.f32 0.0, %v1139
  %v1141 = vpop.f32.mrb[0].mxu0
  %v1142 = vpop.f32.mrb[0].mxu0
  %v1143 = vadd.f32 0.0, %v1142
  %v1144 = vpop.f32.mrb[0].mxu0
  %1145 = vdwg.mxu0
  %v1146 = vadd.f32 %v648, %v892
  %v1147 = vadd.f32 %v649, %v895
  %v1148 = vadd.f32 %v650, %v900
  %v1149 = vadd.f32 %v651, %v903
  %v1150 = vadd.f32 %v652, %v908
  %v1151 = vadd.f32 %v653, %v911
  %v1152 = vadd.f32 %v654, %v916
  %v1153 = vadd.f32 %v655, %v919
  %v1154 = vadd.f32 %v656, %v924
  %v1155 = vadd.f32 %v657, %v927
  %v1156 = vadd.f32 %v658, %v932
  %v1157 = vadd.f32 %v659, %v935
  %v1158 = vadd.f32 %v660, %v940
  %v1159 = vadd.f32 %v661, %v943
  %v1160 = vadd.f32 %v662, %v948
  %v1161 = vadd.f32 %v663, %v951
  %v1162 = vadd.f32 %v664, %v956
  %v1163 = vadd.f32 %v665, %v959
  %v1164 = vadd.f32 %v666, %v964
  %v1165 = vadd.f32 %v667, %v967
  %v1166 = vadd.f32 %v668, %v972
  %v1167 = vadd.f32 %v669, %v975
  %v1168 = vadd.f32 %v670, %v980
  %v1169 = vadd.f32 %v671, %v983
  %v1170 = vadd.f32 %v672, %v988
  %v1171 = vadd.f32 %v673, %v991
  %v1172 = vadd.f32 %v674, %v996
  %v1173 = vadd.f32 %v675, %v999
  %v1174 = vadd.f32 %v676, %v1004
  %v1175 = vadd.f32 %v677, %v1007
  %v1176 = vadd.f32 %v678, %v1012
  %v1177 = vadd.f32 %v679, %v1015
  %v1178 = vadd.f32 %v680, %v1020
  %v1179 = vadd.f32 %v681, %v1023
  %v1180 = vadd.f32 %v682, %v1028
  %v1181 = vadd.f32 %v683, %v1031
  %v1182 = vadd.f32 %v684, %v1036
  %v1183 = vadd.f32 %v685, %v1039
  %v1184 = vadd.f32 %v686, %v1044
  %v1185 = vadd.f32 %v687, %v1047
  %v1186 = vadd.f32 %v688, %v1052
  %v1187 = vadd.f32 %v689, %v1055
  %v1188 = vadd.f32 %v690, %v1060
  %v1189 = vadd.f32 %v691, %v1063
  %v1190 = vadd.f32 %v692, %v1068
  %v1191 = vadd.f32 %v693, %v1071
  %v1192 = vadd.f32 %v694, %v1076
  %v1193 = vadd.f32 %v695, %v1079
  %v1194 = vadd.f32 %v696, %v1084
  %v1195 = vadd.f32 %v697, %v1087
  %v1196 = vadd.f32 %v698, %v1092
  %v1197 = vadd.f32 %v699, %v1095
  %v1198 = vadd.f32 %v700, %v1100
  %v1199 = vadd.f32 %v701, %v1103
  %v1200 = vadd.f32 %v702, %v1108
  %v1201 = vadd.f32 %v703, %v1111
  %v1202 = vadd.f32 %v704, %v1116
  %v1203 = vadd.f32 %v705, %v1119
  %v1204 = vadd.f32 %v706, %v1124
  %v1205 = vadd.f32 %v707, %v1127
  %v1206 = vadd.f32 %v708, %v1132
  %v1207 = vadd.f32 %v709, %v1135
  %v1208 = vadd.f32 %v710, %v1140
  %v1209 = vadd.f32 %v711, %v1143
  %1210 = vst.msk [vmem:[#allocation2] sm:$0xff] %vm194, %v1146
  %1211 = vst.msk [vmem:[#allocation2 + $0x8] sm:$0xff] %vm194, %v1147
  %1212 = vst.msk [vmem:[#allocation2 + $0x10] sm:$0xff] %vm194, %v1148
  %1213 = vst.msk [vmem:[#allocation2 + $0x18] sm:$0xff] %vm194, %v1149
  %1214 = vst.msk [vmem:[#allocation2 + $0x20] sm:$0xff] %vm194, %v1150
  %1215 = vst.msk [vmem:[#allocation2 + $0x28] sm:$0xff] %vm194, %v1151
  %1216 = vst.msk [vmem:[#allocation2 + $0x30] sm:$0xff] %vm194, %v1152
  %1217 = vst.msk [vmem:[#allocation2 + $0x38] sm:$0xff] %vm194, %v1153
  %1218 = vst.msk [vmem:[#allocation2 + $0x40] sm:$0xff] %vm194, %v1154
  %1219 = vst.msk [vmem:[#allocation2 + $0x48] sm:$0xff] %vm194, %v1155
  %1220 = vst.msk [vmem:[#allocation2 + $0x50] sm:$0xff] %vm194, %v1156
  %1221 = vst.msk [vmem:[#allocation2 + $0x58] sm:$0xff] %vm194, %v1157
  %1222 = vst.msk [vmem:[#allocation2 + $0x60] sm:$0xff] %vm194, %v1158
  %1223 = vst.msk [vmem:[#allocation2 + $0x68] sm:$0xff] %vm194, %v1159
  %1224 = vst.msk [vmem:[#allocation2 + $0x70] sm:$0xff] %vm194, %v1160
  %1225 = vst.msk [vmem:[#allocation2 + $0x78] sm:$0xff] %vm194, %v1161
  %1226 = vst.msk [vmem:[#allocation2 + $0x80] sm:$0xff] %vm194, %v1162
  %1227 = vst.msk [vmem:[#allocation2 + $0x88] sm:$0xff] %vm194, %v1163
  %1228 = vst.msk [vmem:[#allocation2 + $0x90] sm:$0xff] %vm194, %v1164
  %1229 = vst.msk [vmem:[#allocation2 + $0x98] sm:$0xff] %vm194, %v1165
  %1230 = vst.msk [vmem:[#allocation2 + $0xa0] sm:$0xff] %vm194, %v1166
  %1231 = vst.msk [vmem:[#allocation2 + $0xa8] sm:$0xff] %vm194, %v1167
  %1232 = vst.msk [vmem:[#allocation2 + $0xb0] sm:$0xff] %vm194, %v1168
  %1233 = vst.msk [vmem:[#allocation2 + $0xb8] sm:$0xff] %vm194, %v1169
  %1234 = vst.msk [vmem:[#allocation2 + $0xc0] sm:$0xff] %vm194, %v1170
  %1235 = vst.msk [vmem:[#allocation2 + $0xc8] sm:$0xff] %vm194, %v1171
  %1236 = vst.msk [vmem:[#allocation2 + $0xd0] sm:$0xff] %vm194, %v1172
  %1237 = vst.msk [vmem:[#allocation2 + $0xd8] sm:$0xff] %vm194, %v1173
  %1238 = vst.msk [vmem:[#allocation2 + $0xe0] sm:$0xff] %vm194, %v1174
  %1239 = vst.msk [vmem:[#allocation2 + $0xe8] sm:$0xff] %vm194, %v1175
  %1240 = vst.msk [vmem:[#allocation2 + $0xf0] sm:$0xff] %vm194, %v1176
  %1241 = vst.msk [vmem:[#allocation2 + $0xf8] sm:$0xff] %vm194, %v1177
  %1242 = vst.msk [vmem:[#allocation2 + $0x100] sm:$0xff] %vm194, %v1178
  %1243 = vst.msk [vmem:[#allocation2 + $0x108] sm:$0xff] %vm194, %v1179
  %1244 = vst.msk [vmem:[#allocation2 + $0x110] sm:$0xff] %vm194, %v1180
  %1245 = vst.msk [vmem:[#allocation2 + $0x118] sm:$0xff] %vm194, %v1181
  %1246 = vst.msk [vmem:[#allocation2 + $0x120] sm:$0xff] %vm194, %v1182
  %1247 = vst.msk [vmem:[#allocation2 + $0x128] sm:$0xff] %vm194, %v1183
  %1248 = vst.msk [vmem:[#allocation2 + $0x130] sm:$0xff] %vm194, %v1184
  %1249 = vst.msk [vmem:[#allocation2 + $0x138] sm:$0xff] %vm194, %v1185
  %1250 = vst.msk [vmem:[#allocation2 + $0x140] sm:$0xff] %vm194, %v1186
  %1251 = vst.msk [vmem:[#allocation2 + $0x148] sm:$0xff] %vm194, %v1187
  %1252 = vst.msk [vmem:[#allocation2 + $0x150] sm:$0xff] %vm194, %v1188
  %1253 = vst.msk [vmem:[#allocation2 + $0x158] sm:$0xff] %vm194, %v1189
  %1254 = vst.msk [vmem:[#allocation2 + $0x160] sm:$0xff] %vm194, %v1190
  %1255 = vst.msk [vmem:[#allocation2 + $0x168] sm:$0xff] %vm194, %v1191
  %1256 = vst.msk [vmem:[#allocation2 + $0x170] sm:$0xff] %vm194, %v1192
  %1257 = vst.msk [vmem:[#allocation2 + $0x178] sm:$0xff] %vm194, %v1193
  %1258 = vst.msk [vmem:[#allocation2 + $0x180] sm:$0xff] %vm194, %v1194
  %1259 = vst.msk [vmem:[#allocation2 + $0x188] sm:$0xff] %vm194, %v1195
  %1260 = vst.msk [vmem:[#allocation2 + $0x190] sm:$0xff] %vm194, %v1196
  %1261 = vst.msk [vmem:[#allocation2 + $0x198] sm:$0xff] %vm194, %v1197
  %1262 = vst.msk [vmem:[#allocation2 + $0x1a0] sm:$0xff] %vm194, %v1198
  %1263 = vst.msk [vmem:[#allocation2 + $0x1a8] sm:$0xff] %vm194, %v1199
  %1264 = vst.msk [vmem:[#allocation2 + $0x1b0] sm:$0xff] %vm194, %v1200
  %1265 = vst.msk [vmem:[#allocation2 + $0x1b8] sm:$0xff] %vm194, %v1201
  %1266 = vst.msk [vmem:[#allocation2 + $0x1c0] sm:$0xff] %vm194, %v1202
  %1267 = vst.msk [vmem:[#allocation2 + $0x1c8] sm:$0xff] %vm194, %v1203
  %1268 = vst.msk [vmem:[#allocation2 + $0x1d0] sm:$0xff] %vm194, %v1204
  %1269 = vst.msk [vmem:[#allocation2 + $0x1d8] sm:$0xff] %vm194, %v1205
  %1270 = vst.msk [vmem:[#allocation2 + $0x1e0] sm:$0xff] %vm194, %v1206
  %1271 = vst.msk [vmem:[#allocation2 + $0x1e8] sm:$0xff] %vm194, %v1207
  %1272 = vst.msk [vmem:[#allocation2 + $0x1f0] sm:$0xff] %vm194, %v1208
  %1273 = vst.msk [vmem:[#allocation2 + $0x1f8] sm:$0xff] %vm194, %v1209
  // Predicated region
  $region26: #{transformer_block_forward.7} parent=0 // pred_check
    %p1274 = pneg %p21
  $region27: #{transformer_block_forward.7} parent=0 // pred_check_branch
    %1276 = sbr.rel (%p1274) target = $region29
  $region28: #{transformer_block_forward.7} parent=0 // pred_region
    %v1277 = vld [vmem:[#allocation2] sm:$0xff]
    %v1278 = vld [vmem:[#allocation2 + $0x8] sm:$0xff]
    %v1279 = vld [vmem:[#allocation2 + $0x10] sm:$0xff]
    %v1280 = vld [vmem:[#allocation2 + $0x18] sm:$0xff]
    %v1281 = vld [vmem:[#allocation2 + $0x20] sm:$0xff]
    %v1282 = vld [vmem:[#allocation2 + $0x28] sm:$0xff]
    %v1283 = vld [vmem:[#allocation2 + $0x30] sm:$0xff]
    %v1284 = vld [vmem:[#allocation2 + $0x38] sm:$0xff]
    %v1285 = vld [vmem:[#allocation2 + $0x40] sm:$0xff]
    %v1286 = vld [vmem:[#allocation2 + $0x48] sm:$0xff]
    %v1287 = vld [vmem:[#allocation2 + $0x50] sm:$0xff]
    %v1288 = vld [vmem:[#allocation2 + $0x58] sm:$0xff]
    %v1289 = vld [vmem:[#allocation2 + $0x60] sm:$0xff]
    %v1290 = vld [vmem:[#allocation2 + $0x68] sm:$0xff]
    %v1291 = vld [vmem:[#allocation2 + $0x70] sm:$0xff]
    %v1292 = vld [vmem:[#allocation2 + $0x78] sm:$0xff]
    %v1293 = vld [vmem:[#allocation2 + $0x80] sm:$0xff]
    %v1294 = vld [vmem:[#allocation2 + $0x88] sm:$0xff]
    %v1295 = vld [vmem:[#allocation2 + $0x90] sm:$0xff]
    %v1296 = vld [vmem:[#allocation2 + $0x98] sm:$0xff]
    %v1297 = vld [vmem:[#allocation2 + $0xa0] sm:$0xff]
    %v1298 = vld [vmem:[#allocation2 + $0xa8] sm:$0xff]
    %v1299 = vld [vmem:[#allocation2 + $0xb0] sm:$0xff]
    %v1300 = vld [vmem:[#allocation2 + $0xb8] sm:$0xff]
    %v1301 = vld [vmem:[#allocation2 + $0xc0] sm:$0xff]
    %v1302 = vld [vmem:[#allocation2 + $0xc8] sm:$0xff]
    %v1303 = vld [vmem:[#allocation2 + $0xd0] sm:$0xff]
    %v1304 = vld [vmem:[#allocation2 + $0xd8] sm:$0xff]
    %v1305 = vld [vmem:[#allocation2 + $0xe0] sm:$0xff]
    %v1306 = vld [vmem:[#allocation2 + $0xe8] sm:$0xff]
    %v1307 = vld [vmem:[#allocation2 + $0xf0] sm:$0xff]
    %v1308 = vld [vmem:[#allocation2 + $0xf8] sm:$0xff]
    %v1309 = vld [vmem:[#allocation2 + $0x100] sm:$0xff]
    %v1310 = vld [vmem:[#allocation2 + $0x108] sm:$0xff]
    %v1311 = vld [vmem:[#allocation2 + $0x110] sm:$0xff]
    %v1312 = vld [vmem:[#allocation2 + $0x118] sm:$0xff]
    %v1313 = vld [vmem:[#allocation2 + $0x120] sm:$0xff]
    %v1314 = vld [vmem:[#allocation2 + $0x128] sm:$0xff]
    %v1315 = vld [vmem:[#allocation2 + $0x130] sm:$0xff]
    %v1316 = vld [vmem:[#allocation2 + $0x138] sm:$0xff]
    %v1317 = vld [vmem:[#allocation2 + $0x140] sm:$0xff]
    %v1318 = vld [vmem:[#allocation2 + $0x148] sm:$0xff]
    %v1319 = vld [vmem:[#allocation2 + $0x150] sm:$0xff]
    %v1320 = vld [vmem:[#allocation2 + $0x158] sm:$0xff]
    %v1321 = vld [vmem:[#allocation2 + $0x160] sm:$0xff]
    %v1322 = vld [vmem:[#allocation2 + $0x168] sm:$0xff]
    %v1323 = vld [vmem:[#allocation2 + $0x170] sm:$0xff]
    %v1324 = vld [vmem:[#allocation2 + $0x178] sm:$0xff]
    %v1325 = vld [vmem:[#allocation2 + $0x180] sm:$0xff]
    %v1326 = vld [vmem:[#allocation2 + $0x188] sm:$0xff]
    %v1327 = vld [vmem:[#allocation2 + $0x190] sm:$0xff]
    %v1328 = vld [vmem:[#allocation2 + $0x198] sm:$0xff]
    %v1329 = vld [vmem:[#allocation2 + $0x1a0] sm:$0xff]
    %v1330 = vld [vmem:[#allocation2 + $0x1a8] sm:$0xff]
    %v1331 = vld [vmem:[#allocation2 + $0x1b0] sm:$0xff]
    %v1332 = vld [vmem:[#allocation2 + $0x1b8] sm:$0xff]
    %v1333 = vld [vmem:[#allocation2 + $0x1c0] sm:$0xff]
    %v1334 = vld [vmem:[#allocation2 + $0x1c8] sm:$0xff]
    %v1335 = vld [vmem:[#allocation2 + $0x1d0] sm:$0xff]
    %v1336 = vld [vmem:[#allocation2 + $0x1d8] sm:$0xff]
    %v1337 = vld [vmem:[#allocation2 + $0x1e0] sm:$0xff]
    %v1338 = vld [vmem:[#allocation2 + $0x1e8] sm:$0xff]
    %v1339 = vld [vmem:[#allocation2 + $0x1f0] sm:$0xff]
    %v1340 = vld [vmem:[#allocation2 + $0x1f8] sm:$0xff]
    %v1341 = vld [vmem:[%s4] sm:$0x1]
    %v1343 = vlaneseq
    %v1344 = vshrl.u32 %v1343, 7
    %v1345 = vsub.s32 0, %v1344
    %v1346 = vrot.slane %v1341, %v1345
    %v1348 = vadd.f32 %v1277, %v1346
    %v1349 = vadd.f32 %v1278, %v1346
    %v1350 = vadd.f32 %v1279, %v1346
    %v1351 = vadd.f32 %v1280, %v1346
    %v1352 = vadd.f32 %v1281, %v1346
    %v1353 = vadd.f32 %v1282, %v1346
    %v1354 = vadd.f32 %v1283, %v1346
    %v1355 = vadd.f32 %v1284, %v1346
    %v1356 = vadd.f32 %v1285, %v1346
    %v1357 = vadd.f32 %v1286, %v1346
    %v1358 = vadd.f32 %v1287, %v1346
    %v1359 = vadd.f32 %v1288, %v1346
    %v1360 = vadd.f32 %v1289, %v1346
    %v1361 = vadd.f32 %v1290, %v1346
    %v1362 = vadd.f32 %v1291, %v1346
    %v1363 = vadd.f32 %v1292, %v1346
    %v1364 = vadd.f32 %v1293, %v1346
    %v1365 = vadd.f32 %v1294, %v1346
    %v1366 = vadd.f32 %v1295, %v1346
    %v1367 = vadd.f32 %v1296, %v1346
    %v1368 = vadd.f32 %v1297, %v1346
    %v1369 = vadd.f32 %v1298, %v1346
    %v1370 = vadd.f32 %v1299, %v1346
    %v1371 = vadd.f32 %v1300, %v1346
    %v1372 = vadd.f32 %v1301, %v1346
    %v1373 = vadd.f32 %v1302, %v1346
    %v1374 = vadd.f32 %v1303, %v1346
    %v1375 = vadd.f32 %v1304, %v1346
    %v1376 = vadd.f32 %v1305, %v1346
    %v1377 = vadd.f32 %v1306, %v1346
    %v1378 = vadd.f32 %v1307, %v1346
    %v1379 = vadd.f32 %v1308, %v1346
    %v1380 = vadd.f32 %v1309, %v1346
    %v1381 = vadd.f32 %v1310, %v1346
    %v1382 = vadd.f32 %v1311, %v1346
    %v1383 = vadd.f32 %v1312, %v1346
    %v1384 = vadd.f32 %v1313, %v1346
    %v1385 = vadd.f32 %v1314, %v1346
    %v1386 = vadd.f32 %v1315, %v1346
    %v1387 = vadd.f32 %v1316, %v1346
    %v1388 = vadd.f32 %v1317, %v1346
    %v1389 = vadd.f32 %v1318, %v1346
    %v1390 = vadd.f32 %v1319, %v1346
    %v1391 = vadd.f32 %v1320, %v1346
    %v1392 = vadd.f32 %v1321, %v1346
    %v1393 = vadd.f32 %v1322, %v1346
    %v1394 = vadd.f32 %v1323, %v1346
    %v1395 = vadd.f32 %v1324, %v1346
    %v1396 = vadd.f32 %v1325, %v1346
    %v1397 = vadd.f32 %v1326, %v1346
    %v1398 = vadd.f32 %v1327, %v1346
    %v1399 = vadd.f32 %v1328, %v1346
    %v1400 = vadd.f32 %v1329, %v1346
    %v1401 = vadd.f32 %v1330, %v1346
    %v1402 = vadd.f32 %v1331, %v1346
    %v1403 = vadd.f32 %v1332, %v1346
    %v1404 = vadd.f32 %v1333, %v1346
    %v1405 = vadd.f32 %v1334, %v1346
    %v1406 = vadd.f32 %v1335, %v1346
    %v1407 = vadd.f32 %v1336, %v1346
    %v1408 = vadd.f32 %v1337, %v1346
    %v1409 = vadd.f32 %v1338, %v1346
    %v1410 = vadd.f32 %v1339, %v1346
    %v1411 = vadd.f32 %v1340, %v1346
    %v1412 = vld [vmem:[%s0] sm:$0xff]
    %v1413 = vld [vmem:[%s0 + $0x8] sm:$0xff]
    %v1414 = vld [vmem:[%s0 + $0x10] sm:$0xff]
    %v1415 = vld [vmem:[%s0 + $0x18] sm:$0xff]
    %v1416 = vld [vmem:[%s0 + $0x20] sm:$0xff]
    %v1417 = vld [vmem:[%s0 + $0x28] sm:$0xff]
    %v1418 = vld [vmem:[%s0 + $0x30] sm:$0xff]
    %v1419 = vld [vmem:[%s0 + $0x38] sm:$0xff]
    %v1420 = vld [vmem:[%s0 + $0x40] sm:$0xff]
    %v1421 = vld [vmem:[%s0 + $0x48] sm:$0xff]
    %v1422 = vld [vmem:[%s0 + $0x50] sm:$0xff]
    %v1423 = vld [vmem:[%s0 + $0x58] sm:$0xff]
    %v1424 = vld [vmem:[%s0 + $0x60] sm:$0xff]
    %v1425 = vld [vmem:[%s0 + $0x68] sm:$0xff]
    %v1426 = vld [vmem:[%s0 + $0x70] sm:$0xff]
    %v1427 = vld [vmem:[%s0 + $0x78] sm:$0xff]
    %v1428 = vld [vmem:[%s0 + $0x80] sm:$0xff]
    %v1429 = vld [vmem:[%s0 + $0x88] sm:$0xff]
    %v1430 = vld [vmem:[%s0 + $0x90] sm:$0xff]
    %v1431 = vld [vmem:[%s0 + $0x98] sm:$0xff]
    %v1432 = vld [vmem:[%s0 + $0xa0] sm:$0xff]
    %v1433 = vld [vmem:[%s0 + $0xa8] sm:$0xff]
    %v1434 = vld [vmem:[%s0 + $0xb0] sm:$0xff]
    %v1435 = vld [vmem:[%s0 + $0xb8] sm:$0xff]
    %v1436 = vld [vmem:[%s0 + $0xc0] sm:$0xff]
    %v1437 = vld [vmem:[%s0 + $0xc8] sm:$0xff]
    %v1438 = vld [vmem:[%s0 + $0xd0] sm:$0xff]
    %v1439 = vld [vmem:[%s0 + $0xd8] sm:$0xff]
    %v1440 = vld [vmem:[%s0 + $0xe0] sm:$0xff]
    %v1441 = vld [vmem:[%s0 + $0xe8] sm:$0xff]
    %v1442 = vld [vmem:[%s0 + $0xf0] sm:$0xff]
    %v1443 = vld [vmem:[%s0 + $0xf8] sm:$0xff]
    %v1444 = vld [vmem:[%s0 + $0x100] sm:$0xff]
    %v1445 = vld [vmem:[%s0 + $0x108] sm:$0xff]
    %v1446 = vld [vmem:[%s0 + $0x110] sm:$0xff]
    %v1447 = vld [vmem:[%s0 + $0x118] sm:$0xff]
    %v1448 = vld [vmem:[%s0 + $0x120] sm:$0xff]
    %v1449 = vld [vmem:[%s0 + $0x128] sm:$0xff]
    %v1450 = vld [vmem:[%s0 + $0x130] sm:$0xff]
    %v1451 = vld [vmem:[%s0 + $0x138] sm:$0xff]
    %v1452 = vld [vmem:[%s0 + $0x140] sm:$0xff]
    %v1453 = vld [vmem:[%s0 + $0x148] sm:$0xff]
    %v1454 = vld [vmem:[%s0 + $0x150] sm:$0xff]
    %v1455 = vld [vmem:[%s0 + $0x158] sm:$0xff]
    %v1456 = vld [vmem:[%s0 + $0x160] sm:$0xff]
    %v1457 = vld [vmem:[%s0 + $0x168] sm:$0xff]
    %v1458 = vld [vmem:[%s0 + $0x170] sm:$0xff]
    %v1459 = vld [vmem:[%s0 + $0x178] sm:$0xff]
    %v1460 = vld [vmem:[%s0 + $0x180] sm:$0xff]
    %v1461 = vld [vmem:[%s0 + $0x188] sm:$0xff]
    %v1462 = vld [vmem:[%s0 + $0x190] sm:$0xff]
    %v1463 = vld [vmem:[%s0 + $0x198] sm:$0xff]
    %v1464 = vld [vmem:[%s0 + $0x1a0] sm:$0xff]
    %v1465 = vld [vmem:[%s0 + $0x1a8] sm:$0xff]
    %v1466 = vld [vmem:[%s0 + $0x1b0] sm:$0xff]
    %v1467 = vld [vmem:[%s0 + $0x1b8] sm:$0xff]
    %v1468 = vld [vmem:[%s0 + $0x1c0] sm:$0xff]
    %v1469 = vld [vmem:[%s0 + $0x1c8] sm:$0xff]
    %v1470 = vld [vmem:[%s0 + $0x1d0] sm:$0xff]
    %v1471 = vld [vmem:[%s0 + $0x1d8] sm:$0xff]
    %v1472 = vld [vmem:[%s0 + $0x1e0] sm:$0xff]
    %v1473 = vld [vmem:[%s0 + $0x1e8] sm:$0xff]
    %v1474 = vld [vmem:[%s0 + $0x1f0] sm:$0xff]
    %v1475 = vld [vmem:[%s0 + $0x1f8] sm:$0xff]
    %v1476 = vadd.f32 %v1348, %v1412
    %v1477 = vadd.f32 %v1349, %v1413
    %v1478 = vadd.f32 %v1350, %v1414
    %v1479 = vadd.f32 %v1351, %v1415
    %v1480 = vadd.f32 %v1352, %v1416
    %v1481 = vadd.f32 %v1353, %v1417
    %v1482 = vadd.f32 %v1354, %v1418
    %v1483 = vadd.f32 %v1355, %v1419
    %v1484 = vadd.f32 %v1356, %v1420
    %v1485 = vadd.f32 %v1357, %v1421
    %v1486 = vadd.f32 %v1358, %v1422
    %v1487 = vadd.f32 %v1359, %v1423
    %v1488 = vadd.f32 %v1360, %v1424
    %v1489 = vadd.f32 %v1361, %v1425
    %v1490 = vadd.f32 %v1362, %v1426
    %v1491 = vadd.f32 %v1363, %v1427
    %v1492 = vadd.f32 %v1364, %v1428
    %v1493 = vadd.f32 %v1365, %v1429
    %v1494 = vadd.f32 %v1366, %v1430
    %v1495 = vadd.f32 %v1367, %v1431
    %v1496 = vadd.f32 %v1368, %v1432
    %v1497 = vadd.f32 %v1369, %v1433
    %v1498 = vadd.f32 %v1370, %v1434
    %v1499 = vadd.f32 %v1371, %v1435
    %v1500 = vadd.f32 %v1372, %v1436
    %v1501 = vadd.f32 %v1373, %v1437
    %v1502 = vadd.f32 %v1374, %v1438
    %v1503 = vadd.f32 %v1375, %v1439
    %v1504 = vadd.f32 %v1376, %v1440
    %v1505 = vadd.f32 %v1377, %v1441
    %v1506 = vadd.f32 %v1378, %v1442
    %v1507 = vadd.f32 %v1379, %v1443
    %v1508 = vadd.f32 %v1380, %v1444
    %v1509 = vadd.f32 %v1381, %v1445
    %v1510 = vadd.f32 %v1382, %v1446
    %v1511 = vadd.f32 %v1383, %v1447
    %v1512 = vadd.f32 %v1384, %v1448
    %v1513 = vadd.f32 %v1385, %v1449
    %v1514 = vadd.f32 %v1386, %v1450
    %v1515 = vadd.f32 %v1387, %v1451
    %v1516 = vadd.f32 %v1388, %v1452
    %v1517 = vadd.f32 %v1389, %v1453
    %v1518 = vadd.f32 %v1390, %v1454
    %v1519 = vadd.f32 %v1391, %v1455
    %v1520 = vadd.f32 %v1392, %v1456
    %v1521 = vadd.f32 %v1393, %v1457
    %v1522 = vadd.f32 %v1394, %v1458
    %v1523 = vadd.f32 %v1395, %v1459
    %v1524 = vadd.f32 %v1396, %v1460
    %v1525 = vadd.f32 %v1397, %v1461
    %v1526 = vadd.f32 %v1398, %v1462
    %v1527 = vadd.f32 %v1399, %v1463
    %v1528 = vadd.f32 %v1400, %v1464
    %v1529 = vadd.f32 %v1401, %v1465
    %v1530 = vadd.f32 %v1402, %v1466
    %v1531 = vadd.f32 %v1403, %v1467
    %v1532 = vadd.f32 %v1404, %v1468
    %v1533 = vadd.f32 %v1405, %v1469
    %v1534 = vadd.f32 %v1406, %v1470
    %v1535 = vadd.f32 %v1407, %v1471
    %v1536 = vadd.f32 %v1408, %v1472
    %v1537 = vadd.f32 %v1409, %v1473
    %v1538 = vadd.f32 %v1410, %v1474
    %v1539 = vadd.f32 %v1411, %v1475
    %1540 = vst.msk [vmem:[%s5] sm:$0xff] %vm194, %v1476
    %1541 = vst.msk [vmem:[%s5 + $0x8] sm:$0xff] %vm194, %v1477
    %1542 = vst.msk [vmem:[%s5 + $0x10] sm:$0xff] %vm194, %v1478
    %1543 = vst.msk [vmem:[%s5 + $0x18] sm:$0xff] %vm194, %v1479
    %1544 = vst.msk [vmem:[%s5 + $0x20] sm:$0xff] %vm194, %v1480
    %1545 = vst.msk [vmem:[%s5 + $0x28] sm:$0xff] %vm194, %v1481
    %1546 = vst.msk [vmem:[%s5 + $0x30] sm:$0xff] %vm194, %v1482
    %1547 = vst.msk [vmem:[%s5 + $0x38] sm:$0xff] %vm194, %v1483
    %1548 = vst.msk [vmem:[%s5 + $0x40] sm:$0xff] %vm194, %v1484
    %1549 = vst.msk [vmem:[%s5 + $0x48] sm:$0xff] %vm194, %v1485
    %1550 = vst.msk [vmem:[%s5 + $0x50] sm:$0xff] %vm194, %v1486
    %1551 = vst.msk [vmem:[%s5 + $0x58] sm:$0xff] %vm194, %v1487
    %1552 = vst.msk [vmem:[%s5 + $0x60] sm:$0xff] %vm194, %v1488
    %1553 = vst.msk [vmem:[%s5 + $0x68] sm:$0xff] %vm194, %v1489
    %1554 = vst.msk [vmem:[%s5 + $0x70] sm:$0xff] %vm194, %v1490
    %1555 = vst.msk [vmem:[%s5 + $0x78] sm:$0xff] %vm194, %v1491
    %1556 = vst.msk [vmem:[%s5 + $0x80] sm:$0xff] %vm194, %v1492
    %1557 = vst.msk [vmem:[%s5 + $0x88] sm:$0xff] %vm194, %v1493
    %1558 = vst.msk [vmem:[%s5 + $0x90] sm:$0xff] %vm194, %v1494
    %1559 = vst.msk [vmem:[%s5 + $0x98] sm:$0xff] %vm194, %v1495
    %1560 = vst.msk [vmem:[%s5 + $0xa0] sm:$0xff] %vm194, %v1496
    %1561 = vst.msk [vmem:[%s5 + $0xa8] sm:$0xff] %vm194, %v1497
    %1562 = vst.msk [vmem:[%s5 + $0xb0] sm:$0xff] %vm194, %v1498
    %1563 = vst.msk [vmem:[%s5 + $0xb8] sm:$0xff] %vm194, %v1499
    %1564 = vst.msk [vmem:[%s5 + $0xc0] sm:$0xff] %vm194, %v1500
    %1565 = vst.msk [vmem:[%s5 + $0xc8] sm:$0xff] %vm194, %v1501
    %1566 = vst.msk [vmem:[%s5 + $0xd0] sm:$0xff] %vm194, %v1502
    %1567 = vst.msk [vmem:[%s5 + $0xd8] sm:$0xff] %vm194, %v1503
    %1568 = vst.msk [vmem:[%s5 + $0xe0] sm:$0xff] %vm194, %v1504
    %1569 = vst.msk [vmem:[%s5 + $0xe8] sm:$0xff] %vm194, %v1505
    %1570 = vst.msk [vmem:[%s5 + $0xf0] sm:$0xff] %vm194, %v1506
    %1571 = vst.msk [vmem:[%s5 + $0xf8] sm:$0xff] %vm194, %v1507
    %1572 = vst.msk [vmem:[%s5 + $0x100] sm:$0xff] %vm194, %v1508
    %1573 = vst.msk [vmem:[%s5 + $0x108] sm:$0xff] %vm194, %v1509
    %1574 = vst.msk [vmem:[%s5 + $0x110] sm:$0xff] %vm194, %v1510
    %1575 = vst.msk [vmem:[%s5 + $0x118] sm:$0xff] %vm194, %v1511
    %1576 = vst.msk [vmem:[%s5 + $0x120] sm:$0xff] %vm194, %v1512
    %1577 = vst.msk [vmem:[%s5 + $0x128] sm:$0xff] %vm194, %v1513
    %1578 = vst.msk [vmem:[%s5 + $0x130] sm:$0xff] %vm194, %v1514
    %1579 = vst.msk [vmem:[%s5 + $0x138] sm:$0xff] %vm194, %v1515
    %1580 = vst.msk [vmem:[%s5 + $0x140] sm:$0xff] %vm194, %v1516
    %1581 = vst.msk [vmem:[%s5 + $0x148] sm:$0xff] %vm194, %v1517
    %1582 = vst.msk [vmem:[%s5 + $0x150] sm:$0xff] %vm194, %v1518
    %1583 = vst.msk [vmem:[%s5 + $0x158] sm:$0xff] %vm194, %v1519
    %1584 = vst.msk [vmem:[%s5 + $0x160] sm:$0xff] %vm194, %v1520
    %1585 = vst.msk [vmem:[%s5 + $0x168] sm:$0xff] %vm194, %v1521
    %1586 = vst.msk [vmem:[%s5 + $0x170] sm:$0xff] %vm194, %v1522
    %1587 = vst.msk [vmem:[%s5 + $0x178] sm:$0xff] %vm194, %v1523
    %1588 = vst.msk [vmem:[%s5 + $0x180] sm:$0xff] %vm194, %v1524
    %1589 = vst.msk [vmem:[%s5 + $0x188] sm:$0xff] %vm194, %v1525
    %1590 = vst.msk [vmem:[%s5 + $0x190] sm:$0xff] %vm194, %v1526
    %1591 = vst.msk [vmem:[%s5 + $0x198] sm:$0xff] %vm194, %v1527
    %1592 = vst.msk [vmem:[%s5 + $0x1a0] sm:$0xff] %vm194, %v1528
    %1593 = vst.msk [vmem:[%s5 + $0x1a8] sm:$0xff] %vm194, %v1529
    %1594 = vst.msk [vmem:[%s5 + $0x1b0] sm:$0xff] %vm194, %v1530
    %1595 = vst.msk [vmem:[%s5 + $0x1b8] sm:$0xff] %vm194, %v1531
    %1596 = vst.msk [vmem:[%s5 + $0x1c0] sm:$0xff] %vm194, %v1532
    %1597 = vst.msk [vmem:[%s5 + $0x1c8] sm:$0xff] %vm194, %v1533
    %1598 = vst.msk [vmem:[%s5 + $0x1d0] sm:$0xff] %vm194, %v1534
    %1599 = vst.msk [vmem:[%s5 + $0x1d8] sm:$0xff] %vm194, %v1535
    %1600 = vst.msk [vmem:[%s5 + $0x1e0] sm:$0xff] %vm194, %v1536
    %1601 = vst.msk [vmem:[%s5 + $0x1e8] sm:$0xff] %vm194, %v1537
    %1602 = vst.msk [vmem:[%s5 + $0x1f0] sm:$0xff] %vm194, %v1538
    %1603 = vst.msk [vmem:[%s5 + $0x1f8] sm:$0xff] %vm194, %v1539
  $region29: #{transformer_block_forward.7} parent=0 // pred_fallthru
    _
  // Predicated region
  $region30: #{transformer_block_forward.7} parent=0 // pred_check
    _
  $region31: #{transformer_block_forward.7} parent=0 // pred_check_branch
    %1605 = sbr.rel (0) target = $region33
  $region32: #{transformer_block_forward.7} parent=0 // pred_region
    _
  $region33: #{transformer_block_forward.7} parent=0 // pred_fallthru
    _
  // Predicated region
  $region34: #{transformer_block_forward.7} parent=0 // pred_check
    _
  $region35: #{transformer_block_forward.7} parent=0 // pred_check_branch
    %1607 = sbr.rel (0) target = $region37
  $region36: #{transformer_block_forward.7} parent=0 // pred_region
    _
  $region37: #{transformer_block_forward.7} parent=0 // pred_fallthru
    _

</llo_original>
